<compile_context>
chip_gen: v5e
topology: v5e:2x2
jax: 0.10.0
libtpu: 0.0.40
codegen_flags: <defaults>
</compile_context>

<pallas_src>
import functools

import jax
import jax.numpy as jnp
from jax import lax
from jax.experimental import pallas as pl
from jax.experimental.pallas import tpu as pltpu

LRELU_SLOPE = 0.1


def _leaky_relu(x, slope=LRELU_SLOPE):
    return jnp.where(x >= 0, x, slope * x)


def _resblock1_kernel(xm_ref, xl_ref, xr_ref, w1_ref, b1_ref, w2_ref, b2_ref,
                      o_ref, *, T_total, t_tile, ext, dilations, K, pad_half,
                      pack_taps, mm_dtype):
    """Fused ResBlock1 for one (batch, time-tile) grid point.

    xm_ref : (1, t_tile, C)       main input tile (channels-last, io dtype)
    xl_ref : (1, ext, C)          block immediately left of the tile (clamped)
    xr_ref : (1, ext, C)          block immediately right of the tile (clamped)
    w*_ref : (n_layers, K*C, C)   weights, rows ordered (tap, c_in), matmul dtype
    b*_ref : (n_layers, 1, C)     biases (float32)
    o_ref  : (1, t_tile, C)
    """
    f32 = jnp.float32
    t0 = pl.program_id(1) * t_tile            # global start row of this tile
    Tw = t_tile + 2 * ext
    C = xm_ref.shape[-1]

    # Haloed working window assembled in VMEM from sublane-aligned pieces.
    # Residual stream `cur` is kept in f32 throughout (f32 bias/residual adds).
    window = jnp.concatenate([xl_ref[0], xm_ref[0], xr_ref[0]],
                             axis=0).astype(f32)                      # (Tw, C)

    # valid[j, :] <=> global row (t0 - ext + j) lies inside the real sequence.
    rows = lax.broadcasted_iota(jnp.int32, (Tw, C), 0) + (t0 - ext)
    valid = jnp.logical_and(rows >= 0, rows < T_total)

    def mask(arr, off):
        # arr covers global rows [t0 - off, t0 + t_tile + off); zero every row
        # outside [0, T_total): emulates Conv1d zero padding at sequence edges
        # and kills clamped-halo / partial-block garbage.
        lo = ext - off                        # static
        return jnp.where(valid[lo:lo + arr.shape[0], :], arr,
                         jnp.zeros_like(arr))

    def conv(a, w_ref, li, d, L):
        # a: (L + (K-1)*d, C) f32 activations -> f32 (L, C).
        # MXU operands in mm_dtype (bf16 by default), accumulation in f32.
        if pack_taps:
            # im2col over taps: single (L, K*C) @ (K*C, C) matmul with a deep
            # contraction instead of K shallow dots + VPU adds.
            packed = jnp.concatenate(
                [a[k * d:k * d + L, :] for k in range(K)], axis=-1)   # (L, K*C)
            return jnp.dot(packed.astype(mm_dtype), w_ref[li],
                           preferred_element_type=f32)
        # Large C: per-tap dots accumulated into one f32 value.
        # TODO(synk): replace misaligned-sublane tap slices with pltpu.roll
        #   (XLU slot) to keep vld slots free for the MXU feed on v5e / small C.
        acc = jnp.dot(a[0:L, :].astype(mm_dtype), w_ref[li, 0:C, :],
                      preferred_element_type=f32)
        for k in range(1, K):
            acc = acc + jnp.dot(a[k * d:k * d + L, :].astype(mm_dtype),
                                w_ref[li, k * C:(k + 1) * C, :],
                                preferred_element_type=f32)
        return acc

    # TODO(synk): gate the per-layer masks on a scalar "tile touches an edge"
    #   predicate so interior tiles skip the VPU selects (hidden under MXU at
    #   large C, measurable at small C / on v5e).
    cur = mask(window, ext)                   # f32, extent `ext` per side
    off = ext
    for li, d in enumerate(dilations):        # 3 layers, unrolled at trace time
        pad1 = d * pad_half
        off1 = off - pad1
        off2 = off1 - pad_half
        L1 = t_tile + 2 * off1
        L2 = t_tile + 2 * off2

        # xt = c1(leaky_relu(x))      -- dilation d, zero "same" padding
        y1 = conv(_leaky_relu(cur), w1_ref, li, d, L1) + b1_ref[li]
        y1 = mask(y1, off1)
        # x = c2(leaky_relu(xt)) + x  -- dilation 1
        y2 = conv(_leaky_relu(y1), w2_ref, li, 1, L2) + b2_ref[li]
        y2 = y2 + cur[off - off2:off - off2 + L2, :]
        cur = mask(y2, off2)
        off = off2

    # After all layers the remaining extent is (ext - total_halo) >= 0.
    o_ref[0, :, :] = cur[off:off + t_tile, :].astype(o_ref.dtype)


def _tpu_vmem_and_kind():
    """Physical VMEM bytes + device-kind string (best effort, never raises)."""
    kind = ""
    try:
        kind = str(jax.devices()[0].device_kind).lower()
    except Exception:
        pass
    vmem = None
    try:
        vmem = int(pltpu.get_tpu_info().vmem_capacity_bytes)
    except Exception:
        vmem = None
    if not vmem:
        # Conservative default: assume the smallest-VMEM generation (v7x).
        vmem = (128 if ("v5" in kind or "v6" in kind) else 64) * 1024 * 1024
    return vmem, kind


def resblock1_forward(x_ncw, params, dilation=(1, 3, 5), t_tile=None,
                      matmul_dtype=jnp.bfloat16):
    """ResBlock1 forward. x_ncw: (B, C, T) as in PyTorch; returns (B, C, T).

    matmul_dtype: dtype of the MXU operands (bf16 by default; accumulation,
    bias and the residual stream are always float32). None -> use x.dtype.
    """
    B, C, T = x_ncw.shape
    n_layers = len(dilation)
    K = params["convs1"][0][0].shape[0]
    pad_half = (K - 1) // 2                   # per-conv pad is d * pad_half (odd K)
    halo = sum(d * pad_half + pad_half for d in dilation)   # total halo per side

    x = jnp.transpose(x_ncw, (0, 2, 1))       # (B, T, C): C on the lane axis
    io_dt = x.dtype
    mm_dt = jnp.dtype(io_dt if matmul_dtype is None else matmul_dtype)
    pack_taps = C <= 128                      # im2col pays when C underfills MXU
    # TODO(synk): for very small C (<= 64) also pack independent batch rows
    #   along the lane axis (block-diagonal weights) so stores stay lane-dense,
    #   or dispatch to the XLA conv instead of this kernel.

    # Sublane-aligned halo block; the time tile is a multiple of it.
    ext = max(8, ((halo + 7) // 8) * 8)
    assert ext >= halo

    # ---- generation-aware tile size / VMEM budget ---------------------------
    phys_vmem, kind = _tpu_vmem_and_kind()
    small_vmem = phys_vmem <= 64 * 1024 * 1024          # v7x-class
    budget = int(phys_vmem * (0.75 if small_vmem else 0.78))

    io_item = jnp.dtype(io_dt).itemsize
    mm_item = mm_dt.itemsize

    def est_vmem(tt_, single_buffer_weights):
        tw = tt_ + 2 * ext
        e = 2 * tw * C * io_item                         # dbl-buffered in blocks
        e += 2 * tt_ * C * io_item                       # dbl-buffered out blocks
        wbytes = 2 * n_layers * K * C * C * mm_item + 2 * n_layers * C * 4
        e += wbytes * (1 if single_buffer_weights else 2)
        e += (8 + (K if pack_taps else 0)) * tw * C * 4  # f32 in-kernel working set
        return e

    t_cap = max(ext, ((T + ext - 1) // ext) * ext)
    tt_pref = int(t_tile) if t_tile is not None else (512 if small_vmem else 1024)
    tt = max(ext, (min(tt_pref, t_cap) // ext) * ext)
    while tt > ext and est_vmem(tt, True) > budget:
        tt -= ext
    n_t = -(-T // tt)

    # v7x has 2 TensorCores sharing the grid: avoid an odd total tile count.
    if "v7" in kind and n_t > 1 and (B * n_t) % 2 == 1:
        tt_alt = tt
        while tt_alt > ext:
            tt_alt -= ext
            if (B * (-(-T // tt_alt))) % 2 == 0:
                tt = tt_alt
                n_t = -(-T // tt)
                break

    r = tt // ext
    n_hblk = -(-T // ext)

    # Stack per-layer weights/biases; flatten taps so the im2col path is a plain
    # (L, K*C) @ (K*C, C) matmul ((tap, c_in) row order == tap-concat order).
    w1 = jnp.stack([w.reshape(K * C, C) for (w, _) in params["convs1"]]).astype(mm_dt)
    w2 = jnp.stack([w.reshape(K * C, C) for (w, _) in params["convs2"]]).astype(mm_dt)
    b1 = jnp.stack([b for (_, b) in params["convs1"]]
                   ).reshape(n_layers, 1, C).astype(jnp.float32)
    b2 = jnp.stack([b for (_, b) in params["convs2"]]
                   ).reshape(n_layers, 1, C).astype(jnp.float32)

    def _run(single_buffer_weights, pack):
        kernel = functools.partial(
            _resblock1_kernel, T_total=T, t_tile=tt, ext=ext,
            dilations=tuple(dilation), K=K, pad_half=pad_half,
            pack_taps=pack, mm_dtype=mm_dt)

        est = est_vmem(tt, single_buffer_weights)
        cap = int(phys_vmem * (0.85 if single_buffer_weights else 0.9))
        vmem_limit = int(min(max(est * 5 // 4, 32 * 1024 * 1024), cap))

        # Grid-invariant inputs: index_map is constant, so single-buffer them.
        const_kw = ({"pipeline_mode": pl.Buffered(1)}
                    if single_buffer_weights else {})
        w_spec = pl.BlockSpec((n_layers, K * C, C), lambda b, i: (0, 0, 0),
                              **const_kw)
        b_spec = pl.BlockSpec((n_layers, 1, C), lambda b, i: (0, 0, 0),
                              **const_kw)

        return pl.pallas_call(
            kernel,
            out_shape=jax.ShapeDtypeStruct((B, T, C), io_dt),
            grid=(B, n_t),
            in_specs=[
                pl.BlockSpec((1, tt, C), lambda b, i: (b, i, 0)),
                pl.BlockSpec((1, ext, C),
                             lambda b, i: (b, jnp.maximum(i * r - 1, 0), 0)),
                pl.BlockSpec((1, ext, C),
                             lambda b, i: (b, jnp.minimum((i + 1) * r,
                                                          n_hblk - 1), 0)),
                w_spec, b_spec, w_spec, b_spec,
            ],
            out_specs=pl.BlockSpec((1, tt, C), lambda b, i: (b, i, 0)),
            compiler_params=pltpu.CompilerParams(
                dimension_semantics=("parallel", "parallel"),
                vmem_limit_bytes=vmem_limit),
        )(x, x, x, w1, b1, w2, b2)

    try:
        out = jax.block_until_ready(_run(True, pack_taps))
    except Exception:
        # Conservative fallback (double-buffered weights, per-tap dots) for jax
        # builds that reject pipeline_mode / minor-dim concatenation.
        out = _run(False, False)

    return jnp.transpose(out, (0, 2, 1))      # back to (B, C, T)


def init_resblock1_params(key, channels, kernel_size=3, n_layers=3):
    """Init mirroring init_weights (normal(0, 0.01)), bias = 0.

    weight_norm at init is an identity re-parametrization, so plain weights
    reproduce the forward exactly.  Weight layout: (K, C_in, C_out).
    """
    params = {"convs1": [], "convs2": []}
    for name in ("convs1", "convs2"):
        for _ in range(n_layers):
            key, wk = jax.random.split(key)
            w = 0.01 * jax.random.normal(
                wk, (kernel_size, channels, channels), jnp.float32)
            b = jnp.zeros((channels,), jnp.float32)
            params[name].append((w, b))
    return params


def _reference_forward(x_ncw, params, dilation=(1, 3, 5)):
    """Pure-JAX reference (lax.conv_general_dilated) in PyTorch NCW layout."""
    def conv(x, w, b, d):
        Kk = w.shape[0]
        wt = jnp.transpose(w, (2, 1, 0))                # (C_out, C_in, K)
        pad = (Kk * d - d) // 2
        y = lax.conv_general_dilated(
            x, wt, window_strides=(1,), padding=[(pad, pad)],
            rhs_dilation=(d,), dimension_numbers=("NCH", "OIH", "NCH"),
            precision=lax.Precision.HIGHEST)
        return y + b[None, :, None]

    x = x_ncw
    for i, d in enumerate(dilation):
        w1, b1 = params["convs1"][i]
        w2, b2 = params["convs2"][i]
        xt = conv(_leaky_relu(x), w1, b1, d)
        xt = conv(_leaky_relu(xt), w2, b2, 1)
        x = xt + x
    return x


if __name__ == "__main__":
    B, C, T = 2, 32, 200                                # small, non-tile-aligned T
    key = jax.random.PRNGKey(0)
    key, xk = jax.random.split(key)
    x = jax.random.normal(xk, (B, C, T), jnp.float32)   # PyTorch NCW layout

    params = init_resblock1_params(key, channels=C, kernel_size=3)
    ref = _reference_forward(x, params)

    # 1) Exact path (matmul operands in the io dtype == f32), tight tolerance.
    #    t_tile=64 -> 4 time tiles: exercises halo blocks, edge masking and the
    #    partial last block (T=200 is not a multiple of 64 or 16).
    out_f32 = jax.block_until_ready(
        resblock1_forward(x, params, t_tile=64, matmul_dtype=None))
    assert out_f32.shape == (B, C, T)
    assert jnp.allclose(out_f32, ref, atol=1e-3, rtol=1e-3), "f32 path mismatch"

    # 2) Default path (bf16 MXU operands, f32 accumulation / bias / residual):
    #    looser tolerance vs. the f32 reference (bf16 mantissa on operands).
    out_bf16 = jax.block_until_ready(resblock1_forward(x, params, t_tile=64))
    assert out_bf16.shape == (B, C, T)
    assert jnp.allclose(out_bf16, ref, atol=3e-2, rtol=3e-2), "bf16 path mismatch"

    print("KERNEL_OK")
</pallas_src>

<mosaic_0001>
module attributes {stable_mosaic.version = 11 : i64} {
  func.func @_resblock1_kernel(%arg0: i32, %arg1: i32, %arg2: memref<1x64x32xf32, #tpu.memory_space<vmem>>, %arg3: memref<1x16x32xf32, #tpu.memory_space<vmem>>, %arg4: memref<1x16x32xf32, #tpu.memory_space<vmem>>, %arg5: memref<3x96x32xf32, #tpu.memory_space<vmem>>, %arg6: memref<3x1x32xf32, #tpu.memory_space<vmem>>, %arg7: memref<3x96x32xf32, #tpu.memory_space<vmem>>, %arg8: memref<3x1x32xf32, #tpu.memory_space<vmem>>, %arg9: memref<1x64x32xf32, #tpu.memory_space<vmem>>) attributes {dimension_semantics = [#tpu.dimension_semantics<parallel>, #tpu.dimension_semantics<parallel>], iteration_bounds = array<i64: 2, 4>, scalar_prefetch = 0 : i64, scratch_operands = 0 : i64, tpu.core_type = #tpu.core_type<tc>, window_params = [{transform_indices = @transform_0, window_bounds = array<i64: 1, 64, 32>}, {transform_indices = @transform_1, window_bounds = array<i64: 1, 16, 32>}, {transform_indices = @transform_2, window_bounds = array<i64: 1, 16, 32>}, {pipeline_mode = #tpu.pipeline_mode<synchronous>, transform_indices = @transform_3, window_bounds = array<i64: 3, 96, 32>}, {pipeline_mode = #tpu.pipeline_mode<synchronous>, transform_indices = @transform_4, window_bounds = array<i64: 3, 1, 32>}, {pipeline_mode = #tpu.pipeline_mode<synchronous>, transform_indices = @transform_5, window_bounds = array<i64: 3, 96, 32>}, {pipeline_mode = #tpu.pipeline_mode<synchronous>, transform_indices = @transform_6, window_bounds = array<i64: 3, 1, 32>}, {transform_indices = @transform_7, window_bounds = array<i64: 1, 64, 32>}]} {
    %c64_i32 = arith.constant 64 : i32
    %0 = arith.muli %arg1, %c64_i32 : i32
    %c0 = arith.constant 0 : index
    %c0_0 = arith.constant 0 : index
    %c0_1 = arith.constant 0 : index
    %1 = vector.load %arg3[%c0, %c0_0, %c0_1] : memref<1x16x32xf32, #tpu.memory_space<vmem>>, vector<1x16x32xf32>
    %2 = vector.shape_cast %1 : vector<1x16x32xf32> to vector<16x32xf32>
    %c0_2 = arith.constant 0 : index
    %c0_3 = arith.constant 0 : index
    %c0_4 = arith.constant 0 : index
    %3 = vector.load %arg2[%c0_2, %c0_3, %c0_4] : memref<1x64x32xf32, #tpu.memory_space<vmem>>, vector<1x64x32xf32>
    %4 = vector.shape_cast %3 : vector<1x64x32xf32> to vector<64x32xf32>
    %c0_5 = arith.constant 0 : index
    %c0_6 = arith.constant 0 : index
    %c0_7 = arith.constant 0 : index
    %5 = vector.load %arg4[%c0_5, %c0_6, %c0_7] : memref<1x16x32xf32, #tpu.memory_space<vmem>>, vector<1x16x32xf32>
    %6 = vector.shape_cast %5 : vector<1x16x32xf32> to vector<16x32xf32>
    %7 = tpu.concatenate %2, %4, %6 in 0 : vector<16x32xf32>, vector<64x32xf32>, vector<16x32xf32> -> vector<96x32xf32>
    %8 = tpu.iota {dimensions = array<i32: 0>} : vector<96x32xi32>
    %c16_i32 = arith.constant 16 : i32
    %9 = arith.subi %0, %c16_i32 : i32
    %10 = vector.broadcast %9 : i32 to vector<96x32xi32>
    %11 = arith.addi %8, %10 : vector<96x32xi32>
    %c0_i32 = arith.constant 0 : i32
    %12 = vector.broadcast %c0_i32 : i32 to vector<96x32xi32>
    %13 = arith.cmpi sge, %11, %12 : vector<96x32xi32>
    %c200_i32 = arith.constant 200 : i32
    %14 = vector.broadcast %c200_i32 : i32 to vector<96x32xi32>
    %15 = arith.cmpi slt, %11, %14 : vector<96x32xi32>
    %16 = arith.andi %13, %15 : vector<96x32xi1>
    %cst = arith.constant 0.000000e+00 : f32
    %17 = vector.broadcast %cst : f32 to vector<96x32xf32>
    %18 = arith.select %16, %7, %17 : vector<96x32xi1>, vector<96x32xf32>
    %cst_8 = arith.constant 0.000000e+00 : f32
    %19 = vector.broadcast %cst_8 : f32 to vector<96x32xf32>
    %20 = arith.cmpf oge, %18, %19 : vector<96x32xf32>
    %cst_9 = arith.constant 1.000000e-01 : f32
    %21 = vector.broadcast %cst_9 : f32 to vector<96x32xf32>
    %22 = arith.mulf %21, %18 : vector<96x32xf32>
    %23 = arith.select %20, %18, %22 : vector<96x32xi1>, vector<96x32xf32>
    %24 = vector.extract_strided_slice %23 {offsets = [0, 0], sizes = [94, 32], strides = [1, 1]} : vector<96x32xf32> to vector<94x32xf32>
    %25 = vector.extract_strided_slice %23 {offsets = [1, 0], sizes = [94, 32], strides = [1, 1]} : vector<96x32xf32> to vector<94x32xf32>
    %26 = vector.extract_strided_slice %23 {offsets = [2, 0], sizes = [94, 32], strides = [1, 1]} : vector<96x32xf32> to vector<94x32xf32>
    %27 = tpu.concatenate %24, %25, %26 in 1 : vector<94x32xf32>, vector<94x32xf32>, vector<94x32xf32> -> vector<94x96xf32>
    %c0_10 = arith.constant 0 : index
    %c0_11 = arith.constant 0 : index
    %c0_12 = arith.constant 0 : index
    %28 = vector.load %arg5[%c0_10, %c0_11, %c0_12] : memref<3x96x32xf32, #tpu.memory_space<vmem>>, vector<1x96x32xf32>
    %29 = vector.shape_cast %28 : vector<1x96x32xf32> to vector<96x32xf32>
    %cst_13 = arith.constant dense<0.000000e+00> : vector<94x32xf32>
    %30 = tpu.matmul %27, %29, %cst_13 {dimension_numbers = #tpu.dot_dimension_numbers<[1], [0], [0], [1], [0, 0, 1, 1], [], []>} : vector<94x96xf32>, vector<96x32xf32>, vector<94x32xf32> -> vector<94x32xf32>
    %c0_14 = arith.constant 0 : index
    %c0_15 = arith.constant 0 : index
    %c0_16 = arith.constant 0 : index
    %31 = vector.load %arg6[%c0_14, %c0_15, %c0_16] : memref<3x1x32xf32, #tpu.memory_space<vmem>>, vector<1x1x32xf32>
    %32 = vector.shape_cast %31 : vector<1x1x32xf32> to vector<1x32xf32>
    %33 = vector.broadcast %32 : vector<1x32xf32> to vector<94x32xf32>
    %34 = arith.addf %30, %33 : vector<94x32xf32>
    %35 = vector.extract_strided_slice %16 {offsets = [1, 0], sizes = [94, 32], strides = [1, 1]} : vector<96x32xi1> to vector<94x32xi1>
    %cst_17 = arith.constant 0.000000e+00 : f32
    %36 = vector.broadcast %cst_17 : f32 to vector<94x32xf32>
    %37 = arith.select %35, %34, %36 : vector<94x32xi1>, vector<94x32xf32>
    %cst_18 = arith.constant 0.000000e+00 : f32
    %38 = vector.broadcast %cst_18 : f32 to vector<94x32xf32>
    %39 = arith.cmpf oge, %37, %38 : vector<94x32xf32>
    %cst_19 = arith.constant 1.000000e-01 : f32
    %40 = vector.broadcast %cst_19 : f32 to vector<94x32xf32>
    %41 = arith.mulf %40, %37 : vector<94x32xf32>
    %42 = arith.select %39, %37, %41 : vector<94x32xi1>, vector<94x32xf32>
    %43 = vector.extract_strided_slice %42 {offsets = [0, 0], sizes = [92, 32], strides = [1, 1]} : vector<94x32xf32> to vector<92x32xf32>
    %44 = vector.extract_strided_slice %42 {offsets = [1, 0], sizes = [92, 32], strides = [1, 1]} : vector<94x32xf32> to vector<92x32xf32>
    %45 = vector.extract_strided_slice %42 {offsets = [2, 0], sizes = [92, 32], strides = [1, 1]} : vector<94x32xf32> to vector<92x32xf32>
    %46 = tpu.concatenate %43, %44, %45 in 1 : vector<92x32xf32>, vector<92x32xf32>, vector<92x32xf32> -> vector<92x96xf32>
    %c0_20 = arith.constant 0 : index
    %c0_21 = arith.constant 0 : index
    %c0_22 = arith.constant 0 : index
    %47 = vector.load %arg7[%c0_20, %c0_21, %c0_22] : memref<3x96x32xf32, #tpu.memory_space<vmem>>, vector<1x96x32xf32>
    %48 = vector.shape_cast %47 : vector<1x96x32xf32> to vector<96x32xf32>
    %cst_23 = arith.constant dense<0.000000e+00> : vector<92x32xf32>
    %49 = tpu.matmul %46, %48, %cst_23 {dimension_numbers = #tpu.dot_dimension_numbers<[1], [0], [0], [1], [0, 0, 1, 1], [], []>} : vector<92x96xf32>, vector<96x32xf32>, vector<92x32xf32> -> vector<92x32xf32>
    %c0_24 = arith.constant 0 : index
    %c0_25 = arith.constant 0 : index
    %c0_26 = arith.constant 0 : index
    %50 = vector.load %arg8[%c0_24, %c0_25, %c0_26] : memref<3x1x32xf32, #tpu.memory_space<vmem>>, vector<1x1x32xf32>
    %51 = vector.shape_cast %50 : vector<1x1x32xf32> to vector<1x32xf32>
    %52 = vector.broadcast %51 : vector<1x32xf32> to vector<92x32xf32>
    %53 = arith.addf %49, %52 : vector<92x32xf32>
    %54 = vector.extract_strided_slice %18 {offsets = [2, 0], sizes = [92, 32], strides = [1, 1]} : vector<96x32xf32> to vector<92x32xf32>
    %55 = arith.addf %53, %54 : vector<92x32xf32>
    %56 = vector.extract_strided_slice %16 {offsets = [2, 0], sizes = [92, 32], strides = [1, 1]} : vector<96x32xi1> to vector<92x32xi1>
    %cst_27 = arith.constant 0.000000e+00 : f32
    %57 = vector.broadcast %cst_27 : f32 to vector<92x32xf32>
    %58 = arith.select %56, %55, %57 : vector<92x32xi1>, vector<92x32xf32>
    %cst_28 = arith.constant 0.000000e+00 : f32
    %59 = vector.broadcast %cst_28 : f32 to vector<92x32xf32>
    %60 = arith.cmpf oge, %58, %59 : vector<92x32xf32>
    %cst_29 = arith.constant 1.000000e-01 : f32
    %61 = vector.broadcast %cst_29 : f32 to vector<92x32xf32>
    %62 = arith.mulf %61, %58 : vector<92x32xf32>
    %63 = arith.select %60, %58, %62 : vector<92x32xi1>, vector<92x32xf32>
    %64 = vector.extract_strided_slice %63 {offsets = [0, 0], sizes = [86, 32], strides = [1, 1]} : vector<92x32xf32> to vector<86x32xf32>
    %65 = vector.extract_strided_slice %63 {offsets = [3, 0], sizes = [86, 32], strides = [1, 1]} : vector<92x32xf32> to vector<86x32xf32>
    %66 = vector.extract_strided_slice %63 {offsets = [6, 0], sizes = [86, 32], strides = [1, 1]} : vector<92x32xf32> to vector<86x32xf32>
    %67 = tpu.concatenate %64, %65, %66 in 1 : vector<86x32xf32>, vector<86x32xf32>, vector<86x32xf32> -> vector<86x96xf32>
    %c1 = arith.constant 1 : index
    %c0_30 = arith.constant 0 : index
    %c0_31 = arith.constant 0 : index
    %68 = vector.load %arg5[%c1, %c0_30, %c0_31] : memref<3x96x32xf32, #tpu.memory_space<vmem>>, vector<1x96x32xf32>
    %69 = vector.shape_cast %68 : vector<1x96x32xf32> to vector<96x32xf32>
    %cst_32 = arith.constant dense<0.000000e+00> : vector<86x32xf32>
    %70 = tpu.matmul %67, %69, %cst_32 {dimension_numbers = #tpu.dot_dimension_numbers<[1], [0], [0], [1], [0, 0, 1, 1], [], []>} : vector<86x96xf32>, vector<96x32xf32>, vector<86x32xf32> -> vector<86x32xf32>
    %c1_33 = arith.constant 1 : index
    %c0_34 = arith.constant 0 : index
    %c0_35 = arith.constant 0 : index
    %71 = vector.load %arg6[%c1_33, %c0_34, %c0_35] : memref<3x1x32xf32, #tpu.memory_space<vmem>>, vector<1x1x32xf32>
    %72 = vector.shape_cast %71 : vector<1x1x32xf32> to vector<1x32xf32>
    %73 = vector.broadcast %72 : vector<1x32xf32> to vector<86x32xf32>
    %74 = arith.addf %70, %73 : vector<86x32xf32>
    %75 = vector.extract_strided_slice %16 {offsets = [5, 0], sizes = [86, 32], strides = [1, 1]} : vector<96x32xi1> to vector<86x32xi1>
    %cst_36 = arith.constant 0.000000e+00 : f32
    %76 = vector.broadcast %cst_36 : f32 to vector<86x32xf32>
    %77 = arith.select %75, %74, %76 : vector<86x32xi1>, vector<86x32xf32>
    %cst_37 = arith.constant 0.000000e+00 : f32
    %78 = vector.broadcast %cst_37 : f32 to vector<86x32xf32>
    %79 = arith.cmpf oge, %77, %78 : vector<86x32xf32>
    %cst_38 = arith.constant 1.000000e-01 : f32
    %80 = vector.broadcast %cst_38 : f32 to vector<86x32xf32>
    %81 = arith.mulf %80, %77 : vector<86x32xf32>
    %82 = arith.select %79, %77, %81 : vector<86x32xi1>, vector<86x32xf32>
    %83 = vector.extract_strided_slice %82 {offsets = [0, 0], sizes = [84, 32], strides = [1, 1]} : vector<86x32xf32> to vector<84x32xf32>
    %84 = vector.extract_strided_slice %82 {offsets = [1, 0], sizes = [84, 32], strides = [1, 1]} : vector<86x32xf32> to vector<84x32xf32>
    %85 = vector.extract_strided_slice %82 {offsets = [2, 0], sizes = [84, 32], strides = [1, 1]} : vector<86x32xf32> to vector<84x32xf32>
    %86 = tpu.concatenate %83, %84, %85 in 1 : vector<84x32xf32>, vector<84x32xf32>, vector<84x32xf32> -> vector<84x96xf32>
    %c1_39 = arith.constant 1 : index
    %c0_40 = arith.constant 0 : index
    %c0_41 = arith.constant 0 : index
    %87 = vector.load %arg7[%c1_39, %c0_40, %c0_41] : memref<3x96x32xf32, #tpu.memory_space<vmem>>, vector<1x96x32xf32>
    %88 = vector.shape_cast %87 : vector<1x96x32xf32> to vector<96x32xf32>
    %cst_42 = arith.constant dense<0.000000e+00> : vector<84x32xf32>
    %89 = tpu.matmul %86, %88, %cst_42 {dimension_numbers = #tpu.dot_dimension_numbers<[1], [0], [0], [1], [0, 0, 1, 1], [], []>} : vector<84x96xf32>, vector<96x32xf32>, vector<84x32xf32> -> vector<84x32xf32>
    %c1_43 = arith.constant 1 : index
    %c0_44 = arith.constant 0 : index
    %c0_45 = arith.constant 0 : index
    %90 = vector.load %arg8[%c1_43, %c0_44, %c0_45] : memref<3x1x32xf32, #tpu.memory_space<vmem>>, vector<1x1x32xf32>
    %91 = vector.shape_cast %90 : vector<1x1x32xf32> to vector<1x32xf32>
    %92 = vector.broadcast %91 : vector<1x32xf32> to vector<84x32xf32>
    %93 = arith.addf %89, %92 : vector<84x32xf32>
    %94 = vector.extract_strided_slice %58 {offsets = [4, 0], sizes = [84, 32], strides = [1, 1]} : vector<92x32xf32> to vector<84x32xf32>
    %95 = arith.addf %93, %94 : vector<84x32xf32>
    %96 = vector.extract_strided_slice %16 {offsets = [6, 0], sizes = [84, 32], strides = [1, 1]} : vector<96x32xi1> to vector<84x32xi1>
    %cst_46 = arith.constant 0.000000e+00 : f32
    %97 = vector.broadcast %cst_46 : f32 to vector<84x32xf32>
    %98 = arith.select %96, %95, %97 : vector<84x32xi1>, vector<84x32xf32>
    %cst_47 = arith.constant 0.000000e+00 : f32
    %99 = vector.broadcast %cst_47 : f32 to vector<84x32xf32>
    %100 = arith.cmpf oge, %98, %99 : vector<84x32xf32>
    %cst_48 = arith.constant 1.000000e-01 : f32
    %101 = vector.broadcast %cst_48 : f32 to vector<84x32xf32>
    %102 = arith.mulf %101, %98 : vector<84x32xf32>
    %103 = arith.select %100, %98, %102 : vector<84x32xi1>, vector<84x32xf32>
    %104 = vector.extract_strided_slice %103 {offsets = [0, 0], sizes = [74, 32], strides = [1, 1]} : vector<84x32xf32> to vector<74x32xf32>
    %105 = vector.extract_strided_slice %103 {offsets = [5, 0], sizes = [74, 32], strides = [1, 1]} : vector<84x32xf32> to vector<74x32xf32>
    %106 = vector.extract_strided_slice %103 {offsets = [10, 0], sizes = [74, 32], strides = [1, 1]} : vector<84x32xf32> to vector<74x32xf32>
    %107 = tpu.concatenate %104, %105, %106 in 1 : vector<74x32xf32>, vector<74x32xf32>, vector<74x32xf32> -> vector<74x96xf32>
    %c2 = arith.constant 2 : index
    %c0_49 = arith.constant 0 : index
    %c0_50 = arith.constant 0 : index
    %108 = vector.load %arg5[%c2, %c0_49, %c0_50] : memref<3x96x32xf32, #tpu.memory_space<vmem>>, vector<1x96x32xf32>
    %109 = vector.shape_cast %108 : vector<1x96x32xf32> to vector<96x32xf32>
    %cst_51 = arith.constant dense<0.000000e+00> : vector<74x32xf32>
    %110 = tpu.matmul %107, %109, %cst_51 {dimension_numbers = #tpu.dot_dimension_numbers<[1], [0], [0], [1], [0, 0, 1, 1], [], []>} : vector<74x96xf32>, vector<96x32xf32>, vector<74x32xf32> -> vector<74x32xf32>
    %c2_52 = arith.constant 2 : index
    %c0_53 = arith.constant 0 : index
    %c0_54 = arith.constant 0 : index
    %111 = vector.load %arg6[%c2_52, %c0_53, %c0_54] : memref<3x1x32xf32, #tpu.memory_space<vmem>>, vector<1x1x32xf32>
    %112 = vector.shape_cast %111 : vector<1x1x32xf32> to vector<1x32xf32>
    %113 = vector.broadcast %112 : vector<1x32xf32> to vector<74x32xf32>
    %114 = arith.addf %110, %113 : vector<74x32xf32>
    %115 = vector.extract_strided_slice %16 {offsets = [11, 0], sizes = [74, 32], strides = [1, 1]} : vector<96x32xi1> to vector<74x32xi1>
    %cst_55 = arith.constant 0.000000e+00 : f32
    %116 = vector.broadcast %cst_55 : f32 to vector<74x32xf32>
    %117 = arith.select %115, %114, %116 : vector<74x32xi1>, vector<74x32xf32>
    %cst_56 = arith.constant 0.000000e+00 : f32
    %118 = vector.broadcast %cst_56 : f32 to vector<74x32xf32>
    %119 = arith.cmpf oge, %117, %118 : vector<74x32xf32>
    %cst_57 = arith.constant 1.000000e-01 : f32
    %120 = vector.broadcast %cst_57 : f32 to vector<74x32xf32>
    %121 = arith.mulf %120, %117 : vector<74x32xf32>
    %122 = arith.select %119, %117, %121 : vector<74x32xi1>, vector<74x32xf32>
    %123 = vector.extract_strided_slice %122 {offsets = [0, 0], sizes = [72, 32], strides = [1, 1]} : vector<74x32xf32> to vector<72x32xf32>
    %124 = vector.extract_strided_slice %122 {offsets = [1, 0], sizes = [72, 32], strides = [1, 1]} : vector<74x32xf32> to vector<72x32xf32>
    %125 = vector.extract_strided_slice %122 {offsets = [2, 0], sizes = [72, 32], strides = [1, 1]} : vector<74x32xf32> to vector<72x32xf32>
    %126 = tpu.concatenate %123, %124, %125 in 1 : vector<72x32xf32>, vector<72x32xf32>, vector<72x32xf32> -> vector<72x96xf32>
    %c2_58 = arith.constant 2 : index
    %c0_59 = arith.constant 0 : index
    %c0_60 = arith.constant 0 : index
    %127 = vector.load %arg7[%c2_58, %c0_59, %c0_60] : memref<3x96x32xf32, #tpu.memory_space<vmem>>, vector<1x96x32xf32>
    %128 = vector.shape_cast %127 : vector<1x96x32xf32> to vector<96x32xf32>
    %cst_61 = arith.constant dense<0.000000e+00> : vector<72x32xf32>
    %129 = tpu.matmul %126, %128, %cst_61 {dimension_numbers = #tpu.dot_dimension_numbers<[1], [0], [0], [1], [0, 0, 1, 1], [], []>} : vector<72x96xf32>, vector<96x32xf32>, vector<72x32xf32> -> vector<72x32xf32>
    %c2_62 = arith.constant 2 : index
    %c0_63 = arith.constant 0 : index
    %c0_64 = arith.constant 0 : index
    %130 = vector.load %arg8[%c2_62, %c0_63, %c0_64] : memref<3x1x32xf32, #tpu.memory_space<vmem>>, vector<1x1x32xf32>
    %131 = vector.shape_cast %130 : vector<1x1x32xf32> to vector<1x32xf32>
    %132 = vector.broadcast %131 : vector<1x32xf32> to vector<72x32xf32>
    %133 = arith.addf %129, %132 : vector<72x32xf32>
    %134 = vector.extract_strided_slice %98 {offsets = [6, 0], sizes = [72, 32], strides = [1, 1]} : vector<84x32xf32> to vector<72x32xf32>
    %135 = arith.addf %133, %134 : vector<72x32xf32>
    %136 = vector.extract_strided_slice %16 {offsets = [12, 0], sizes = [72, 32], strides = [1, 1]} : vector<96x32xi1> to vector<72x32xi1>
    %cst_65 = arith.constant 0.000000e+00 : f32
    %137 = vector.broadcast %cst_65 : f32 to vector<72x32xf32>
    %138 = arith.select %136, %135, %137 : vector<72x32xi1>, vector<72x32xf32>
    %139 = vector.extract_strided_slice %138 {offsets = [4, 0], sizes = [64, 32], strides = [1, 1]} : vector<72x32xf32> to vector<64x32xf32>
    %c0_66 = arith.constant 0 : index
    %c0_67 = arith.constant 0 : index
    %c0_68 = arith.constant 0 : index
    %140 = vector.load %arg9[%c0_66, %c0_67, %c0_68] : memref<1x64x32xf32, #tpu.memory_space<vmem>>, vector<1x64x32xf32>
    %141 = vector.shape_cast %140 : vector<1x64x32xf32> to vector<64x32xf32>
    %142 = vector.shape_cast %139 : vector<64x32xf32> to vector<1x64x32xf32>
    tpu.vector_store %arg9[%c0_66, %c0_67, %c0_68], %142 {strides = array<i32>} : memref<1x64x32xf32, #tpu.memory_space<vmem>>, vector<1x64x32xf32>,
    return
  }
  func.func @transform_0(%arg0: i32, %arg1: i32) -> (i32, i32, i32) {
    %c0_i32 = arith.constant 0 : i32
    %c0_i32_0 = arith.constant 0 : i32
    return %arg0, %arg1, %c0_i32 : i32, i32, i32
  }
  func.func @transform_1(%arg0: i32, %arg1: i32) -> (i32, i32, i32) {
    %c4_i32 = arith.constant 4 : i32
    %0 = arith.muli %arg1, %c4_i32 : i32
    %c1_i32 = arith.constant 1 : i32
    %1 = arith.subi %0, %c1_i32 : i32
    %c0_i32 = arith.constant 0 : i32
    %2 = arith.maxsi %1, %c0_i32 : i32
    %c0_i32_0 = arith.constant 0 : i32
    %c0_i32_1 = arith.constant 0 : i32
    return %arg0, %2, %c0_i32_0 : i32, i32, i32
  }
  func.func @transform_2(%arg0: i32, %arg1: i32) -> (i32, i32, i32) {
    %c1_i32 = arith.constant 1 : i32
    %0 = arith.addi %arg1, %c1_i32 : i32
    %c4_i32 = arith.constant 4 : i32
    %1 = arith.muli %0, %c4_i32 : i32
    %c12_i32 = arith.constant 12 : i32
    %2 = arith.minsi %1, %c12_i32 : i32
    %c0_i32 = arith.constant 0 : i32
    %c0_i32_0 = arith.constant 0 : i32
    return %arg0, %2, %c0_i32 : i32, i32, i32
  }
  func.func @transform_3(%arg0: i32, %arg1: i32) -> (i32, i32, i32) {
    %c0_i32 = arith.constant 0 : i32
    %c0_i32_0 = arith.constant 0 : i32
    %c0_i32_1 = arith.constant 0 : i32
    %c0_i32_2 = arith.constant 0 : i32
    return %c0_i32, %c0_i32_0, %c0_i32_1 : i32, i32, i32
  }
  func.func @transform_4(%arg0: i32, %arg1: i32) -> (i32, i32, i32) {
    %c0_i32 = arith.constant 0 : i32
    %c0_i32_0 = arith.constant 0 : i32
    %c0_i32_1 = arith.constant 0 : i32
    %c0_i32_2 = arith.constant 0 : i32
    return %c0_i32, %c0_i32_0, %c0_i32_1 : i32, i32, i32
  }
  func.func @transform_5(%arg0: i32, %arg1: i32) -> (i32, i32, i32) {
    %c0_i32 = arith.constant 0 : i32
    %c0_i32_0 = arith.constant 0 : i32
    %c0_i32_1 = arith.constant 0 : i32
    %c0_i32_2 = arith.constant 0 : i32
    return %c0_i32, %c0_i32_0, %c0_i32_1 : i32, i32, i32
  }
  func.func @transform_6(%arg0: i32, %arg1: i32) -> (i32, i32, i32) {
    %c0_i32 = arith.constant 0 : i32
    %c0_i32_0 = arith.constant 0 : i32
    %c0_i32_1 = arith.constant 0 : i32
    %c0_i32_2 = arith.constant 0 : i32
    return %c0_i32, %c0_i32_0, %c0_i32_1 : i32, i32, i32
  }
  func.func @transform_7(%arg0: i32, %arg1: i32) -> (i32, i32, i32) {
    %c0_i32 = arith.constant 0 : i32
    %c0_i32_0 = arith.constant 0 : i32
    return %arg0, %arg1, %c0_i32 : i32, i32, i32
  }
}

module attributes {stable_mosaic.version = 11 : i64} {
  func.func @_resblock1_kernel(%arg0: i32, %arg1: i32, %arg2: memref<1x64x32xf32, #tpu.memory_space<vmem>>, %arg3: memref<1x16x32xf32, #tpu.memory_space<vmem>>, %arg4: memref<1x16x32xf32, #tpu.memory_space<vmem>>, %arg5: memref<3x96x32xf32, #tpu.memory_space<vmem>>, %arg6: memref<3x1x32xf32, #tpu.memory_space<vmem>>, %arg7: memref<3x96x32xf32, #tpu.memory_space<vmem>>, %arg8: memref<3x1x32xf32, #tpu.memory_space<vmem>>, %arg9: memref<1x64x32xf32, #tpu.memory_space<vmem>>) attributes {dimension_semantics = [#tpu.dimension_semantics<parallel>, #tpu.dimension_semantics<parallel>], iteration_bounds = array<i64: 2, 4>, scalar_prefetch = 0 : i64, scratch_operands = 0 : i64, tpu.core_type = #tpu.core_type<tc>, window_params = [{transform_indices = @transform_0, window_bounds = array<i64: 1, 64, 32>}, {transform_indices = @transform_1, window_bounds = array<i64: 1, 16, 32>}, {transform_indices = @transform_2, window_bounds = array<i64: 1, 16, 32>}, {pipeline_mode = #tpu.pipeline_mode<synchronous>, transform_indices = @transform_3, window_bounds = array<i64: 3, 96, 32>}, {pipeline_mode = #tpu.pipeline_mode<synchronous>, transform_indices = @transform_4, window_bounds = array<i64: 3, 1, 32>}, {pipeline_mode = #tpu.pipeline_mode<synchronous>, transform_indices = @transform_5, window_bounds = array<i64: 3, 96, 32>}, {pipeline_mode = #tpu.pipeline_mode<synchronous>, transform_indices = @transform_6, window_bounds = array<i64: 3, 1, 32>}, {transform_indices = @transform_7, window_bounds = array<i64: 1, 64, 32>}]} {
    %c64_i32 = arith.constant 64 : i32
    %0 = arith.muli %arg1, %c64_i32 : i32
    %c0 = arith.constant 0 : index
    %c0_0 = arith.constant 0 : index
    %c0_1 = arith.constant 0 : index
    %1 = vector.load %arg3[%c0, %c0_0, %c0_1] : memref<1x16x32xf32, #tpu.memory_space<vmem>>, vector<1x16x32xf32>
    %2 = vector.shape_cast %1 : vector<1x16x32xf32> to vector<16x32xf32>
    %c0_2 = arith.constant 0 : index
    %c0_3 = arith.constant 0 : index
    %c0_4 = arith.constant 0 : index
    %3 = vector.load %arg2[%c0_2, %c0_3, %c0_4] : memref<1x64x32xf32, #tpu.memory_space<vmem>>, vector<1x64x32xf32>
    %4 = vector.shape_cast %3 : vector<1x64x32xf32> to vector<64x32xf32>
    %c0_5 = arith.constant 0 : index
    %c0_6 = arith.constant 0 : index
    %c0_7 = arith.constant 0 : index
    %5 = vector.load %arg4[%c0_5, %c0_6, %c0_7] : memref<1x16x32xf32, #tpu.memory_space<vmem>>, vector<1x16x32xf32>
    %6 = vector.shape_cast %5 : vector<1x16x32xf32> to vector<16x32xf32>
    %7 = tpu.concatenate %2, %4, %6 in 0 : vector<16x32xf32>, vector<64x32xf32>, vector<16x32xf32> -> vector<96x32xf32>
    %8 = tpu.iota {dimensions = array<i32: 0>} : vector<96x32xi32>
    %c16_i32 = arith.constant 16 : i32
    %9 = arith.subi %0, %c16_i32 : i32
    %10 = vector.broadcast %9 : i32 to vector<96x32xi32>
    %11 = arith.addi %8, %10 : vector<96x32xi32>
    %c0_i32 = arith.constant 0 : i32
    %12 = vector.broadcast %c0_i32 : i32 to vector<96x32xi32>
    %13 = arith.cmpi sge, %11, %12 : vector<96x32xi32>
    %c200_i32 = arith.constant 200 : i32
    %14 = vector.broadcast %c200_i32 : i32 to vector<96x32xi32>
    %15 = arith.cmpi slt, %11, %14 : vector<96x32xi32>
    %16 = arith.andi %13, %15 : vector<96x32xi1>
    %cst = arith.constant 0.000000e+00 : f32
    %17 = vector.broadcast %cst : f32 to vector<96x32xf32>
    %18 = arith.select %16, %7, %17 : vector<96x32xi1>, vector<96x32xf32>
    %cst_8 = arith.constant 0.000000e+00 : f32
    %19 = vector.broadcast %cst_8 : f32 to vector<96x32xf32>
    %20 = arith.cmpf oge, %18, %19 : vector<96x32xf32>
    %cst_9 = arith.constant 1.000000e-01 : f32
    %21 = vector.broadcast %cst_9 : f32 to vector<96x32xf32>
    %22 = arith.mulf %21, %18 : vector<96x32xf32>
    %23 = arith.select %20, %18, %22 : vector<96x32xi1>, vector<96x32xf32>
    %24 = vector.extract_strided_slice %23 {offsets = [0, 0], sizes = [94, 32], strides = [1, 1]} : vector<96x32xf32> to vector<94x32xf32>
    %c0_10 = arith.constant 0 : index
    %c0_11 = arith.constant 0 : index
    %c0_12 = arith.constant 0 : index
    %25 = vector.load %arg5[%c0_10, %c0_11, %c0_12] : memref<3x96x32xf32, #tpu.memory_space<vmem>>, vector<1x32x32xf32>
    %26 = vector.shape_cast %25 : vector<1x32x32xf32> to vector<32x32xf32>
    %cst_13 = arith.constant dense<0.000000e+00> : vector<94x32xf32>
    %27 = tpu.matmul %24, %26, %cst_13 {dimension_numbers = #tpu.dot_dimension_numbers<[1], [0], [0], [1], [0, 0, 1, 1], [], []>} : vector<94x32xf32>, vector<32x32xf32>, vector<94x32xf32> -> vector<94x32xf32>
    %28 = vector.extract_strided_slice %23 {offsets = [1, 0], sizes = [94, 32], strides = [1, 1]} : vector<96x32xf32> to vector<94x32xf32>
    %c0_14 = arith.constant 0 : index
    %c32 = arith.constant 32 : index
    %c0_15 = arith.constant 0 : index
    %29 = vector.load %arg5[%c0_14, %c32, %c0_15] : memref<3x96x32xf32, #tpu.memory_space<vmem>>, vector<1x32x32xf32>
    %30 = vector.shape_cast %29 : vector<1x32x32xf32> to vector<32x32xf32>
    %cst_16 = arith.constant dense<0.000000e+00> : vector<94x32xf32>
    %31 = tpu.matmul %28, %30, %cst_16 {dimension_numbers = #tpu.dot_dimension_numbers<[1], [0], [0], [1], [0, 0, 1, 1], [], []>} : vector<94x32xf32>, vector<32x32xf32>, vector<94x32xf32> -> vector<94x32xf32>
    %32 = arith.addf %27, %31 : vector<94x32xf32>
    %33 = vector.extract_strided_slice %23 {offsets = [2, 0], sizes = [94, 32], strides = [1, 1]} : vector<96x32xf32> to vector<94x32xf32>
    %c0_17 = arith.constant 0 : index
    %c64 = arith.constant 64 : index
    %c0_18 = arith.constant 0 : index
    %34 = vector.load %arg5[%c0_17, %c64, %c0_18] : memref<3x96x32xf32, #tpu.memory_space<vmem>>, vector<1x32x32xf32>
    %35 = vector.shape_cast %34 : vector<1x32x32xf32> to vector<32x32xf32>
    %cst_19 = arith.constant dense<0.000000e+00> : vector<94x32xf32>
    %36 = tpu.matmul %33, %35, %cst_19 {dimension_numbers = #tpu.dot_dimension_numbers<[1], [0], [0], [1], [0, 0, 1, 1], [], []>} : vector<94x32xf32>, vector<32x32xf32>, vector<94x32xf32> -> vector<94x32xf32>
    %37 = arith.addf %32, %36 : vector<94x32xf32>
    %c0_20 = arith.constant 0 : index
    %c0_21 = arith.constant 0 : index
    %c0_22 = arith.constant 0 : index
    %38 = vector.load %arg6[%c0_20, %c0_21, %c0_22] : memref<3x1x32xf32, #tpu.memory_space<vmem>>, vector<1x1x32xf32>
    %39 = vector.shape_cast %38 : vector<1x1x32xf32> to vector<1x32xf32>
    %40 = vector.broadcast %39 : vector<1x32xf32> to vector<94x32xf32>
    %41 = arith.addf %37, %40 : vector<94x32xf32>
    %42 = vector.extract_strided_slice %16 {offsets = [1, 0], sizes = [94, 32], strides = [1, 1]} : vector<96x32xi1> to vector<94x32xi1>
    %cst_23 = arith.constant 0.000000e+00 : f32
    %43 = vector.broadcast %cst_23 : f32 to vector<94x32xf32>
    %44 = arith.select %42, %41, %43 : vector<94x32xi1>, vector<94x32xf32>
    %cst_24 = arith.constant 0.000000e+00 : f32
    %45 = vector.broadcast %cst_24 : f32 to vector<94x32xf32>
    %46 = arith.cmpf oge, %44, %45 : vector<94x32xf32>
    %cst_25 = arith.constant 1.000000e-01 : f32
    %47 = vector.broadcast %cst_25 : f32 to vector<94x32xf32>
    %48 = arith.mulf %47, %44 : vector<94x32xf32>
    %49 = arith.select %46, %44, %48 : vector<94x32xi1>, vector<94x32xf32>
    %50 = vector.extract_strided_slice %49 {offsets = [0, 0], sizes = [92, 32], strides = [1, 1]} : vector<94x32xf32> to vector<92x32xf32>
    %c0_26 = arith.constant 0 : index
    %c0_27 = arith.constant 0 : index
    %c0_28 = arith.constant 0 : index
    %51 = vector.load %arg7[%c0_26, %c0_27, %c0_28] : memref<3x96x32xf32, #tpu.memory_space<vmem>>, vector<1x32x32xf32>
    %52 = vector.shape_cast %51 : vector<1x32x32xf32> to vector<32x32xf32>
    %cst_29 = arith.constant dense<0.000000e+00> : vector<92x32xf32>
    %53 = tpu.matmul %50, %52, %cst_29 {dimension_numbers = #tpu.dot_dimension_numbers<[1], [0], [0], [1], [0, 0, 1, 1], [], []>} : vector<92x32xf32>, vector<32x32xf32>, vector<92x32xf32> -> vector<92x32xf32>
    %54 = vector.extract_strided_slice %49 {offsets = [1, 0], sizes = [92, 32], strides = [1, 1]} : vector<94x32xf32> to vector<92x32xf32>
    %c0_30 = arith.constant 0 : index
    %c32_31 = arith.constant 32 : index
    %c0_32 = arith.constant 0 : index
    %55 = vector.load %arg7[%c0_30, %c32_31, %c0_32] : memref<3x96x32xf32, #tpu.memory_space<vmem>>, vector<1x32x32xf32>
    %56 = vector.shape_cast %55 : vector<1x32x32xf32> to vector<32x32xf32>
    %cst_33 = arith.constant dense<0.000000e+00> : vector<92x32xf32>
    %57 = tpu.matmul %54, %56, %cst_33 {dimension_numbers = #tpu.dot_dimension_numbers<[1], [0], [0], [1], [0, 0, 1, 1], [], []>} : vector<92x32xf32>, vector<32x32xf32>, vector<92x32xf32> -> vector<92x32xf32>
    %58 = arith.addf %53, %57 : vector<92x32xf32>
    %59 = vector.extract_strided_slice %49 {offsets = [2, 0], sizes = [92, 32], strides = [1, 1]} : vector<94x32xf32> to vector<92x32xf32>
    %c0_34 = arith.constant 0 : index
    %c64_35 = arith.constant 64 : index
    %c0_36 = arith.constant 0 : index
    %60 = vector.load %arg7[%c0_34, %c64_35, %c0_36] : memref<3x96x32xf32, #tpu.memory_space<vmem>>, vector<1x32x32xf32>
    %61 = vector.shape_cast %60 : vector<1x32x32xf32> to vector<32x32xf32>
    %cst_37 = arith.constant dense<0.000000e+00> : vector<92x32xf32>
    %62 = tpu.matmul %59, %61, %cst_37 {dimension_numbers = #tpu.dot_dimension_numbers<[1], [0], [0], [1], [0, 0, 1, 1], [], []>} : vector<92x32xf32>, vector<32x32xf32>, vector<92x32xf32> -> vector<92x32xf32>
    %63 = arith.addf %58, %62 : vector<92x32xf32>
    %c0_38 = arith.constant 0 : index
    %c0_39 = arith.constant 0 : index
    %c0_40 = arith.constant 0 : index
    %64 = vector.load %arg8[%c0_38, %c0_39, %c0_40] : memref<3x1x32xf32, #tpu.memory_space<vmem>>, vector<1x1x32xf32>
    %65 = vector.shape_cast %64 : vector<1x1x32xf32> to vector<1x32xf32>
    %66 = vector.broadcast %65 : vector<1x32xf32> to vector<92x32xf32>
    %67 = arith.addf %63, %66 : vector<92x32xf32>
    %68 = vector.extract_strided_slice %18 {offsets = [2, 0], sizes = [92, 32], strides = [1, 1]} : vector<96x32xf32> to vector<92x32xf32>
    %69 = arith.addf %67, %68 : vector<92x32xf32>
    %70 = vector.extract_strided_slice %16 {offsets = [2, 0], sizes = [92, 32], strides = [1, 1]} : vector<96x32xi1> to vector<92x32xi1>
    %cst_41 = arith.constant 0.000000e+00 : f32
    %71 = vector.broadcast %cst_41 : f32 to vector<92x32xf32>
    %72 = arith.select %70, %69, %71 : vector<92x32xi1>, vector<92x32xf32>
    %cst_42 = arith.constant 0.000000e+00 : f32
    %73 = vector.broadcast %cst_42 : f32 to vector<92x32xf32>
    %74 = arith.cmpf oge, %72, %73 : vector<92x32xf32>
    %cst_43 = arith.constant 1.000000e-01 : f32
    %75 = vector.broadcast %cst_43 : f32 to vector<92x32xf32>
    %76 = arith.mulf %75, %72 : vector<92x32xf32>
    %77 = arith.select %74, %72, %76 : vector<92x32xi1>, vector<92x32xf32>
    %78 = vector.extract_strided_slice %77 {offsets = [0, 0], sizes = [86, 32], strides = [1, 1]} : vector<92x32xf32> to vector<86x32xf32>
    %c1 = arith.constant 1 : index
    %c0_44 = arith.constant 0 : index
    %c0_45 = arith.constant 0 : index
    %79 = vector.load %arg5[%c1, %c0_44, %c0_45] : memref<3x96x32xf32, #tpu.memory_space<vmem>>, vector<1x32x32xf32>
    %80 = vector.shape_cast %79 : vector<1x32x32xf32> to vector<32x32xf32>
    %cst_46 = arith.constant dense<0.000000e+00> : vector<86x32xf32>
    %81 = tpu.matmul %78, %80, %cst_46 {dimension_numbers = #tpu.dot_dimension_numbers<[1], [0], [0], [1], [0, 0, 1, 1], [], []>} : vector<86x32xf32>, vector<32x32xf32>, vector<86x32xf32> -> vector<86x32xf32>
    %82 = vector.extract_strided_slice %77 {offsets = [3, 0], sizes = [86, 32], strides = [1, 1]} : vector<92x32xf32> to vector<86x32xf32>
    %c1_47 = arith.constant 1 : index
    %c32_48 = arith.constant 32 : index
    %c0_49 = arith.constant 0 : index
    %83 = vector.load %arg5[%c1_47, %c32_48, %c0_49] : memref<3x96x32xf32, #tpu.memory_space<vmem>>, vector<1x32x32xf32>
    %84 = vector.shape_cast %83 : vector<1x32x32xf32> to vector<32x32xf32>
    %cst_50 = arith.constant dense<0.000000e+00> : vector<86x32xf32>
    %85 = tpu.matmul %82, %84, %cst_50 {dimension_numbers = #tpu.dot_dimension_numbers<[1], [0], [0], [1], [0, 0, 1, 1], [], []>} : vector<86x32xf32>, vector<32x32xf32>, vector<86x32xf32> -> vector<86x32xf32>
    %86 = arith.addf %81, %85 : vector<86x32xf32>
    %87 = vector.extract_strided_slice %77 {offsets = [6, 0], sizes = [86, 32], strides = [1, 1]} : vector<92x32xf32> to vector<86x32xf32>
    %c1_51 = arith.constant 1 : index
    %c64_52 = arith.constant 64 : index
    %c0_53 = arith.constant 0 : index
    %88 = vector.load %arg5[%c1_51, %c64_52, %c0_53] : memref<3x96x32xf32, #tpu.memory_space<vmem>>, vector<1x32x32xf32>
    %89 = vector.shape_cast %88 : vector<1x32x32xf32> to vector<32x32xf32>
    %cst_54 = arith.constant dense<0.000000e+00> : vector<86x32xf32>
    %90 = tpu.matmul %87, %89, %cst_54 {dimension_numbers = #tpu.dot_dimension_numbers<[1], [0], [0], [1], [0, 0, 1, 1], [], []>} : vector<86x32xf32>, vector<32x32xf32>, vector<86x32xf32> -> vector<86x32xf32>
    %91 = arith.addf %86, %90 : vector<86x32xf32>
    %c1_55 = arith.constant 1 : index
    %c0_56 = arith.constant 0 : index
    %c0_57 = arith.constant 0 : index
    %92 = vector.load %arg6[%c1_55, %c0_56, %c0_57] : memref<3x1x32xf32, #tpu.memory_space<vmem>>, vector<1x1x32xf32>
    %93 = vector.shape_cast %92 : vector<1x1x32xf32> to vector<1x32xf32>
    %94 = vector.broadcast %93 : vector<1x32xf32> to vector<86x32xf32>
    %95 = arith.addf %91, %94 : vector<86x32xf32>
    %96 = vector.extract_strided_slice %16 {offsets = [5, 0], sizes = [86, 32], strides = [1, 1]} : vector<96x32xi1> to vector<86x32xi1>
    %cst_58 = arith.constant 0.000000e+00 : f32
    %97 = vector.broadcast %cst_58 : f32 to vector<86x32xf32>
    %98 = arith.select %96, %95, %97 : vector<86x32xi1>, vector<86x32xf32>
    %cst_59 = arith.constant 0.000000e+00 : f32
    %99 = vector.broadcast %cst_59 : f32 to vector<86x32xf32>
    %100 = arith.cmpf oge, %98, %99 : vector<86x32xf32>
    %cst_60 = arith.constant 1.000000e-01 : f32
    %101 = vector.broadcast %cst_60 : f32 to vector<86x32xf32>
    %102 = arith.mulf %101, %98 : vector<86x32xf32>
    %103 = arith.select %100, %98, %102 : vector<86x32xi1>, vector<86x32xf32>
    %104 = vector.extract_strided_slice %103 {offsets = [0, 0], sizes = [84, 32], strides = [1, 1]} : vector<86x32xf32> to vector<84x32xf32>
    %c1_61 = arith.constant 1 : index
    %c0_62 = arith.constant 0 : index
    %c0_63 = arith.constant 0 : index
    %105 = vector.load %arg7[%c1_61, %c0_62, %c0_63] : memref<3x96x32xf32, #tpu.memory_space<vmem>>, vector<1x32x32xf32>
    %106 = vector.shape_cast %105 : vector<1x32x32xf32> to vector<32x32xf32>
    %cst_64 = arith.constant dense<0.000000e+00> : vector<84x32xf32>
    %107 = tpu.matmul %104, %106, %cst_64 {dimension_numbers = #tpu.dot_dimension_numbers<[1], [0], [0], [1], [0, 0, 1, 1], [], []>} : vector<84x32xf32>, vector<32x32xf32>, vector<84x32xf32> -> vector<84x32xf32>
    %108 = vector.extract_strided_slice %103 {offsets = [1, 0], sizes = [84, 32], strides = [1, 1]} : vector<86x32xf32> to vector<84x32xf32>
    %c1_65 = arith.constant 1 : index
    %c32_66 = arith.constant 32 : index
    %c0_67 = arith.constant 0 : index
    %109 = vector.load %arg7[%c1_65, %c32_66, %c0_67] : memref<3x96x32xf32, #tpu.memory_space<vmem>>, vector<1x32x32xf32>
    %110 = vector.shape_cast %109 : vector<1x32x32xf32> to vector<32x32xf32>
    %cst_68 = arith.constant dense<0.000000e+00> : vector<84x32xf32>
    %111 = tpu.matmul %108, %110, %cst_68 {dimension_numbers = #tpu.dot_dimension_numbers<[1], [0], [0], [1], [0, 0, 1, 1], [], []>} : vector<84x32xf32>, vector<32x32xf32>, vector<84x32xf32> -> vector<84x32xf32>
    %112 = arith.addf %107, %111 : vector<84x32xf32>
    %113 = vector.extract_strided_slice %103 {offsets = [2, 0], sizes = [84, 32], strides = [1, 1]} : vector<86x32xf32> to vector<84x32xf32>
    %c1_69 = arith.constant 1 : index
    %c64_70 = arith.constant 64 : index
    %c0_71 = arith.constant 0 : index
    %114 = vector.load %arg7[%c1_69, %c64_70, %c0_71] : memref<3x96x32xf32, #tpu.memory_space<vmem>>, vector<1x32x32xf32>
    %115 = vector.shape_cast %114 : vector<1x32x32xf32> to vector<32x32xf32>
    %cst_72 = arith.constant dense<0.000000e+00> : vector<84x32xf32>
    %116 = tpu.matmul %113, %115, %cst_72 {dimension_numbers = #tpu.dot_dimension_numbers<[1], [0], [0], [1], [0, 0, 1, 1], [], []>} : vector<84x32xf32>, vector<32x32xf32>, vector<84x32xf32> -> vector<84x32xf32>
    %117 = arith.addf %112, %116 : vector<84x32xf32>
    %c1_73 = arith.constant 1 : index
    %c0_74 = arith.constant 0 : index
    %c0_75 = arith.constant 0 : index
    %118 = vector.load %arg8[%c1_73, %c0_74, %c0_75] : memref<3x1x32xf32, #tpu.memory_space<vmem>>, vector<1x1x32xf32>
    %119 = vector.shape_cast %118 : vector<1x1x32xf32> to vector<1x32xf32>
    %120 = vector.broadcast %119 : vector<1x32xf32> to vector<84x32xf32>
    %121 = arith.addf %117, %120 : vector<84x32xf32>
    %122 = vector.extract_strided_slice %72 {offsets = [4, 0], sizes = [84, 32], strides = [1, 1]} : vector<92x32xf32> to vector<84x32xf32>
    %123 = arith.addf %121, %122 : vector<84x32xf32>
    %124 = vector.extract_strided_slice %16 {offsets = [6, 0], sizes = [84, 32], strides = [1, 1]} : vector<96x32xi1> to vector<84x32xi1>
    %cst_76 = arith.constant 0.000000e+00 : f32
    %125 = vector.broadcast %cst_76 : f32 to vector<84x32xf32>
    %126 = arith.select %124, %123, %125 : vector<84x32xi1>, vector<84x32xf32>
    %cst_77 = arith.constant 0.000000e+00 : f32
    %127 = vector.broadcast %cst_77 : f32 to vector<84x32xf32>
    %128 = arith.cmpf oge, %126, %127 : vector<84x32xf32>
    %cst_78 = arith.constant 1.000000e-01 : f32
    %129 = vector.broadcast %cst_78 : f32 to vector<84x32xf32>
    %130 = arith.mulf %129, %126 : vector<84x32xf32>
    %131 = arith.select %128, %126, %130 : vector<84x32xi1>, vector<84x32xf32>
    %132 = vector.extract_strided_slice %131 {offsets = [0, 0], sizes = [74, 32], strides = [1, 1]} : vector<84x32xf32> to vector<74x32xf32>
    %c2 = arith.constant 2 : index
    %c0_79 = arith.constant 0 : index
    %c0_80 = arith.constant 0 : index
    %133 = vector.load %arg5[%c2, %c0_79, %c0_80] : memref<3x96x32xf32, #tpu.memory_space<vmem>>, vector<1x32x32xf32>
    %134 = vector.shape_cast %133 : vector<1x32x32xf32> to vector<32x32xf32>
    %cst_81 = arith.constant dense<0.000000e+00> : vector<74x32xf32>
    %135 = tpu.matmul %132, %134, %cst_81 {dimension_numbers = #tpu.dot_dimension_numbers<[1], [0], [0], [1], [0, 0, 1, 1], [], []>} : vector<74x32xf32>, vector<32x32xf32>, vector<74x32xf32> -> vector<74x32xf32>
    %136 = vector.extract_strided_slice %131 {offsets = [5, 0], sizes = [74, 32], strides = [1, 1]} : vector<84x32xf32> to vector<74x32xf32>
    %c2_82 = arith.constant 2 : index
    %c32_83 = arith.constant 32 : index
    %c0_84 = arith.constant 0 : index
    %137 = vector.load %arg5[%c2_82, %c32_83, %c0_84] : memref<3x96x32xf32, #tpu.memory_space<vmem>>, vector<1x32x32xf32>
    %138 = vector.shape_cast %137 : vector<1x32x32xf32> to vector<32x32xf32>
    %cst_85 = arith.constant dense<0.000000e+00> : vector<74x32xf32>
    %139 = tpu.matmul %136, %138, %cst_85 {dimension_numbers = #tpu.dot_dimension_numbers<[1], [0], [0], [1], [0, 0, 1, 1], [], []>} : vector<74x32xf32>, vector<32x32xf32>, vector<74x32xf32> -> vector<74x32xf32>
    %140 = arith.addf %135, %139 : vector<74x32xf32>
    %141 = vector.extract_strided_slice %131 {offsets = [10, 0], sizes = [74, 32], strides = [1, 1]} : vector<84x32xf32> to vector<74x32xf32>
    %c2_86 = arith.constant 2 : index
    %c64_87 = arith.constant 64 : index
    %c0_88 = arith.constant 0 : index
    %142 = vector.load %arg5[%c2_86, %c64_87, %c0_88] : memref<3x96x32xf32, #tpu.memory_space<vmem>>, vector<1x32x32xf32>
    %143 = vector.shape_cast %142 : vector<1x32x32xf32> to vector<32x32xf32>
    %cst_89 = arith.constant dense<0.000000e+00> : vector<74x32xf32>
    %144 = tpu.matmul %141, %143, %cst_89 {dimension_numbers = #tpu.dot_dimension_numbers<[1], [0], [0], [1], [0, 0, 1, 1], [], []>} : vector<74x32xf32>, vector<32x32xf32>, vector<74x32xf32> -> vector<74x32xf32>
    %145 = arith.addf %140, %144 : vector<74x32xf32>
    %c2_90 = arith.constant 2 : index
    %c0_91 = arith.constant 0 : index
    %c0_92 = arith.constant 0 : index
    %146 = vector.load %arg6[%c2_90, %c0_91, %c0_92] : memref<3x1x32xf32, #tpu.memory_space<vmem>>, vector<1x1x32xf32>
    %147 = vector.shape_cast %146 : vector<1x1x32xf32> to vector<1x32xf32>
    %148 = vector.broadcast %147 : vector<1x32xf32> to vector<74x32xf32>
    %149 = arith.addf %145, %148 : vector<74x32xf32>
    %150 = vector.extract_strided_slice %16 {offsets = [11, 0], sizes = [74, 32], strides = [1, 1]} : vector<96x32xi1> to vector<74x32xi1>
    %cst_93 = arith.constant 0.000000e+00 : f32
    %151 = vector.broadcast %cst_93 : f32 to vector<74x32xf32>
    %152 = arith.select %150, %149, %151 : vector<74x32xi1>, vector<74x32xf32>
    %cst_94 = arith.constant 0.000000e+00 : f32
    %153 = vector.broadcast %cst_94 : f32 to vector<74x32xf32>
    %154 = arith.cmpf oge, %152, %153 : vector<74x32xf32>
    %cst_95 = arith.constant 1.000000e-01 : f32
    %155 = vector.broadcast %cst_95 : f32 to vector<74x32xf32>
    %156 = arith.mulf %155, %152 : vector<74x32xf32>
    %157 = arith.select %154, %152, %156 : vector<74x32xi1>, vector<74x32xf32>
    %158 = vector.extract_strided_slice %157 {offsets = [0, 0], sizes = [72, 32], strides = [1, 1]} : vector<74x32xf32> to vector<72x32xf32>
    %c2_96 = arith.constant 2 : index
    %c0_97 = arith.constant 0 : index
    %c0_98 = arith.constant 0 : index
    %159 = vector.load %arg7[%c2_96, %c0_97, %c0_98] : memref<3x96x32xf32, #tpu.memory_space<vmem>>, vector<1x32x32xf32>
    %160 = vector.shape_cast %159 : vector<1x32x32xf32> to vector<32x32xf32>
    %cst_99 = arith.constant dense<0.000000e+00> : vector<72x32xf32>
    %161 = tpu.matmul %158, %160, %cst_99 {dimension_numbers = #tpu.dot_dimension_numbers<[1], [0], [0], [1], [0, 0, 1, 1], [], []>} : vector<72x32xf32>, vector<32x32xf32>, vector<72x32xf32> -> vector<72x32xf32>
    %162 = vector.extract_strided_slice %157 {offsets = [1, 0], sizes = [72, 32], strides = [1, 1]} : vector<74x32xf32> to vector<72x32xf32>
    %c2_100 = arith.constant 2 : index
    %c32_101 = arith.constant 32 : index
    %c0_102 = arith.constant 0 : index
    %163 = vector.load %arg7[%c2_100, %c32_101, %c0_102] : memref<3x96x32xf32, #tpu.memory_space<vmem>>, vector<1x32x32xf32>
    %164 = vector.shape_cast %163 : vector<1x32x32xf32> to vector<32x32xf32>
    %cst_103 = arith.constant dense<0.000000e+00> : vector<72x32xf32>
    %165 = tpu.matmul %162, %164, %cst_103 {dimension_numbers = #tpu.dot_dimension_numbers<[1], [0], [0], [1], [0, 0, 1, 1], [], []>} : vector<72x32xf32>, vector<32x32xf32>, vector<72x32xf32> -> vector<72x32xf32>
    %166 = arith.addf %161, %165 : vector<72x32xf32>
    %167 = vector.extract_strided_slice %157 {offsets = [2, 0], sizes = [72, 32], strides = [1, 1]} : vector<74x32xf32> to vector<72x32xf32>
    %c2_104 = arith.constant 2 : index
    %c64_105 = arith.constant 64 : index
    %c0_106 = arith.constant 0 : index
    %168 = vector.load %arg7[%c2_104, %c64_105, %c0_106] : memref<3x96x32xf32, #tpu.memory_space<vmem>>, vector<1x32x32xf32>
    %169 = vector.shape_cast %168 : vector<1x32x32xf32> to vector<32x32xf32>
    %cst_107 = arith.constant dense<0.000000e+00> : vector<72x32xf32>
    %170 = tpu.matmul %167, %169, %cst_107 {dimension_numbers = #tpu.dot_dimension_numbers<[1], [0], [0], [1], [0, 0, 1, 1], [], []>} : vector<72x32xf32>, vector<32x32xf32>, vector<72x32xf32> -> vector<72x32xf32>
    %171 = arith.addf %166, %170 : vector<72x32xf32>
    %c2_108 = arith.constant 2 : index
    %c0_109 = arith.constant 0 : index
    %c0_110 = arith.constant 0 : index
    %172 = vector.load %arg8[%c2_108, %c0_109, %c0_110] : memref<3x1x32xf32, #tpu.memory_space<vmem>>, vector<1x1x32xf32>
    %173 = vector.shape_cast %172 : vector<1x1x32xf32> to vector<1x32xf32>
    %174 = vector.broadcast %173 : vector<1x32xf32> to vector<72x32xf32>
    %175 = arith.addf %171, %174 : vector<72x32xf32>
    %176 = vector.extract_strided_slice %126 {offsets = [6, 0], sizes = [72, 32], strides = [1, 1]} : vector<84x32xf32> to vector<72x32xf32>
    %177 = arith.addf %175, %176 : vector<72x32xf32>
    %178 = vector.extract_strided_slice %16 {offsets = [12, 0], sizes = [72, 32], strides = [1, 1]} : vector<96x32xi1> to vector<72x32xi1>
    %cst_111 = arith.constant 0.000000e+00 : f32
    %179 = vector.broadcast %cst_111 : f32 to vector<72x32xf32>
    %180 = arith.select %178, %177, %179 : vector<72x32xi1>, vector<72x32xf32>
    %181 = vector.extract_strided_slice %180 {offsets = [4, 0], sizes = [64, 32], strides = [1, 1]} : vector<72x32xf32> to vector<64x32xf32>
    %c0_112 = arith.constant 0 : index
    %c0_113 = arith.constant 0 : index
    %c0_114 = arith.constant 0 : index
    %182 = vector.load %arg9[%c0_112, %c0_113, %c0_114] : memref<1x64x32xf32, #tpu.memory_space<vmem>>, vector<1x64x32xf32>
    %183 = vector.shape_cast %182 : vector<1x64x32xf32> to vector<64x32xf32>
    %184 = vector.shape_cast %181 : vector<64x32xf32> to vector<1x64x32xf32>
    tpu.vector_store %arg9[%c0_112, %c0_113, %c0_114], %184 {strides = array<i32>} : memref<1x64x32xf32, #tpu.memory_space<vmem>>, vector<1x64x32xf32>,
    return
  }
  func.func @transform_0(%arg0: i32, %arg1: i32) -> (i32, i32, i32) {
    %c0_i32 = arith.constant 0 : i32
    %c0_i32_0 = arith.constant 0 : i32
    return %arg0, %arg1, %c0_i32 : i32, i32, i32
  }
  func.func @transform_1(%arg0: i32, %arg1: i32) -> (i32, i32, i32) {
    %c4_i32 = arith.constant 4 : i32
    %0 = arith.muli %arg1, %c4_i32 : i32
    %c1_i32 = arith.constant 1 : i32
    %1 = arith.subi %0, %c1_i32 : i32
    %c0_i32 = arith.constant 0 : i32
    %2 = arith.maxsi %1, %c0_i32 : i32
    %c0_i32_0 = arith.constant 0 : i32
    %c0_i32_1 = arith.constant 0 : i32
    return %arg0, %2, %c0_i32_0 : i32, i32, i32
  }
  func.func @transform_2(%arg0: i32, %arg1: i32) -> (i32, i32, i32) {
    %c1_i32 = arith.constant 1 : i32
    %0 = arith.addi %arg1, %c1_i32 : i32
    %c4_i32 = arith.constant 4 : i32
    %1 = arith.muli %0, %c4_i32 : i32
    %c12_i32 = arith.constant 12 : i32
    %2 = arith.minsi %1, %c12_i32 : i32
    %c0_i32 = arith.constant 0 : i32
    %c0_i32_0 = arith.constant 0 : i32
    return %arg0, %2, %c0_i32 : i32, i32, i32
  }
  func.func @transform_3(%arg0: i32, %arg1: i32) -> (i32, i32, i32) {
    %c0_i32 = arith.constant 0 : i32
    %c0_i32_0 = arith.constant 0 : i32
    %c0_i32_1 = arith.constant 0 : i32
    %c0_i32_2 = arith.constant 0 : i32
    return %c0_i32, %c0_i32_0, %c0_i32_1 : i32, i32, i32
  }
  func.func @transform_4(%arg0: i32, %arg1: i32) -> (i32, i32, i32) {
    %c0_i32 = arith.constant 0 : i32
    %c0_i32_0 = arith.constant 0 : i32
    %c0_i32_1 = arith.constant 0 : i32
    %c0_i32_2 = arith.constant 0 : i32
    return %c0_i32, %c0_i32_0, %c0_i32_1 : i32, i32, i32
  }
  func.func @transform_5(%arg0: i32, %arg1: i32) -> (i32, i32, i32) {
    %c0_i32 = arith.constant 0 : i32
    %c0_i32_0 = arith.constant 0 : i32
    %c0_i32_1 = arith.constant 0 : i32
    %c0_i32_2 = arith.constant 0 : i32
    return %c0_i32, %c0_i32_0, %c0_i32_1 : i32, i32, i32
  }
  func.func @transform_6(%arg0: i32, %arg1: i32) -> (i32, i32, i32) {
    %c0_i32 = arith.constant 0 : i32
    %c0_i32_0 = arith.constant 0 : i32
    %c0_i32_1 = arith.constant 0 : i32
    %c0_i32_2 = arith.constant 0 : i32
    return %c0_i32, %c0_i32_0, %c0_i32_1 : i32, i32, i32
  }
  func.func @transform_7(%arg0: i32, %arg1: i32) -> (i32, i32, i32) {
    %c0_i32 = arith.constant 0 : i32
    %c0_i32_0 = arith.constant 0 : i32
    return %arg0, %arg1, %c0_i32 : i32, i32, i32
  }
}

</mosaic_0001>

<llo_original>
// kernel: tpu_custom_call.1
$region0: #{tpu_custom_call.1}
  #allocation0 [shape = 'u32[]', space=smem, size = 0x4, offset = 0x4, fixed_abs, tag = 'smem constant byte address 0x4 - core index']
  #allocation1 [shape = 'u32[72,128]{1,0:T(1,128)}', space=vmem, size = 0x9000, scoped, tag = 'internal scratch']
  %s0 = inlined_call_operand.vmem [shape: f32[2,200,32], index: 0, kind: input, shape index: {}]
  %s1 = inlined_call_operand.vmem [shape: f32[2,200,32], index: 1, kind: input, shape index: {}]
  %s2 = inlined_call_operand.vmem [shape: f32[2,200,32], index: 2, kind: input, shape index: {}]
  %s3 = inlined_call_operand.vmem [shape: f32[3,96,32], index: 3, kind: input, shape index: {}]
  %s4 = inlined_call_operand.vmem [shape: f32[3,1,32], index: 4, kind: input, shape index: {}]
  %s5 = inlined_call_operand.vmem [shape: f32[3,96,32], index: 5, kind: input, shape index: {}]
  %s6 = inlined_call_operand.vmem [shape: f32[3,1,32], index: 6, kind: input, shape index: {}]
  %s7 = inlined_call_operand.vmem [shape: f32[2,200,32], index: 7, kind: output, shape index: {}]
  %s8 = sld [smem:[#allocation0]]
  $region109: #{tpu_custom_call.1} parent=0
    _
  %s10 = ssub.s32 1, %s8
  %s11 = scalar_select 0, %s10, %s8
  $region1: #{tpu_custom_call.1} parent=0
    #allocation2 [shape = 'u8[65536]{0}', space=vmem, size = 0x10000, scoped, tag = 'output window, operand 0']
    loop: start=0, step=1, limit=10
    $region2: #{tpu_custom_call.1} parent=1 // loop_pre_header
      _
    $region3: #{tpu_custom_call.1} parent=1 // loop_header
      %s13 = sphi 0, %s17
      %p14 = scmp.ge.s32.totalorder %s13, 10
      %s20 = sphi 0, %s32
      %s21 = sphi 0, %s28
      %s22 = sphi 0, %s20
      %s23 = sphi 0, %s21
      %s24 = sphi 0, %s22
      %s25 = sphi 0, %s23
      %s37 = sphi 0, %s39
      %s40 = sphi 0, %s37
      %s41 = sphi 0, %s40
      %s57 = sphi 0, %s41
      %s73 = sphi 0, %s75
      %s76 = sphi 0, %s73
      %s77 = sphi 0, %s76
      %s93 = sphi 0, %s77
      %s109 = sphi 0, %s111
      %s112 = sphi 0, %s109
      %s113 = sphi 0, %s112
      %s129 = sphi 0, %s113
      %s133 = sphi 0, %s133
      %s135 = sphi 0, %s133
      %s136 = sphi 0, %s135
      %s150 = sphi 0, %s136
      %s154 = sphi 0, %s154
      %s156 = sphi 0, %s154
      %s157 = sphi 0, %s156
      %s171 = sphi 0, %s157
      %s175 = sphi 0, %s175
      %s177 = sphi 0, %s175
      %s178 = sphi 0, %s177
      %s192 = sphi 0, %s178
      %s196 = sphi 0, %s196
      %s198 = sphi 0, %s196
      %s199 = sphi 0, %s198
      %s213 = sphi 0, %s199
      %s221 = sphi 0, %s223
      %s224 = sphi 0, %s221
      %s225 = sphi 0, %s224
      %s241 = sphi 0, %s225
    $region4: #{tpu_custom_call.1} parent=1 // loop_header_branch
      %16 = sbr.rel (%p14) target = $region8
    $region5: #{tpu_custom_call.1} parent=1 // loop_body
      %s18 = ssub.s32 %s13, 1
      %s19 = ssub.s32 %s13, 2
      %s26 = sadd.s32 1, %s21
      %p27 = scmp.ge.s32.totalorder %s26, 4
      %s28 = scalar_select %p27, 0, %s26
      %s29 = sadd.s32 1, %s20
      %s30 = scalar_select %p27, %s29, %s20
      %p31 = scmp.ge.s32.totalorder %s30, 2
      %s32 = scalar_select %p31, 0, %s30
      %s33 = ssub.s32 %s20, %s32
      %s34 = ssub.s32 %s21, %s28
      %s35 = sor.u32 %s33, %s34
      %p36 = scmp.eq.s32.totalorder %s35, 0
      %s38 = sadd.s32 %s37, 1
      %s39 = scalar_select %p36, %s37, %s38
      %p42 = pneg %p36
      %p43 = scmp.eq.s32.totalorder %s13, 7
      %p44 = por %p42, %p43
      %p45 = scmp.ne.s32.totalorder %s37, %s40
      %p46 = scmp.eq.s32.totalorder %s13, 0
      %p47 = por %p45, %p46
      %p48 = scmp.ne.s32.totalorder %s37, %s40
      %p49 = scmp.eq.s32.totalorder %s18, 7
      %p50 = por %p48, %p49
      %p51 = scmp.ne.s32.totalorder %s40, %s41
      %p52 = scmp.eq.s32.totalorder %s18, 0
      %p53 = por %p51, %p52
      %p54 = scmp.ne.s32.totalorder %s40, %s41
      %p55 = scmp.eq.s32.totalorder %s19, 7
      %p56 = por %p54, %p55
      %p58 = scmp.ne.s32.totalorder %s41, %s57
      %p59 = scmp.eq.s32.totalorder %s19, 0
      %p60 = por %p58, %p59
      %s61 = smul.u32 %s21, 4
      %s62 = ssub.s32 %s61, 1
      %p63 = scmp.gt.s32.totalorder %s62, 0
      %s64 = scalar_select %p63, %s62, 0
      %s65 = smul.u32 %s28, 4
      %s66 = ssub.s32 %s65, 1
      %p67 = scmp.gt.s32.totalorder %s66, 0
      %s68 = scalar_select %p67, %s66, 0
      %s69 = ssub.s32 %s20, %s32
      %s70 = ssub.s32 %s64, %s68
      %s71 = sor.u32 %s69, %s70
      %p72 = scmp.eq.s32.totalorder %s71, 0
      %s74 = sadd.s32 %s73, 1
      %s75 = scalar_select %p72, %s73, %s74
      %p78 = pneg %p72
      %p79 = scmp.eq.s32.totalorder %s13, 7
      %p80 = por %p78, %p79
      %p81 = scmp.ne.s32.totalorder %s73, %s76
      %p82 = scmp.eq.s32.totalorder %s13, 0
      %p83 = por %p81, %p82
      %p84 = scmp.ne.s32.totalorder %s73, %s76
      %p85 = scmp.eq.s32.totalorder %s18, 7
      %p86 = por %p84, %p85
      %p87 = scmp.ne.s32.totalorder %s76, %s77
      %p88 = scmp.eq.s32.totalorder %s18, 0
      %p89 = por %p87, %p88
      %p90 = scmp.ne.s32.totalorder %s76, %s77
      %p91 = scmp.eq.s32.totalorder %s19, 7
      %p92 = por %p90, %p91
      %p94 = scmp.ne.s32.totalorder %s77, %s93
      %p95 = scmp.eq.s32.totalorder %s19, 0
      %p96 = por %p94, %p95
      %s97 = sadd.s32 %s21, 1
      %s98 = smul.u32 %s97, 4
      %p99 = scmp.lt.s32.totalorder %s98, 12
      %s100 = scalar_select %p99, %s98, 12
      %s101 = sadd.s32 %s28, 1
      %s102 = smul.u32 %s101, 4
      %p103 = scmp.lt.s32.totalorder %s102, 12
      %s104 = scalar_select %p103, %s102, 12
      %s105 = ssub.s32 %s20, %s32
      %s106 = ssub.s32 %s100, %s104
      %s107 = sor.u32 %s105, %s106
      %p108 = scmp.eq.s32.totalorder %s107, 0
      %s110 = sadd.s32 %s109, 1
      %s111 = scalar_select %p108, %s109, %s110
      %p114 = pneg %p108
      %p115 = scmp.eq.s32.totalorder %s13, 7
      %p116 = por %p114, %p115
      %p117 = scmp.ne.s32.totalorder %s109, %s112
      %p118 = scmp.eq.s32.totalorder %s13, 0
      %p119 = por %p117, %p118
      %p120 = scmp.ne.s32.totalorder %s109, %s112
      %p121 = scmp.eq.s32.totalorder %s18, 7
      %p122 = por %p120, %p121
      %p123 = scmp.ne.s32.totalorder %s112, %s113
      %p124 = scmp.eq.s32.totalorder %s18, 0
      %p125 = por %p123, %p124
      %p126 = scmp.ne.s32.totalorder %s112, %s113
      %p127 = scmp.eq.s32.totalorder %s19, 7
      %p128 = por %p126, %p127
      %p130 = scmp.ne.s32.totalorder %s113, %s129
      %p131 = scmp.eq.s32.totalorder %s19, 0
      %p132 = por %p130, %p131
      %s134 = sadd.s32 %s133, 1
      %p137 = scmp.eq.s32.totalorder %s13, 7
      %p138 = scmp.ne.s32.totalorder %s133, %s135
      %p139 = scmp.eq.s32.totalorder %s13, 0
      %p140 = por %p138, %p139
      %p141 = scmp.ne.s32.totalorder %s133, %s135
      %p142 = scmp.eq.s32.totalorder %s18, 7
      %p143 = por %p141, %p142
      %p144 = scmp.ne.s32.totalorder %s135, %s136
      %p145 = scmp.eq.s32.totalorder %s18, 0
      %p146 = por %p144, %p145
      %p147 = scmp.ne.s32.totalorder %s135, %s136
      %p148 = scmp.eq.s32.totalorder %s19, 7
      %p149 = por %p147, %p148
      %p151 = scmp.ne.s32.totalorder %s136, %s150
      %p152 = scmp.eq.s32.totalorder %s19, 0
      %p153 = por %p151, %p152
      %s155 = sadd.s32 %s154, 1
      %p158 = scmp.eq.s32.totalorder %s13, 7
      %p159 = scmp.ne.s32.totalorder %s154, %s156
      %p160 = scmp.eq.s32.totalorder %s13, 0
      %p161 = por %p159, %p160
      %p162 = scmp.ne.s32.totalorder %s154, %s156
      %p163 = scmp.eq.s32.totalorder %s18, 7
      %p164 = por %p162, %p163
      %p165 = scmp.ne.s32.totalorder %s156, %s157
      %p166 = scmp.eq.s32.totalorder %s18, 0
      %p167 = por %p165, %p166
      %p168 = scmp.ne.s32.totalorder %s156, %s157
      %p169 = scmp.eq.s32.totalorder %s19, 7
      %p170 = por %p168, %p169
      %p172 = scmp.ne.s32.totalorder %s157, %s171
      %p173 = scmp.eq.s32.totalorder %s19, 0
      %p174 = por %p172, %p173
      %s176 = sadd.s32 %s175, 1
      %p179 = scmp.eq.s32.totalorder %s13, 7
      %p180 = scmp.ne.s32.totalorder %s175, %s177
      %p181 = scmp.eq.s32.totalorder %s13, 0
      %p182 = por %p180, %p181
      %p183 = scmp.ne.s32.totalorder %s175, %s177
      %p184 = scmp.eq.s32.totalorder %s18, 7
      %p185 = por %p183, %p184
      %p186 = scmp.ne.s32.totalorder %s177, %s178
      %p187 = scmp.eq.s32.totalorder %s18, 0
      %p188 = por %p186, %p187
      %p189 = scmp.ne.s32.totalorder %s177, %s178
      %p190 = scmp.eq.s32.totalorder %s19, 7
      %p191 = por %p189, %p190
      %p193 = scmp.ne.s32.totalorder %s178, %s192
      %p194 = scmp.eq.s32.totalorder %s19, 0
      %p195 = por %p193, %p194
      %s197 = sadd.s32 %s196, 1
      %p200 = scmp.eq.s32.totalorder %s13, 7
      %p201 = scmp.ne.s32.totalorder %s196, %s198
      %p202 = scmp.eq.s32.totalorder %s13, 0
      %p203 = por %p201, %p202
      %p204 = scmp.ne.s32.totalorder %s196, %s198
      %p205 = scmp.eq.s32.totalorder %s18, 7
      %p206 = por %p204, %p205
      %p207 = scmp.ne.s32.totalorder %s198, %s199
      %p208 = scmp.eq.s32.totalorder %s18, 0
      %p209 = por %p207, %p208
      %p210 = scmp.ne.s32.totalorder %s198, %s199
      %p211 = scmp.eq.s32.totalorder %s19, 7
      %p212 = por %p210, %p211
      %p214 = scmp.ne.s32.totalorder %s199, %s213
      %p215 = scmp.eq.s32.totalorder %s19, 0
      %p216 = por %p214, %p215
      %s217 = ssub.s32 %s20, %s32
      %s218 = ssub.s32 %s21, %s28
      %s219 = sor.u32 %s217, %s218
      %p220 = scmp.eq.s32.totalorder %s219, 0
      %s222 = sadd.s32 %s221, 1
      %s223 = scalar_select %p220, %s221, %s222
      %p226 = pneg %p220
      %p227 = scmp.eq.s32.totalorder %s13, 7
      %p228 = por %p226, %p227
      %p229 = scmp.ne.s32.totalorder %s221, %s224
      %p230 = scmp.eq.s32.totalorder %s13, 0
      %p231 = por %p229, %p230
      %p232 = scmp.ne.s32.totalorder %s221, %s224
      %p233 = scmp.eq.s32.totalorder %s18, 7
      %p234 = por %p232, %p233
      %p235 = scmp.ne.s32.totalorder %s224, %s225
      %p236 = scmp.eq.s32.totalorder %s18, 0
      %p237 = por %p235, %p236
      %p238 = scmp.ne.s32.totalorder %s224, %s225
      %p239 = scmp.eq.s32.totalorder %s19, 7
      %p240 = por %p238, %p239
      %p242 = scmp.ne.s32.totalorder %s225, %s241
      %p243 = scmp.eq.s32.totalorder %s19, 0
      %p244 = por %p242, %p243
      %p245 = scmp.le.s32.totalorder 1, %s13
      %p246 = scmp.lt.s32.totalorder %s13, 9
      %p247 = pnand %p245, %p246
      %p248 = pneg %p247
      // Predicated region
      $region9: #{tpu_custom_call.1} parent=5 // pred_check
        _
      $region10: #{tpu_custom_call.1} parent=5 // pred_check_branch
        %250 = sbr.rel (%p247) target = $region12
      $region11: #{tpu_custom_call.1} parent=5 // pred_region
        %s251 = ssub.s32 %s13, 1
        // Predicated region
        $region13: #{tpu_custom_call.1} parent=11 // pred_check
          %p252 = pneg %p146
        $region14: #{tpu_custom_call.1} parent=11 // pred_check_branch
          %254 = sbr.rel (%p252) target = $region16
        $region15: #{tpu_custom_call.1} parent=11 // pred_region
          _
        $region16: #{tpu_custom_call.1} parent=11 // pred_fallthru
          _
        // Predicated region
        $region17: #{tpu_custom_call.1} parent=11 // pred_check
          %p255 = pneg %p167
        $region18: #{tpu_custom_call.1} parent=11 // pred_check_branch
          %257 = sbr.rel (%p255) target = $region20
        $region19: #{tpu_custom_call.1} parent=11 // pred_region
          _
        $region20: #{tpu_custom_call.1} parent=11 // pred_fallthru
          _
        // Predicated region
        $region21: #{tpu_custom_call.1} parent=11 // pred_check
          %p258 = pneg %p188
        $region22: #{tpu_custom_call.1} parent=11 // pred_check_branch
          %260 = sbr.rel (%p258) target = $region24
        $region23: #{tpu_custom_call.1} parent=11 // pred_region
          _
        $region24: #{tpu_custom_call.1} parent=11 // pred_fallthru
          _
        // Predicated region
        $region25: #{tpu_custom_call.1} parent=11 // pred_check
          %p261 = pneg %p209
        $region26: #{tpu_custom_call.1} parent=11 // pred_check_branch
          %263 = sbr.rel (%p261) target = $region28
        $region27: #{tpu_custom_call.1} parent=11 // pred_region
          _
        $region28: #{tpu_custom_call.1} parent=11 // pred_fallthru
          _
      $region12: #{tpu_custom_call.1} parent=5 // pred_fallthru
        _
      %p264 = scmp.lt.s32.totalorder %s13, 8
      // Predicated region
      $region29: #{tpu_custom_call.1} parent=5 // pred_check
        %p265 = pneg %p264
      $region30: #{tpu_custom_call.1} parent=5 // pred_check_branch
        %267 = sbr.rel (%p265) target = $region32
      $region31: #{tpu_custom_call.1} parent=5 // pred_region
        // Predicated region
        $region33: #{tpu_custom_call.1} parent=31 // pred_check
          %p268 = pneg %p47
        $region34: #{tpu_custom_call.1} parent=31 // pred_check_branch
          %270 = sbr.rel (%p268) target = $region36
        $region35: #{tpu_custom_call.1} parent=31 // pred_region
          %s271 = smul.u32 8, %s21
          %s272 = ssub.s32 25, %s271
          %p273 = scmp.lt.s32.totalorder %s272, 8
          %s274 = scalar_select %p273, %s272, 8
          %s275 = smul.u32 8, %s274
          %p276 = scmp.lt.s32.totalorder %s20, 1
          %s277 = scalar_select %p276, %s20, 1
          %p278 = scmp.lt.s32.totalorder %s271, 24
          %s279 = scalar_select %p278, %s271, 24
          %s280 = smul.addr %s277, 25
          %s281 = sadd.s32 %s279, %s280
          %s282 = smul.addr %s281, 8
          %s283 = scalar_lea.vmem %s0, %s282
          %s284 = smul.u32 8, %s21
          %s285 = ssub.s32 25, %s284
          %p286 = scmp.lt.s32.totalorder %s285, 8
          %s287 = scalar_select %p286, %s285, 8
          %s288 = smul.u32 8, %s287
        $region36: #{tpu_custom_call.1} parent=31 // pred_fallthru
          _
        // Predicated region
        $region37: #{tpu_custom_call.1} parent=31 // pred_check
          %p289 = pneg %p83
        $region38: #{tpu_custom_call.1} parent=31 // pred_check_branch
          %291 = sbr.rel (%p289) target = $region40
        $region39: #{tpu_custom_call.1} parent=31 // pred_region
          %s292 = smul.u32 %s21, 4
          %s293 = ssub.s32 %s292, 1
          %p294 = scmp.gt.s32.totalorder %s293, 0
          %s295 = scalar_select %p294, %s293, 0
          %s296 = smul.u32 2, %s295
          %s297 = ssub.s32 25, %s296
          %p298 = scmp.lt.s32.totalorder %s297, 2
          %s299 = scalar_select %p298, %s297, 2
          %s300 = smul.u32 8, %s299
          %p301 = scmp.lt.s32.totalorder %s20, 1
          %s302 = scalar_select %p301, %s20, 1
          %p303 = scmp.lt.s32.totalorder %s296, 24
          %s304 = scalar_select %p303, %s296, 24
          %s305 = smul.addr %s302, 25
          %s306 = sadd.s32 %s304, %s305
          %s307 = smul.addr %s306, 8
          %s308 = scalar_lea.vmem %s1, %s307
          %s309 = smul.u32 %s21, 4
          %s310 = ssub.s32 %s309, 1
          %p311 = scmp.gt.s32.totalorder %s310, 0
          %s312 = scalar_select %p311, %s310, 0
          %s313 = smul.u32 2, %s312
          %s314 = ssub.s32 25, %s313
          %p315 = scmp.lt.s32.totalorder %s314, 2
          %s316 = scalar_select %p315, %s314, 2
          %s317 = smul.u32 8, %s316
        $region40: #{tpu_custom_call.1} parent=31 // pred_fallthru
          _
        // Predicated region
        $region41: #{tpu_custom_call.1} parent=31 // pred_check
          %p318 = pneg %p119
        $region42: #{tpu_custom_call.1} parent=31 // pred_check_branch
          %320 = sbr.rel (%p318) target = $region44
        $region43: #{tpu_custom_call.1} parent=31 // pred_region
          %s321 = sadd.s32 %s21, 1
          %s322 = smul.u32 %s321, 4
          %p323 = scmp.lt.s32.totalorder %s322, 12
          %s324 = scalar_select %p323, %s322, 12
          %s325 = smul.u32 2, %s324
          %s326 = ssub.s32 25, %s325
          %p327 = scmp.lt.s32.totalorder %s326, 2
          %s328 = scalar_select %p327, %s326, 2
          %s329 = smul.u32 8, %s328
          %p330 = scmp.lt.s32.totalorder %s20, 1
          %s331 = scalar_select %p330, %s20, 1
          %p332 = scmp.lt.s32.totalorder %s325, 24
          %s333 = scalar_select %p332, %s325, 24
          %s334 = smul.addr %s331, 25
          %s335 = sadd.s32 %s333, %s334
          %s336 = smul.addr %s335, 8
          %s337 = scalar_lea.vmem %s2, %s336
          %s338 = sadd.s32 %s21, 1
          %s339 = smul.u32 %s338, 4
          %p340 = scmp.lt.s32.totalorder %s339, 12
          %s341 = scalar_select %p340, %s339, 12
          %s342 = smul.u32 2, %s341
          %s343 = ssub.s32 25, %s342
          %p344 = scmp.lt.s32.totalorder %s343, 2
          %s345 = scalar_select %p344, %s343, 2
          %s346 = smul.u32 8, %s345
        $region44: #{tpu_custom_call.1} parent=31 // pred_fallthru
          _
      $region32: #{tpu_custom_call.1} parent=5 // pred_fallthru
        _
      %p347 = scmp.le.s32.totalorder 1, %s13
      %p348 = scmp.lt.s32.totalorder %s13, 9
      %p349 = pnand %p347, %p348
      %p350 = pneg %p349
      // Predicated region
      $region45: #{tpu_custom_call.1} parent=5 // pred_check
        _
      $region46: #{tpu_custom_call.1} parent=5 // pred_check_branch
        %352 = sbr.rel (%p349) target = $region48
      $region47: #{tpu_custom_call.1} parent=5 // pred_region
        %s353 = ssub.s32 %s13, 1
        %s354 = smul.u32 8, %s23
        %s355 = ssub.s32 25, %s354
        %p356 = scmp.lt.s32.totalorder %s355, 8
        %s357 = scalar_select %p356, %s355, 8
        %s358 = smul.u32 8, %s357
        %p359 = scmp.lt.s32.totalorder %s22, 1
        %s360 = scalar_select %p359, %s22, 1
        %p361 = scmp.lt.s32.totalorder %s354, 24
        %s362 = scalar_select %p361, %s354, 24
        %s363 = smul.addr %s360, 25
        %s364 = sadd.s32 %s362, %s363
        %s365 = smul.addr %s364, 8
        %s366 = scalar_lea.vmem %s0, %s365
        %p367 = pneg %p53
        %p368 = pneg %p50
        %s369 = smul.u32 %s23, 4
        %s370 = ssub.s32 %s369, 1
        %p371 = scmp.gt.s32.totalorder %s370, 0
        %s372 = scalar_select %p371, %s370, 0
        %s373 = smul.u32 2, %s372
        %s374 = ssub.s32 25, %s373
        %p375 = scmp.lt.s32.totalorder %s374, 2
        %s376 = scalar_select %p375, %s374, 2
        %s377 = smul.u32 8, %s376
        %p378 = scmp.lt.s32.totalorder %s22, 1
        %s379 = scalar_select %p378, %s22, 1
        %p380 = scmp.lt.s32.totalorder %s373, 24
        %s381 = scalar_select %p380, %s373, 24
        %s382 = smul.addr %s379, 25
        %s383 = sadd.s32 %s381, %s382
        %s384 = smul.addr %s383, 8
        %s385 = scalar_lea.vmem %s1, %s384
        %p386 = pneg %p89
        %p387 = pneg %p86
        %s388 = sadd.s32 %s23, 1
        %s389 = smul.u32 %s388, 4
        %p390 = scmp.lt.s32.totalorder %s389, 12
        %s391 = scalar_select %p390, %s389, 12
        %s392 = smul.u32 2, %s391
        %s393 = ssub.s32 25, %s392
        %p394 = scmp.lt.s32.totalorder %s393, 2
        %s395 = scalar_select %p394, %s393, 2
        %s396 = smul.u32 8, %s395
        %p397 = scmp.lt.s32.totalorder %s22, 1
        %s398 = scalar_select %p397, %s22, 1
        %p399 = scmp.lt.s32.totalorder %s392, 24
        %s400 = scalar_select %p399, %s392, 24
        %s401 = smul.addr %s398, 25
        %s402 = sadd.s32 %s400, %s401
        %s403 = smul.addr %s402, 8
        %s404 = scalar_lea.vmem %s2, %s403
        %p405 = pneg %p125
        %p406 = pneg %p122
        %p407 = pneg %p146
        %p408 = pneg %p143
        %p409 = pneg %p167
        %p410 = pneg %p164
        %p411 = pneg %p188
        %p412 = pneg %p185
        %p413 = pneg %p209
        %p414 = pneg %p206
        %p415 = pneg %p237
        %p416 = pneg %p234
        %s417 = sand.u32 %s224, 1
        %s418 = sand.u32 %s224, 1
        %s419 = smul.addr %s418, 64
        %s420 = scalar_lea.vmem [#allocation2], %s419
        %s421 = smul.u32 8, %s23
        %s422 = ssub.s32 25, %s421
        %p423 = scmp.lt.s32.totalorder %s422, 8
        %s424 = scalar_select %p423, %s422, 8
        %s425 = smul.u32 8, %s424
        %p426 = scmp.lt.s32.totalorder %s22, 1
        %s427 = scalar_select %p426, %s22, 1
        %p428 = scmp.lt.s32.totalorder %s421, 24
        %s429 = scalar_select %p428, %s421, 24
        %s430 = smul.addr %s427, 25
        %s431 = sadd.s32 %s429, %s430
        %s432 = smul.addr %s431, 8
        %s433 = scalar_lea.vmem %s0, %s432
        %s434 = smul.u32 8, %s23
        %s435 = ssub.s32 25, %s434
        %p436 = scmp.lt.s32.totalorder %s435, 8
        %s437 = scalar_select %p436, %s435, 8
        %s438 = smul.u32 8, %s437
        %s439 = smul.u32 %s23, 4
        %s440 = ssub.s32 %s439, 1
        %p441 = scmp.gt.s32.totalorder %s440, 0
        %s442 = scalar_select %p441, %s440, 0
        %s443 = smul.u32 2, %s442
        %s444 = ssub.s32 25, %s443
        %p445 = scmp.lt.s32.totalorder %s444, 2
        %s446 = scalar_select %p445, %s444, 2
        %s447 = smul.u32 8, %s446
        %p448 = scmp.lt.s32.totalorder %s22, 1
        %s449 = scalar_select %p448, %s22, 1
        %p450 = scmp.lt.s32.totalorder %s443, 24
        %s451 = scalar_select %p450, %s443, 24
        %s452 = smul.addr %s449, 25
        %s453 = sadd.s32 %s451, %s452
        %s454 = smul.addr %s453, 8
        %s455 = scalar_lea.vmem %s1, %s454
        %s456 = smul.u32 %s23, 4
        %s457 = ssub.s32 %s456, 1
        %p458 = scmp.gt.s32.totalorder %s457, 0
        %s459 = scalar_select %p458, %s457, 0
        %s460 = smul.u32 2, %s459
        %s461 = ssub.s32 25, %s460
        %p462 = scmp.lt.s32.totalorder %s461, 2
        %s463 = scalar_select %p462, %s461, 2
        %s464 = smul.u32 8, %s463
        %s465 = sadd.s32 %s23, 1
        %s466 = smul.u32 %s465, 4
        %p467 = scmp.lt.s32.totalorder %s466, 12
        %s468 = scalar_select %p467, %s466, 12
        %s469 = smul.u32 2, %s468
        %s470 = ssub.s32 25, %s469
        %p471 = scmp.lt.s32.totalorder %s470, 2
        %s472 = scalar_select %p471, %s470, 2
        %s473 = smul.u32 8, %s472
        %p474 = scmp.lt.s32.totalorder %s22, 1
        %s475 = scalar_select %p474, %s22, 1
        %p476 = scmp.lt.s32.totalorder %s469, 24
        %s477 = scalar_select %p476, %s469, 24
        %s478 = smul.addr %s475, 25
        %s479 = sadd.s32 %s477, %s478
        %s480 = smul.addr %s479, 8
        %s481 = scalar_lea.vmem %s2, %s480
        %s482 = sadd.s32 %s23, 1
        %s483 = smul.u32 %s482, 4
        %p484 = scmp.lt.s32.totalorder %s483, 12
        %s485 = scalar_select %p484, %s483, 12
        %s486 = smul.u32 2, %s485
        %s487 = ssub.s32 25, %s486
        %p488 = scmp.lt.s32.totalorder %s487, 2
        %s489 = scalar_select %p488, %s487, 2
        %s490 = smul.u32 8, %s489
        %s491 = smul.u32 8, %s23
        %s492 = ssub.s32 25, %s491
        %p493 = scmp.lt.s32.totalorder %s492, 8
        %s494 = scalar_select %p493, %s492, 8
        %s495 = smul.u32 8, %s494
        %s496 = smul.u32 %s23, 64
        %v497 = vld [vmem:[%s455] sm:$0xff]
        %v498 = vld [vmem:[%s455 + $0x8] sm:$0xff]
        %v499 = vld [vmem:[%s433] sm:$0xff]
        %v500 = vld [vmem:[%s433 + $0x8] sm:$0xff]
        %v501 = vld [vmem:[%s433 + $0x10] sm:$0xff]
        %v502 = vld [vmem:[%s433 + $0x18] sm:$0xff]
        %v503 = vld [vmem:[%s433 + $0x20] sm:$0xff]
        %v504 = vld [vmem:[%s433 + $0x28] sm:$0xff]
        %v505 = vld [vmem:[%s433 + $0x30] sm:$0xff]
        %v506 = vld [vmem:[%s433 + $0x38] sm:$0xff]
        %v507 = vld [vmem:[%s481] sm:$0xff]
        %v508 = vld [vmem:[%s481 + $0x8] sm:$0xff]
        %v509 = vlaneseq
        %v510 = vshrl.u32 %v509, 7
        %v511 = vadd.s32 %v510, 8
        %v512 = vadd.s32 %v510, 16
        %v513 = vadd.s32 %v510, 24
        %v514 = vadd.s32 %v510, 32
        %v515 = vadd.s32 %v510, 40
        %v516 = vadd.s32 %v510, 48
        %v517 = vadd.s32 %v510, 56
        %v518 = vadd.s32 %v510, 64
        %v519 = vadd.s32 %v510, 72
        %v520 = vadd.s32 %v510, 80
        %v521 = vadd.s32 %v510, 88
        %s522 = ssub.s32 %s496, 16
        %v523 = vstv %s522
        %v524 = vadd.s32 %v510, %v523
        %v525 = vadd.s32 %v511, %v523
        %v526 = vadd.s32 %v512, %v523
        %v527 = vadd.s32 %v513, %v523
        %v528 = vadd.s32 %v514, %v523
        %v529 = vadd.s32 %v515, %v523
        %v530 = vadd.s32 %v516, %v523
        %v531 = vadd.s32 %v517, %v523
        %v532 = vadd.s32 %v518, %v523
        %v533 = vadd.s32 %v519, %v523
        %v534 = vadd.s32 %v520, %v523
        %v535 = vadd.s32 %v521, %v523
        %vm536 = vcmp.ge.s32.totalorder %v524, 0
        %vm537 = vcmp.ge.s32.totalorder %v525, 0
        %vm538 = vcmp.ge.s32.totalorder %v526, 0
        %vm539 = vcmp.ge.s32.totalorder %v527, 0
        %vm540 = vcmp.ge.s32.totalorder %v528, 0
        %vm541 = vcmp.ge.s32.totalorder %v529, 0
        %vm542 = vcmp.ge.s32.totalorder %v530, 0
        %vm543 = vcmp.ge.s32.totalorder %v531, 0
        %vm544 = vcmp.ge.s32.totalorder %v532, 0
        %vm545 = vcmp.ge.s32.totalorder %v533, 0
        %vm546 = vcmp.ge.s32.totalorder %v534, 0
        %vm547 = vcmp.ge.s32.totalorder %v535, 0
        %vm548 = vcmp.lt.s32.totalorder %v524, 200
        %vm549 = vcmp.lt.s32.totalorder %v525, 200
        %vm550 = vcmp.lt.s32.totalorder %v526, 200
        %vm551 = vcmp.lt.s32.totalorder %v527, 200
        %vm552 = vcmp.lt.s32.totalorder %v528, 200
        %vm553 = vcmp.lt.s32.totalorder %v529, 200
        %vm554 = vcmp.lt.s32.totalorder %v530, 200
        %vm555 = vcmp.lt.s32.totalorder %v531, 200
        %vm556 = vcmp.lt.s32.totalorder %v532, 200
        %vm557 = vcmp.lt.s32.totalorder %v533, 200
        %vm558 = vcmp.lt.s32.totalorder %v534, 200
        %vm559 = vcmp.lt.s32.totalorder %v535, 200
        %vm560 = vmand %vm536, %vm548
        %vm561 = vmand %vm537, %vm549
        %vm562 = vmand %vm538, %vm550
        %vm563 = vmand %vm539, %vm551
        %vm564 = vmand %vm540, %vm552
        %vm565 = vmand %vm541, %vm553
        %vm566 = vmand %vm542, %vm554
        %vm567 = vmand %vm543, %vm555
        %vm568 = vmand %vm544, %vm556
        %vm569 = vmand %vm545, %vm557
        %vm570 = vmand %vm546, %vm558
        %vm571 = vmand %vm547, %vm559
        %v572 = vsel %vm560, %v497, 0.0
        %v573 = vsel %vm561, %v498, 0.0
        %v574 = vsel %vm562, %v499, 0.0
        %v575 = vsel %vm563, %v500, 0.0
        %v576 = vsel %vm564, %v501, 0.0
        %v577 = vsel %vm565, %v502, 0.0
        %v578 = vsel %vm566, %v503, 0.0
        %v579 = vsel %vm567, %v504, 0.0
        %v580 = vsel %vm568, %v505, 0.0
        %v581 = vsel %vm569, %v506, 0.0
        %v582 = vsel %vm570, %v507, 0.0
        %v583 = vsel %vm571, %v508, 0.0
        %vm584 = vcmp.ge.f32.partialorder %v572, 0.0
        %vm585 = vcmp.ge.f32.partialorder %v573, 0.0
        %vm586 = vcmp.ge.f32.partialorder %v574, 0.0
        %vm587 = vcmp.ge.f32.partialorder %v575, 0.0
        %vm588 = vcmp.ge.f32.partialorder %v576, 0.0
        %vm589 = vcmp.ge.f32.partialorder %v577, 0.0
        %vm590 = vcmp.ge.f32.partialorder %v578, 0.0
        %vm591 = vcmp.ge.f32.partialorder %v579, 0.0
        %vm592 = vcmp.ge.f32.partialorder %v580, 0.0
        %vm593 = vcmp.ge.f32.partialorder %v581, 0.0
        %vm594 = vcmp.ge.f32.partialorder %v582, 0.0
        %vm595 = vcmp.ge.f32.partialorder %v583, 0.0
        %v596 = vmul.f32 %v572, 0.1
        %v597 = vmul.f32 %v573, 0.1
        %v598 = vmul.f32 %v574, 0.1
        %v599 = vmul.f32 %v575, 0.1
        %v600 = vmul.f32 %v576, 0.1
        %v601 = vmul.f32 %v577, 0.1
        %v602 = vmul.f32 %v578, 0.1
        %v603 = vmul.f32 %v579, 0.1
        %v604 = vmul.f32 %v580, 0.1
        %v605 = vmul.f32 %v581, 0.1
        %v606 = vmul.f32 %v582, 0.1
        %v607 = vmul.f32 %v583, 0.1
        %v608 = vsel %vm584, %v572, %v596
        %v609 = vsel %vm585, %v573, %v597
        %v610 = vsel %vm586, %v574, %v598
        %v611 = vsel %vm587, %v575, %v599
        %v612 = vsel %vm588, %v576, %v600
        %v613 = vsel %vm589, %v577, %v601
        %v614 = vsel %vm590, %v578, %v602
        %v615 = vsel %vm591, %v579, %v603
        %v616 = vsel %vm592, %v580, %v604
        %v617 = vsel %vm593, %v581, %v605
        %v618 = vsel %vm594, %v582, %v606
        %v619 = vsel %vm595, %v583, %v607
        %vm632 = vcmask 1046528
        %v633 = vrot.slane %v608, 1
        %v634 = vrot.slane %v609, 1
        %v635 = vsel %vm632, %v633, %v634
        %v636 = vrot.slane %v610, 1
        %v637 = vsel %vm632, %v634, %v636
        %v638 = vrot.slane %v611, 1
        %v639 = vsel %vm632, %v636, %v638
        %v640 = vrot.slane %v612, 1
        %v641 = vsel %vm632, %v638, %v640
        %v642 = vrot.slane %v613, 1
        %v643 = vsel %vm632, %v640, %v642
        %v644 = vrot.slane %v614, 1
        %v645 = vsel %vm632, %v642, %v644
        %v646 = vrot.slane %v615, 1
        %v647 = vsel %vm632, %v644, %v646
        %v648 = vrot.slane %v616, 1
        %v649 = vsel %vm632, %v646, %v648
        %v650 = vrot.slane %v617, 1
        %v651 = vsel %vm632, %v648, %v650
        %v652 = vrot.slane %v618, 1
        %v653 = vsel %vm632, %v650, %v652
        %v654 = vrot.slane %v619, 1
        %v655 = vsel %vm632, %v652, %v654
        %656 = vrot.lane.b32.xlu0 %v635, 32
        %v657 = vpop.permute.xlu0 %656
        %658 = vrot.lane.b32.xlu0 %v637, 32
        %v659 = vpop.permute.xlu0 %658
        %660 = vrot.lane.b32.xlu0 %v639, 32
        %v661 = vpop.permute.xlu0 %660
        %662 = vrot.lane.b32.xlu0 %v641, 32
        %v663 = vpop.permute.xlu0 %662
        %664 = vrot.lane.b32.xlu0 %v643, 32
        %v665 = vpop.permute.xlu0 %664
        %666 = vrot.lane.b32.xlu0 %v645, 32
        %v667 = vpop.permute.xlu0 %666
        %668 = vrot.lane.b32.xlu0 %v647, 32
        %v669 = vpop.permute.xlu0 %668
        %670 = vrot.lane.b32.xlu0 %v649, 32
        %v671 = vpop.permute.xlu0 %670
        %672 = vrot.lane.b32.xlu0 %v651, 32
        %v673 = vpop.permute.xlu0 %672
        %674 = vrot.lane.b32.xlu0 %v653, 32
        %v675 = vpop.permute.xlu0 %674
        %676 = vrot.lane.b32.xlu0 %v655, 32
        %v677 = vpop.permute.xlu0 %676
        %678 = vrot.lane.b32.xlu0 %v654, 32
        %v679 = vpop.permute.xlu0 %678
        %vm692 = vcmask 1045504
        %v693 = vrot.slane %v608, 2
        %v694 = vrot.slane %v609, 2
        %v695 = vsel %vm692, %v693, %v694
        %v696 = vrot.slane %v610, 2
        %v697 = vsel %vm692, %v694, %v696
        %v698 = vrot.slane %v611, 2
        %v699 = vsel %vm692, %v696, %v698
        %v700 = vrot.slane %v612, 2
        %v701 = vsel %vm692, %v698, %v700
        %v702 = vrot.slane %v613, 2
        %v703 = vsel %vm692, %v700, %v702
        %v704 = vrot.slane %v614, 2
        %v705 = vsel %vm692, %v702, %v704
        %v706 = vrot.slane %v615, 2
        %v707 = vsel %vm692, %v704, %v706
        %v708 = vrot.slane %v616, 2
        %v709 = vsel %vm692, %v706, %v708
        %v710 = vrot.slane %v617, 2
        %v711 = vsel %vm692, %v708, %v710
        %v712 = vrot.slane %v618, 2
        %v713 = vsel %vm692, %v710, %v712
        %v714 = vrot.slane %v619, 2
        %v715 = vsel %vm692, %v712, %v714
        %716 = vrot.lane.b32.xlu0 %v695, 64
        %v717 = vpop.permute.xlu0 %716
        %718 = vrot.lane.b32.xlu0 %v697, 64
        %v719 = vpop.permute.xlu0 %718
        %720 = vrot.lane.b32.xlu0 %v699, 64
        %v721 = vpop.permute.xlu0 %720
        %722 = vrot.lane.b32.xlu0 %v701, 64
        %v723 = vpop.permute.xlu0 %722
        %724 = vrot.lane.b32.xlu0 %v703, 64
        %v725 = vpop.permute.xlu0 %724
        %726 = vrot.lane.b32.xlu0 %v705, 64
        %v727 = vpop.permute.xlu0 %726
        %728 = vrot.lane.b32.xlu0 %v707, 64
        %v729 = vpop.permute.xlu0 %728
        %730 = vrot.lane.b32.xlu0 %v709, 64
        %v731 = vpop.permute.xlu0 %730
        %732 = vrot.lane.b32.xlu0 %v711, 64
        %v733 = vpop.permute.xlu0 %732
        %734 = vrot.lane.b32.xlu0 %v713, 64
        %v735 = vpop.permute.xlu0 %734
        %736 = vrot.lane.b32.xlu0 %v715, 64
        %v737 = vpop.permute.xlu0 %736
        %738 = vrot.lane.b32.xlu0 %v714, 64
        %v739 = vpop.permute.xlu0 %738
        %vm752 = vcmask 261120
        %v753 = vsel %vm752, %v608, %v657
        %v754 = vsel %vm752, %v609, %v659
        %v755 = vsel %vm752, %v610, %v661
        %v756 = vsel %vm752, %v611, %v663
        %v757 = vsel %vm752, %v612, %v665
        %v758 = vsel %vm752, %v613, %v667
        %v759 = vsel %vm752, %v614, %v669
        %v760 = vsel %vm752, %v615, %v671
        %v761 = vsel %vm752, %v616, %v673
        %v762 = vsel %vm752, %v617, %v675
        %v763 = vsel %vm752, %v618, %v677
        %v764 = vsel %vm752, %v619, %v679
        %vm765 = vcmask 523264
        %v766 = vsel %vm765, %v753, %v717
        %v767 = vsel %vm765, %v754, %v719
        %v768 = vsel %vm765, %v755, %v721
        %v769 = vsel %vm765, %v756, %v723
        %v770 = vsel %vm765, %v757, %v725
        %v771 = vsel %vm765, %v758, %v727
        %v772 = vsel %vm765, %v759, %v729
        %v773 = vsel %vm765, %v760, %v731
        %v774 = vsel %vm765, %v761, %v733
        %v775 = vsel %vm765, %v762, %v735
        %v776 = vsel %vm765, %v763, %v737
        %v777 = vsel %vm765, %v764, %v739
        %v778 = vld [vmem:[%s3] sm:$0xff]
        %v779 = vld [vmem:[%s3 + $0x8] sm:$0xff]
        %v780 = vld [vmem:[%s3 + $0x10] sm:$0xff]
        %v781 = vld [vmem:[%s3 + $0x18] sm:$0xff]
        %v782 = vld [vmem:[%s3 + $0x20] sm:$0xff]
        %v783 = vld [vmem:[%s3 + $0x28] sm:$0xff]
        %v784 = vld [vmem:[%s3 + $0x30] sm:$0xff]
        %v785 = vld [vmem:[%s3 + $0x38] sm:$0xff]
        %v786 = vld [vmem:[%s3 + $0x40] sm:$0xff]
        %v787 = vld [vmem:[%s3 + $0x48] sm:$0xff]
        %v788 = vld [vmem:[%s3 + $0x50] sm:$0xff]
        %v789 = vld [vmem:[%s3 + $0x58] sm:$0xff]
        %v790 = vld [vmem:[%s4] sm:$0x1]
        %v792 = vperm.slane %v790, 0
        %vm794 = vcmask 785408
        %v796 = vsel %vm794, %v766, 0
        %v799 = vsel %vm794, %v767, 0
        %v802 = vsel %vm794, %v768, 0
        %v805 = vsel %vm794, %v769, 0
        %v808 = vsel %vm794, %v770, 0
        %v811 = vsel %vm794, %v771, 0
        %v814 = vsel %vm794, %v772, 0
        %v817 = vsel %vm794, %v773, 0
        %v820 = vsel %vm794, %v774, 0
        %v823 = vsel %vm794, %v775, 0
        %v826 = vsel %vm794, %v776, 0
        %v829 = vsel %vm794, %v777, 0
        %831 = vmatpush.msra.mxu0 0.0
        %832 = vmatpush.msra.mxu0 0.0
        %833 = vmatpush.msra.mxu0 0.0
        %834 = vmatpush.msra.mxu0 0.0
        %835 = vmatpush.msra.mxu0 %v789
        %836 = vmatpush.msra.mxu0 %v788
        %837 = vmatpush.msra.mxu0 %v787
        %838 = vmatpush.msra.mxu0 %v786
        %839 = vmatpush.msra.mxu0 %v785
        %840 = vmatpush.msra.mxu0 %v784
        %841 = vmatpush.msra.mxu0 %v783
        %842 = vmatpush.msra.mxu0 %v782
        %843 = vmatpush.msra.mxu0 %v781
        %844 = vmatpush.msra.mxu0 %v780
        %845 = vmatpush.msra.mxu0 %v779
        %846 = vmatpush.msra.mxu0 %v778
        %847 = vmatmul.f32.gmra.mxu0 %v796
        %v848 = vpop.f32.mrf.mxu0
        %v849 = vadd.f32 %v792, %v848
        %850 = vmatmul.f32.gmra.mxu0 %v799
        %v851 = vpop.f32.mrf.mxu0
        %v852 = vadd.f32 %v792, %v851
        %853 = vmatmul.f32.gmra.mxu0 %v802
        %v854 = vpop.f32.mrf.mxu0
        %v855 = vadd.f32 %v792, %v854
        %856 = vmatmul.f32.gmra.mxu0 %v805
        %v857 = vpop.f32.mrf.mxu0
        %v858 = vadd.f32 %v792, %v857
        %859 = vmatmul.f32.gmra.mxu0 %v808
        %v860 = vpop.f32.mrf.mxu0
        %v861 = vadd.f32 %v792, %v860
        %862 = vmatmul.f32.gmra.mxu0 %v811
        %v863 = vpop.f32.mrf.mxu0
        %v864 = vadd.f32 %v792, %v863
        %865 = vmatmul.f32.gmra.mxu0 %v814
        %v866 = vpop.f32.mrf.mxu0
        %v867 = vadd.f32 %v792, %v866
        %868 = vmatmul.f32.gmra.mxu0 %v817
        %v869 = vpop.f32.mrf.mxu0
        %v870 = vadd.f32 %v792, %v869
        %871 = vmatmul.f32.gmra.mxu0 %v820
        %v872 = vpop.f32.mrf.mxu0
        %v873 = vadd.f32 %v792, %v872
        %874 = vmatmul.f32.gmra.mxu0 %v823
        %v875 = vpop.f32.mrf.mxu0
        %v876 = vadd.f32 %v792, %v875
        %877 = vmatmul.f32.gmra.mxu0 %v826
        %v878 = vpop.f32.mrf.mxu0
        %v879 = vadd.f32 %v792, %v878
        %880 = vmatmul.f32.gmra.mxu0 %v829
        %v881 = vpop.f32.mrf.mxu0
        %v882 = vadd.f32 %v792, %v881
        %883 = vdwg.mxu0
        %vm896 = vcmask 1040384
        %v897 = vrot.slane %v849, 7
        %v898 = vrot.slane %v852, 7
        %v899 = vsel %vm896, %v897, %v898
        %v900 = vrot.slane %v855, 7
        %v901 = vsel %vm896, %v898, %v900
        %v902 = vrot.slane %v858, 7
        %v903 = vsel %vm896, %v900, %v902
        %v904 = vrot.slane %v861, 7
        %v905 = vsel %vm896, %v902, %v904
        %v906 = vrot.slane %v864, 7
        %v907 = vsel %vm896, %v904, %v906
        %v908 = vrot.slane %v867, 7
        %v909 = vsel %vm896, %v906, %v908
        %v910 = vrot.slane %v870, 7
        %v911 = vsel %vm896, %v908, %v910
        %v912 = vrot.slane %v873, 7
        %v913 = vsel %vm896, %v910, %v912
        %v914 = vrot.slane %v876, 7
        %v915 = vsel %vm896, %v912, %v914
        %v916 = vrot.slane %v879, 7
        %v917 = vsel %vm896, %v914, %v916
        %v918 = vrot.slane %v882, 7
        %v919 = vsel %vm896, %v916, %v918
        %v932 = vsel %vm560, %v897, 0.0
        %v933 = vsel %vm561, %v899, 0.0
        %v934 = vsel %vm562, %v901, 0.0
        %v935 = vsel %vm563, %v903, 0.0
        %v936 = vsel %vm564, %v905, 0.0
        %v937 = vsel %vm565, %v907, 0.0
        %v938 = vsel %vm566, %v909, 0.0
        %v939 = vsel %vm567, %v911, 0.0
        %v940 = vsel %vm568, %v913, 0.0
        %v941 = vsel %vm569, %v915, 0.0
        %v942 = vsel %vm570, %v917, 0.0
        %v943 = vsel %vm571, %v919, 0.0
        %vm944 = vcmp.ge.f32.partialorder %v932, 0.0
        %vm945 = vcmp.ge.f32.partialorder %v933, 0.0
        %vm946 = vcmp.ge.f32.partialorder %v934, 0.0
        %vm947 = vcmp.ge.f32.partialorder %v935, 0.0
        %vm948 = vcmp.ge.f32.partialorder %v936, 0.0
        %vm949 = vcmp.ge.f32.partialorder %v937, 0.0
        %vm950 = vcmp.ge.f32.partialorder %v938, 0.0
        %vm951 = vcmp.ge.f32.partialorder %v939, 0.0
        %vm952 = vcmp.ge.f32.partialorder %v940, 0.0
        %vm953 = vcmp.ge.f32.partialorder %v941, 0.0
        %vm954 = vcmp.ge.f32.partialorder %v942, 0.0
        %vm955 = vcmp.ge.f32.partialorder %v943, 0.0
        %v956 = vmul.f32 %v932, 0.1
        %v957 = vmul.f32 %v933, 0.1
        %v958 = vmul.f32 %v934, 0.1
        %v959 = vmul.f32 %v935, 0.1
        %v960 = vmul.f32 %v936, 0.1
        %v961 = vmul.f32 %v937, 0.1
        %v962 = vmul.f32 %v938, 0.1
        %v963 = vmul.f32 %v939, 0.1
        %v964 = vmul.f32 %v940, 0.1
        %v965 = vmul.f32 %v941, 0.1
        %v966 = vmul.f32 %v942, 0.1
        %v967 = vmul.f32 %v943, 0.1
        %v968 = vsel %vm944, %v932, %v956
        %v969 = vsel %vm945, %v933, %v957
        %v970 = vsel %vm946, %v934, %v958
        %v971 = vsel %vm947, %v935, %v959
        %v972 = vsel %vm948, %v936, %v960
        %v973 = vsel %vm949, %v937, %v961
        %v974 = vsel %vm950, %v938, %v962
        %v975 = vsel %vm951, %v939, %v963
        %v976 = vsel %vm952, %v940, %v964
        %v977 = vsel %vm953, %v941, %v965
        %v978 = vsel %vm954, %v942, %v966
        %v979 = vsel %vm955, %v943, %v967
        %v992 = vrot.slane %v968, 1
        %v993 = vrot.slane %v969, 1
        %v994 = vsel %vm632, %v992, %v993
        %v995 = vrot.slane %v970, 1
        %v996 = vsel %vm632, %v993, %v995
        %v997 = vrot.slane %v971, 1
        %v998 = vsel %vm632, %v995, %v997
        %v999 = vrot.slane %v972, 1
        %v1000 = vsel %vm632, %v997, %v999
        %v1001 = vrot.slane %v973, 1
        %v1002 = vsel %vm632, %v999, %v1001
        %v1003 = vrot.slane %v974, 1
        %v1004 = vsel %vm632, %v1001, %v1003
        %v1005 = vrot.slane %v975, 1
        %v1006 = vsel %vm632, %v1003, %v1005
        %v1007 = vrot.slane %v976, 1
        %v1008 = vsel %vm632, %v1005, %v1007
        %v1009 = vrot.slane %v977, 1
        %v1010 = vsel %vm632, %v1007, %v1009
        %v1011 = vrot.slane %v978, 1
        %v1012 = vsel %vm632, %v1009, %v1011
        %v1013 = vrot.slane %v979, 1
        %v1014 = vsel %vm632, %v1011, %v1013
        %1015 = vrot.lane.b32.xlu0 %v994, 32
        %v1016 = vpop.permute.xlu0 %1015
        %1017 = vrot.lane.b32.xlu0 %v996, 32
        %v1018 = vpop.permute.xlu0 %1017
        %1019 = vrot.lane.b32.xlu0 %v998, 32
        %v1020 = vpop.permute.xlu0 %1019
        %1021 = vrot.lane.b32.xlu0 %v1000, 32
        %v1022 = vpop.permute.xlu0 %1021
        %1023 = vrot.lane.b32.xlu0 %v1002, 32
        %v1024 = vpop.permute.xlu0 %1023
        %1025 = vrot.lane.b32.xlu0 %v1004, 32
        %v1026 = vpop.permute.xlu0 %1025
        %1027 = vrot.lane.b32.xlu0 %v1006, 32
        %v1028 = vpop.permute.xlu0 %1027
        %1029 = vrot.lane.b32.xlu0 %v1008, 32
        %v1030 = vpop.permute.xlu0 %1029
        %1031 = vrot.lane.b32.xlu0 %v1010, 32
        %v1032 = vpop.permute.xlu0 %1031
        %1033 = vrot.lane.b32.xlu0 %v1012, 32
        %v1034 = vpop.permute.xlu0 %1033
        %1035 = vrot.lane.b32.xlu0 %v1014, 32
        %v1036 = vpop.permute.xlu0 %1035
        %1037 = vrot.lane.b32.xlu0 %v1013, 32
        %v1038 = vpop.permute.xlu0 %1037
        %v1051 = vrot.slane %v968, 2
        %v1052 = vrot.slane %v969, 2
        %v1053 = vsel %vm692, %v1051, %v1052
        %v1054 = vrot.slane %v970, 2
        %v1055 = vsel %vm692, %v1052, %v1054
        %v1056 = vrot.slane %v971, 2
        %v1057 = vsel %vm692, %v1054, %v1056
        %v1058 = vrot.slane %v972, 2
        %v1059 = vsel %vm692, %v1056, %v1058
        %v1060 = vrot.slane %v973, 2
        %v1061 = vsel %vm692, %v1058, %v1060
        %v1062 = vrot.slane %v974, 2
        %v1063 = vsel %vm692, %v1060, %v1062
        %v1064 = vrot.slane %v975, 2
        %v1065 = vsel %vm692, %v1062, %v1064
        %v1066 = vrot.slane %v976, 2
        %v1067 = vsel %vm692, %v1064, %v1066
        %v1068 = vrot.slane %v977, 2
        %v1069 = vsel %vm692, %v1066, %v1068
        %v1070 = vrot.slane %v978, 2
        %v1071 = vsel %vm692, %v1068, %v1070
        %v1072 = vrot.slane %v979, 2
        %v1073 = vsel %vm692, %v1070, %v1072
        %1074 = vrot.lane.b32.xlu0 %v1053, 64
        %v1075 = vpop.permute.xlu0 %1074
        %1076 = vrot.lane.b32.xlu0 %v1055, 64
        %v1077 = vpop.permute.xlu0 %1076
        %1078 = vrot.lane.b32.xlu0 %v1057, 64
        %v1079 = vpop.permute.xlu0 %1078
        %1080 = vrot.lane.b32.xlu0 %v1059, 64
        %v1081 = vpop.permute.xlu0 %1080
        %1082 = vrot.lane.b32.xlu0 %v1061, 64
        %v1083 = vpop.permute.xlu0 %1082
        %1084 = vrot.lane.b32.xlu0 %v1063, 64
        %v1085 = vpop.permute.xlu0 %1084
        %1086 = vrot.lane.b32.xlu0 %v1065, 64
        %v1087 = vpop.permute.xlu0 %1086
        %1088 = vrot.lane.b32.xlu0 %v1067, 64
        %v1089 = vpop.permute.xlu0 %1088
        %1090 = vrot.lane.b32.xlu0 %v1069, 64
        %v1091 = vpop.permute.xlu0 %1090
        %1092 = vrot.lane.b32.xlu0 %v1071, 64
        %v1093 = vpop.permute.xlu0 %1092
        %1094 = vrot.lane.b32.xlu0 %v1073, 64
        %v1095 = vpop.permute.xlu0 %1094
        %1096 = vrot.lane.b32.xlu0 %v1072, 64
        %v1097 = vpop.permute.xlu0 %1096
        %v1110 = vsel %vm752, %v968, %v1016
        %v1111 = vsel %vm752, %v969, %v1018
        %v1112 = vsel %vm752, %v970, %v1020
        %v1113 = vsel %vm752, %v971, %v1022
        %v1114 = vsel %vm752, %v972, %v1024
        %v1115 = vsel %vm752, %v973, %v1026
        %v1116 = vsel %vm752, %v974, %v1028
        %v1117 = vsel %vm752, %v975, %v1030
        %v1118 = vsel %vm752, %v976, %v1032
        %v1119 = vsel %vm752, %v977, %v1034
        %v1120 = vsel %vm752, %v978, %v1036
        %v1121 = vsel %vm752, %v979, %v1038
        %v1122 = vsel %vm765, %v1110, %v1075
        %v1123 = vsel %vm765, %v1111, %v1077
        %v1124 = vsel %vm765, %v1112, %v1079
        %v1125 = vsel %vm765, %v1113, %v1081
        %v1126 = vsel %vm765, %v1114, %v1083
        %v1127 = vsel %vm765, %v1115, %v1085
        %v1128 = vsel %vm765, %v1116, %v1087
        %v1129 = vsel %vm765, %v1117, %v1089
        %v1130 = vsel %vm765, %v1118, %v1091
        %v1131 = vsel %vm765, %v1119, %v1093
        %v1132 = vsel %vm765, %v1120, %v1095
        %v1133 = vsel %vm765, %v1121, %v1097
        %v1134 = vld [vmem:[%s5] sm:$0xff]
        %v1135 = vld [vmem:[%s5 + $0x8] sm:$0xff]
        %v1136 = vld [vmem:[%s5 + $0x10] sm:$0xff]
        %v1137 = vld [vmem:[%s5 + $0x18] sm:$0xff]
        %v1138 = vld [vmem:[%s5 + $0x20] sm:$0xff]
        %v1139 = vld [vmem:[%s5 + $0x28] sm:$0xff]
        %v1140 = vld [vmem:[%s5 + $0x30] sm:$0xff]
        %v1141 = vld [vmem:[%s5 + $0x38] sm:$0xff]
        %v1142 = vld [vmem:[%s5 + $0x40] sm:$0xff]
        %v1143 = vld [vmem:[%s5 + $0x48] sm:$0xff]
        %v1144 = vld [vmem:[%s5 + $0x50] sm:$0xff]
        %v1145 = vld [vmem:[%s5 + $0x58] sm:$0xff]
        %v1146 = vld [vmem:[%s6] sm:$0x1]
        %v1148 = vperm.slane %v1146, 0
        %v1162 = vrot.slane %v1122, 1
        %v1163 = vrot.slane %v1123, 1
        %v1164 = vsel %vm632, %v1162, %v1163
        %v1165 = vrot.slane %v1124, 1
        %v1166 = vsel %vm632, %v1163, %v1165
        %v1167 = vrot.slane %v1125, 1
        %v1168 = vsel %vm632, %v1165, %v1167
        %v1169 = vrot.slane %v1126, 1
        %v1170 = vsel %vm632, %v1167, %v1169
        %v1171 = vrot.slane %v1127, 1
        %v1172 = vsel %vm632, %v1169, %v1171
        %v1173 = vrot.slane %v1128, 1
        %v1174 = vsel %vm632, %v1171, %v1173
        %v1175 = vrot.slane %v1129, 1
        %v1176 = vsel %vm632, %v1173, %v1175
        %v1177 = vrot.slane %v1130, 1
        %v1178 = vsel %vm632, %v1175, %v1177
        %v1179 = vrot.slane %v1131, 1
        %v1180 = vsel %vm632, %v1177, %v1179
        %v1181 = vrot.slane %v1132, 1
        %v1182 = vsel %vm632, %v1179, %v1181
        %v1183 = vrot.slane %v1133, 1
        %v1184 = vsel %vm632, %v1181, %v1183
        %v1185 = vsel %vm794, %v1164, 0
        %v1187 = vsel %vm794, %v1166, 0
        %v1189 = vsel %vm794, %v1168, 0
        %v1191 = vsel %vm794, %v1170, 0
        %v1193 = vsel %vm794, %v1172, 0
        %v1195 = vsel %vm794, %v1174, 0
        %v1197 = vsel %vm794, %v1176, 0
        %v1199 = vsel %vm794, %v1178, 0
        %v1201 = vsel %vm794, %v1180, 0
        %v1203 = vsel %vm794, %v1182, 0
        %v1205 = vsel %vm794, %v1184, 0
        %v1207 = vsel %vm794, %v1183, 0
        %1209 = vmatpush.msra.mxu0 0.0
        %1210 = vmatpush.msra.mxu0 0.0
        %1211 = vmatpush.msra.mxu0 0.0
        %1212 = vmatpush.msra.mxu0 0.0
        %1213 = vmatpush.msra.mxu0 %v1145
        %1214 = vmatpush.msra.mxu0 %v1144
        %1215 = vmatpush.msra.mxu0 %v1143
        %1216 = vmatpush.msra.mxu0 %v1142
        %1217 = vmatpush.msra.mxu0 %v1141
        %1218 = vmatpush.msra.mxu0 %v1140
        %1219 = vmatpush.msra.mxu0 %v1139
        %1220 = vmatpush.msra.mxu0 %v1138
        %1221 = vmatpush.msra.mxu0 %v1137
        %1222 = vmatpush.msra.mxu0 %v1136
        %1223 = vmatpush.msra.mxu0 %v1135
        %1224 = vmatpush.msra.mxu0 %v1134
        %1225 = vmatmul.f32.gmra.mxu0 %v1185
        %v1226 = vpop.f32.mrf.mxu0
        %v1227 = vadd.f32 %v1148, %v1226
        %1228 = vmatmul.f32.gmra.mxu0 %v1187
        %v1229 = vpop.f32.mrf.mxu0
        %v1230 = vadd.f32 %v1148, %v1229
        %1231 = vmatmul.f32.gmra.mxu0 %v1189
        %v1232 = vpop.f32.mrf.mxu0
        %v1233 = vadd.f32 %v1148, %v1232
        %1234 = vmatmul.f32.gmra.mxu0 %v1191
        %v1235 = vpop.f32.mrf.mxu0
        %v1236 = vadd.f32 %v1148, %v1235
        %1237 = vmatmul.f32.gmra.mxu0 %v1193
        %v1238 = vpop.f32.mrf.mxu0
        %v1239 = vadd.f32 %v1148, %v1238
        %1240 = vmatmul.f32.gmra.mxu0 %v1195
        %v1241 = vpop.f32.mrf.mxu0
        %v1242 = vadd.f32 %v1148, %v1241
        %1243 = vmatmul.f32.gmra.mxu0 %v1197
        %v1244 = vpop.f32.mrf.mxu0
        %v1245 = vadd.f32 %v1148, %v1244
        %1246 = vmatmul.f32.gmra.mxu0 %v1199
        %v1247 = vpop.f32.mrf.mxu0
        %v1248 = vadd.f32 %v1148, %v1247
        %1249 = vmatmul.f32.gmra.mxu0 %v1201
        %v1250 = vpop.f32.mrf.mxu0
        %v1251 = vadd.f32 %v1148, %v1250
        %1252 = vmatmul.f32.gmra.mxu0 %v1203
        %v1253 = vpop.f32.mrf.mxu0
        %v1254 = vadd.f32 %v1148, %v1253
        %1255 = vmatmul.f32.gmra.mxu0 %v1205
        %v1256 = vpop.f32.mrf.mxu0
        %v1257 = vadd.f32 %v1148, %v1256
        %1258 = vmatmul.f32.gmra.mxu0 %v1207
        %v1259 = vpop.f32.mrf.mxu0
        %v1260 = vadd.f32 %v1148, %v1259
        %1261 = vdwg.mxu0
        %v1274 = vrot.slane %v572, 2
        %v1275 = vrot.slane %v573, 2
        %v1276 = vsel %vm692, %v1274, %v1275
        %v1277 = vrot.slane %v574, 2
        %v1278 = vsel %vm692, %v1275, %v1277
        %v1279 = vrot.slane %v575, 2
        %v1280 = vsel %vm692, %v1277, %v1279
        %v1281 = vrot.slane %v576, 2
        %v1282 = vsel %vm692, %v1279, %v1281
        %v1283 = vrot.slane %v577, 2
        %v1284 = vsel %vm692, %v1281, %v1283
        %v1285 = vrot.slane %v578, 2
        %v1286 = vsel %vm692, %v1283, %v1285
        %v1287 = vrot.slane %v579, 2
        %v1288 = vsel %vm692, %v1285, %v1287
        %v1289 = vrot.slane %v580, 2
        %v1290 = vsel %vm692, %v1287, %v1289
        %v1291 = vrot.slane %v581, 2
        %v1292 = vsel %vm692, %v1289, %v1291
        %v1293 = vrot.slane %v582, 2
        %v1294 = vsel %vm692, %v1291, %v1293
        %v1295 = vrot.slane %v583, 2
        %v1296 = vsel %vm692, %v1293, %v1295
        %v1309 = vadd.f32 %v1227, %v1276
        %v1310 = vadd.f32 %v1230, %v1278
        %v1311 = vadd.f32 %v1233, %v1280
        %v1312 = vadd.f32 %v1236, %v1282
        %v1313 = vadd.f32 %v1239, %v1284
        %v1314 = vadd.f32 %v1242, %v1286
        %v1315 = vadd.f32 %v1245, %v1288
        %v1316 = vadd.f32 %v1248, %v1290
        %v1317 = vadd.f32 %v1251, %v1292
        %v1318 = vadd.f32 %v1254, %v1294
        %v1319 = vadd.f32 %v1257, %v1296
        %v1320 = vadd.f32 %v1260, %v1295
        %vm1333 = vcmask 1041408
        %v1334 = vrot.slane %v1309, 6
        %v1335 = vrot.slane %v1310, 6
        %v1336 = vsel %vm1333, %v1334, %v1335
        %v1337 = vrot.slane %v1311, 6
        %v1338 = vsel %vm1333, %v1335, %v1337
        %v1339 = vrot.slane %v1312, 6
        %v1340 = vsel %vm1333, %v1337, %v1339
        %v1341 = vrot.slane %v1313, 6
        %v1342 = vsel %vm1333, %v1339, %v1341
        %v1343 = vrot.slane %v1314, 6
        %v1344 = vsel %vm1333, %v1341, %v1343
        %v1345 = vrot.slane %v1315, 6
        %v1346 = vsel %vm1333, %v1343, %v1345
        %v1347 = vrot.slane %v1316, 6
        %v1348 = vsel %vm1333, %v1345, %v1347
        %v1349 = vrot.slane %v1317, 6
        %v1350 = vsel %vm1333, %v1347, %v1349
        %v1351 = vrot.slane %v1318, 6
        %v1352 = vsel %vm1333, %v1349, %v1351
        %v1353 = vrot.slane %v1319, 6
        %v1354 = vsel %vm1333, %v1351, %v1353
        %v1355 = vrot.slane %v1320, 6
        %v1356 = vsel %vm1333, %v1353, %v1355
        %v1369 = vsel %vm560, %v1334, 0.0
        %v1370 = vsel %vm561, %v1336, 0.0
        %v1371 = vsel %vm562, %v1338, 0.0
        %v1372 = vsel %vm563, %v1340, 0.0
        %v1373 = vsel %vm564, %v1342, 0.0
        %v1374 = vsel %vm565, %v1344, 0.0
        %v1375 = vsel %vm566, %v1346, 0.0
        %v1376 = vsel %vm567, %v1348, 0.0
        %v1377 = vsel %vm568, %v1350, 0.0
        %v1378 = vsel %vm569, %v1352, 0.0
        %v1379 = vsel %vm570, %v1354, 0.0
        %v1380 = vsel %vm571, %v1356, 0.0
        %vm1381 = vcmp.ge.f32.partialorder %v1369, 0.0
        %vm1382 = vcmp.ge.f32.partialorder %v1370, 0.0
        %vm1383 = vcmp.ge.f32.partialorder %v1371, 0.0
        %vm1384 = vcmp.ge.f32.partialorder %v1372, 0.0
        %vm1385 = vcmp.ge.f32.partialorder %v1373, 0.0
        %vm1386 = vcmp.ge.f32.partialorder %v1374, 0.0
        %vm1387 = vcmp.ge.f32.partialorder %v1375, 0.0
        %vm1388 = vcmp.ge.f32.partialorder %v1376, 0.0
        %vm1389 = vcmp.ge.f32.partialorder %v1377, 0.0
        %vm1390 = vcmp.ge.f32.partialorder %v1378, 0.0
        %vm1391 = vcmp.ge.f32.partialorder %v1379, 0.0
        %vm1392 = vcmp.ge.f32.partialorder %v1380, 0.0
        %v1393 = vmul.f32 %v1369, 0.1
        %v1394 = vmul.f32 %v1370, 0.1
        %v1395 = vmul.f32 %v1371, 0.1
        %v1396 = vmul.f32 %v1372, 0.1
        %v1397 = vmul.f32 %v1373, 0.1
        %v1398 = vmul.f32 %v1374, 0.1
        %v1399 = vmul.f32 %v1375, 0.1
        %v1400 = vmul.f32 %v1376, 0.1
        %v1401 = vmul.f32 %v1377, 0.1
        %v1402 = vmul.f32 %v1378, 0.1
        %v1403 = vmul.f32 %v1379, 0.1
        %v1404 = vmul.f32 %v1380, 0.1
        %v1405 = vsel %vm1381, %v1369, %v1393
        %v1406 = vsel %vm1382, %v1370, %v1394
        %v1407 = vsel %vm1383, %v1371, %v1395
        %v1408 = vsel %vm1384, %v1372, %v1396
        %v1409 = vsel %vm1385, %v1373, %v1397
        %v1410 = vsel %vm1386, %v1374, %v1398
        %v1411 = vsel %vm1387, %v1375, %v1399
        %v1412 = vsel %vm1388, %v1376, %v1400
        %v1413 = vsel %vm1389, %v1377, %v1401
        %v1414 = vsel %vm1390, %v1378, %v1402
        %v1415 = vsel %vm1391, %v1379, %v1403
        %v1416 = vsel %vm1392, %v1380, %v1404
        %vm1429 = vcmask 1044480
        %v1430 = vrot.slane %v1405, 3
        %v1431 = vrot.slane %v1406, 3
        %v1432 = vsel %vm1429, %v1430, %v1431
        %v1433 = vrot.slane %v1407, 3
        %v1434 = vsel %vm1429, %v1431, %v1433
        %v1435 = vrot.slane %v1408, 3
        %v1436 = vsel %vm1429, %v1433, %v1435
        %v1437 = vrot.slane %v1409, 3
        %v1438 = vsel %vm1429, %v1435, %v1437
        %v1439 = vrot.slane %v1410, 3
        %v1440 = vsel %vm1429, %v1437, %v1439
        %v1441 = vrot.slane %v1411, 3
        %v1442 = vsel %vm1429, %v1439, %v1441
        %v1443 = vrot.slane %v1412, 3
        %v1444 = vsel %vm1429, %v1441, %v1443
        %v1445 = vrot.slane %v1413, 3
        %v1446 = vsel %vm1429, %v1443, %v1445
        %v1447 = vrot.slane %v1414, 3
        %v1448 = vsel %vm1429, %v1445, %v1447
        %v1449 = vrot.slane %v1415, 3
        %v1450 = vsel %vm1429, %v1447, %v1449
        %v1451 = vrot.slane %v1416, 3
        %v1452 = vsel %vm1429, %v1449, %v1451
        %1453 = vrot.lane.b32.xlu0 %v1432, 32
        %v1454 = vpop.permute.xlu0 %1453
        %1455 = vrot.lane.b32.xlu0 %v1434, 32
        %v1456 = vpop.permute.xlu0 %1455
        %1457 = vrot.lane.b32.xlu0 %v1436, 32
        %v1458 = vpop.permute.xlu0 %1457
        %1459 = vrot.lane.b32.xlu0 %v1438, 32
        %v1460 = vpop.permute.xlu0 %1459
        %1461 = vrot.lane.b32.xlu0 %v1440, 32
        %v1462 = vpop.permute.xlu0 %1461
        %1463 = vrot.lane.b32.xlu0 %v1442, 32
        %v1464 = vpop.permute.xlu0 %1463
        %1465 = vrot.lane.b32.xlu0 %v1444, 32
        %v1466 = vpop.permute.xlu0 %1465
        %1467 = vrot.lane.b32.xlu0 %v1446, 32
        %v1468 = vpop.permute.xlu0 %1467
        %1469 = vrot.lane.b32.xlu0 %v1448, 32
        %v1470 = vpop.permute.xlu0 %1469
        %1471 = vrot.lane.b32.xlu0 %v1450, 32
        %v1472 = vpop.permute.xlu0 %1471
        %1473 = vrot.lane.b32.xlu0 %v1452, 32
        %v1474 = vpop.permute.xlu0 %1473
        %v1486 = vrot.slane %v1406, 6
        %v1487 = vrot.slane %v1407, 6
        %v1488 = vsel %vm1333, %v1486, %v1487
        %v1489 = vrot.slane %v1408, 6
        %v1490 = vsel %vm1333, %v1487, %v1489
        %v1491 = vrot.slane %v1409, 6
        %v1492 = vsel %vm1333, %v1489, %v1491
        %v1493 = vrot.slane %v1410, 6
        %v1494 = vsel %vm1333, %v1491, %v1493
        %v1495 = vrot.slane %v1411, 6
        %v1496 = vsel %vm1333, %v1493, %v1495
        %v1497 = vrot.slane %v1412, 6
        %v1498 = vsel %vm1333, %v1495, %v1497
        %v1499 = vrot.slane %v1413, 6
        %v1500 = vsel %vm1333, %v1497, %v1499
        %v1501 = vrot.slane %v1414, 6
        %v1502 = vsel %vm1333, %v1499, %v1501
        %v1503 = vrot.slane %v1415, 6
        %v1504 = vsel %vm1333, %v1501, %v1503
        %v1505 = vrot.slane %v1416, 6
        %v1506 = vsel %vm1333, %v1503, %v1505
        %1507 = vrot.lane.b32.xlu0 %v1486, 64
        %v1508 = vpop.permute.xlu0 %1507
        %1509 = vrot.lane.b32.xlu0 %v1488, 64
        %v1510 = vpop.permute.xlu0 %1509
        %1511 = vrot.lane.b32.xlu0 %v1490, 64
        %v1512 = vpop.permute.xlu0 %1511
        %1513 = vrot.lane.b32.xlu0 %v1492, 64
        %v1514 = vpop.permute.xlu0 %1513
        %1515 = vrot.lane.b32.xlu0 %v1494, 64
        %v1516 = vpop.permute.xlu0 %1515
        %1517 = vrot.lane.b32.xlu0 %v1496, 64
        %v1518 = vpop.permute.xlu0 %1517
        %1519 = vrot.lane.b32.xlu0 %v1498, 64
        %v1520 = vpop.permute.xlu0 %1519
        %1521 = vrot.lane.b32.xlu0 %v1500, 64
        %v1522 = vpop.permute.xlu0 %1521
        %1523 = vrot.lane.b32.xlu0 %v1502, 64
        %v1524 = vpop.permute.xlu0 %1523
        %1525 = vrot.lane.b32.xlu0 %v1504, 64
        %v1526 = vpop.permute.xlu0 %1525
        %1527 = vrot.lane.b32.xlu0 %v1506, 64
        %v1528 = vpop.permute.xlu0 %1527
        %v1540 = vsel %vm752, %v1405, %v1454
        %v1541 = vsel %vm752, %v1406, %v1456
        %v1542 = vsel %vm752, %v1407, %v1458
        %v1543 = vsel %vm752, %v1408, %v1460
        %v1544 = vsel %vm752, %v1409, %v1462
        %v1545 = vsel %vm752, %v1410, %v1464
        %v1546 = vsel %vm752, %v1411, %v1466
        %v1547 = vsel %vm752, %v1412, %v1468
        %v1548 = vsel %vm752, %v1413, %v1470
        %v1549 = vsel %vm752, %v1414, %v1472
        %v1550 = vsel %vm752, %v1415, %v1474
        %v1551 = vsel %vm765, %v1540, %v1508
        %v1552 = vsel %vm765, %v1541, %v1510
        %v1553 = vsel %vm765, %v1542, %v1512
        %v1554 = vsel %vm765, %v1543, %v1514
        %v1555 = vsel %vm765, %v1544, %v1516
        %v1556 = vsel %vm765, %v1545, %v1518
        %v1557 = vsel %vm765, %v1546, %v1520
        %v1558 = vsel %vm765, %v1547, %v1522
        %v1559 = vsel %vm765, %v1548, %v1524
        %v1560 = vsel %vm765, %v1549, %v1526
        %v1561 = vsel %vm765, %v1550, %v1528
        %s1562 = scalar_lea.vmem %s3, 96
        %v1563 = vld [vmem:[%s1562] sm:$0xff]
        %v1564 = vld [vmem:[%s1562 + $0x8] sm:$0xff]
        %v1565 = vld [vmem:[%s1562 + $0x10] sm:$0xff]
        %v1566 = vld [vmem:[%s1562 + $0x18] sm:$0xff]
        %v1567 = vld [vmem:[%s1562 + $0x20] sm:$0xff]
        %v1568 = vld [vmem:[%s1562 + $0x28] sm:$0xff]
        %v1569 = vld [vmem:[%s1562 + $0x30] sm:$0xff]
        %v1570 = vld [vmem:[%s1562 + $0x38] sm:$0xff]
        %v1571 = vld [vmem:[%s1562 + $0x40] sm:$0xff]
        %v1572 = vld [vmem:[%s1562 + $0x48] sm:$0xff]
        %v1573 = vld [vmem:[%s1562 + $0x50] sm:$0xff]
        %v1574 = vld [vmem:[%s1562 + $0x58] sm:$0xff]
        %s1575 = scalar_lea.vmem %s4, 1
        %v1576 = vld [vmem:[%s1575] sm:$0x1]
        %v1578 = vperm.slane %v1576, 0
        %v1591 = vrot.slane %v1551, 2
        %v1592 = vrot.slane %v1552, 2
        %v1593 = vsel %vm692, %v1591, %v1592
        %v1594 = vrot.slane %v1553, 2
        %v1595 = vsel %vm692, %v1592, %v1594
        %v1596 = vrot.slane %v1554, 2
        %v1597 = vsel %vm692, %v1594, %v1596
        %v1598 = vrot.slane %v1555, 2
        %v1599 = vsel %vm692, %v1596, %v1598
        %v1600 = vrot.slane %v1556, 2
        %v1601 = vsel %vm692, %v1598, %v1600
        %v1602 = vrot.slane %v1557, 2
        %v1603 = vsel %vm692, %v1600, %v1602
        %v1604 = vrot.slane %v1558, 2
        %v1605 = vsel %vm692, %v1602, %v1604
        %v1606 = vrot.slane %v1559, 2
        %v1607 = vsel %vm692, %v1604, %v1606
        %v1608 = vrot.slane %v1560, 2
        %v1609 = vsel %vm692, %v1606, %v1608
        %v1610 = vrot.slane %v1561, 2
        %v1611 = vsel %vm692, %v1608, %v1610
        %v1612 = vsel %vm794, %v1593, 0
        %v1614 = vsel %vm794, %v1595, 0
        %v1616 = vsel %vm794, %v1597, 0
        %v1618 = vsel %vm794, %v1599, 0
        %v1620 = vsel %vm794, %v1601, 0
        %v1622 = vsel %vm794, %v1603, 0
        %v1624 = vsel %vm794, %v1605, 0
        %v1626 = vsel %vm794, %v1607, 0
        %v1628 = vsel %vm794, %v1609, 0
        %v1630 = vsel %vm794, %v1611, 0
        %v1632 = vsel %vm794, %v1610, 0
        %1634 = vmatpush.msra.mxu0 0.0
        %1635 = vmatpush.msra.mxu0 0.0
        %1636 = vmatpush.msra.mxu0 0.0
        %1637 = vmatpush.msra.mxu0 0.0
        %1638 = vmatpush.msra.mxu0 %v1574
        %1639 = vmatpush.msra.mxu0 %v1573
        %1640 = vmatpush.msra.mxu0 %v1572
        %1641 = vmatpush.msra.mxu0 %v1571
        %1642 = vmatpush.msra.mxu0 %v1570
        %1643 = vmatpush.msra.mxu0 %v1569
        %1644 = vmatpush.msra.mxu0 %v1568
        %1645 = vmatpush.msra.mxu0 %v1567
        %1646 = vmatpush.msra.mxu0 %v1566
        %1647 = vmatpush.msra.mxu0 %v1565
        %1648 = vmatpush.msra.mxu0 %v1564
        %1649 = vmatpush.msra.mxu0 %v1563
        %1650 = vmatmul.f32.gmra.mxu0 %v1612
        %v1651 = vpop.f32.mrf.mxu0
        %v1652 = vadd.f32 %v1578, %v1651
        %1653 = vmatmul.f32.gmra.mxu0 %v1614
        %v1654 = vpop.f32.mrf.mxu0
        %v1655 = vadd.f32 %v1578, %v1654
        %1656 = vmatmul.f32.gmra.mxu0 %v1616
        %v1657 = vpop.f32.mrf.mxu0
        %v1658 = vadd.f32 %v1578, %v1657
        %1659 = vmatmul.f32.gmra.mxu0 %v1618
        %v1660 = vpop.f32.mrf.mxu0
        %v1661 = vadd.f32 %v1578, %v1660
        %1662 = vmatmul.f32.gmra.mxu0 %v1620
        %v1663 = vpop.f32.mrf.mxu0
        %v1664 = vadd.f32 %v1578, %v1663
        %1665 = vmatmul.f32.gmra.mxu0 %v1622
        %v1666 = vpop.f32.mrf.mxu0
        %v1667 = vadd.f32 %v1578, %v1666
        %1668 = vmatmul.f32.gmra.mxu0 %v1624
        %v1669 = vpop.f32.mrf.mxu0
        %v1670 = vadd.f32 %v1578, %v1669
        %1671 = vmatmul.f32.gmra.mxu0 %v1626
        %v1672 = vpop.f32.mrf.mxu0
        %v1673 = vadd.f32 %v1578, %v1672
        %1674 = vmatmul.f32.gmra.mxu0 %v1628
        %v1675 = vpop.f32.mrf.mxu0
        %v1676 = vadd.f32 %v1578, %v1675
        %1677 = vmatmul.f32.gmra.mxu0 %v1630
        %v1678 = vpop.f32.mrf.mxu0
        %v1679 = vadd.f32 %v1578, %v1678
        %1680 = vmatmul.f32.gmra.mxu0 %v1632
        %v1681 = vpop.f32.mrf.mxu0
        %v1682 = vadd.f32 %v1578, %v1681
        %1683 = vdwg.mxu0
        %v1695 = vrot.slane %v1652, 3
        %v1696 = vrot.slane %v1655, 3
        %v1697 = vsel %vm1429, %v1695, %v1696
        %v1698 = vrot.slane %v1658, 3
        %v1699 = vsel %vm1429, %v1696, %v1698
        %v1700 = vrot.slane %v1661, 3
        %v1701 = vsel %vm1429, %v1698, %v1700
        %v1702 = vrot.slane %v1664, 3
        %v1703 = vsel %vm1429, %v1700, %v1702
        %v1704 = vrot.slane %v1667, 3
        %v1705 = vsel %vm1429, %v1702, %v1704
        %v1706 = vrot.slane %v1670, 3
        %v1707 = vsel %vm1429, %v1704, %v1706
        %v1708 = vrot.slane %v1673, 3
        %v1709 = vsel %vm1429, %v1706, %v1708
        %v1710 = vrot.slane %v1676, 3
        %v1711 = vsel %vm1429, %v1708, %v1710
        %v1712 = vrot.slane %v1679, 3
        %v1713 = vsel %vm1429, %v1710, %v1712
        %v1714 = vrot.slane %v1682, 3
        %v1715 = vsel %vm1429, %v1712, %v1714
        %v1728 = vsel %vm560, %v1695, 0.0
        %v1729 = vsel %vm561, %v1697, 0.0
        %v1730 = vsel %vm562, %v1699, 0.0
        %v1731 = vsel %vm563, %v1701, 0.0
        %v1732 = vsel %vm564, %v1703, 0.0
        %v1733 = vsel %vm565, %v1705, 0.0
        %v1734 = vsel %vm566, %v1707, 0.0
        %v1735 = vsel %vm567, %v1709, 0.0
        %v1736 = vsel %vm568, %v1711, 0.0
        %v1737 = vsel %vm569, %v1713, 0.0
        %v1738 = vsel %vm570, %v1715, 0.0
        %v1739 = vsel %vm571, %v1714, 0.0
        %vm1740 = vcmp.ge.f32.partialorder %v1728, 0.0
        %vm1741 = vcmp.ge.f32.partialorder %v1729, 0.0
        %vm1742 = vcmp.ge.f32.partialorder %v1730, 0.0
        %vm1743 = vcmp.ge.f32.partialorder %v1731, 0.0
        %vm1744 = vcmp.ge.f32.partialorder %v1732, 0.0
        %vm1745 = vcmp.ge.f32.partialorder %v1733, 0.0
        %vm1746 = vcmp.ge.f32.partialorder %v1734, 0.0
        %vm1747 = vcmp.ge.f32.partialorder %v1735, 0.0
        %vm1748 = vcmp.ge.f32.partialorder %v1736, 0.0
        %vm1749 = vcmp.ge.f32.partialorder %v1737, 0.0
        %vm1750 = vcmp.ge.f32.partialorder %v1738, 0.0
        %vm1751 = vcmp.ge.f32.partialorder %v1739, 0.0
        %v1752 = vmul.f32 %v1728, 0.1
        %v1753 = vmul.f32 %v1729, 0.1
        %v1754 = vmul.f32 %v1730, 0.1
        %v1755 = vmul.f32 %v1731, 0.1
        %v1756 = vmul.f32 %v1732, 0.1
        %v1757 = vmul.f32 %v1733, 0.1
        %v1758 = vmul.f32 %v1734, 0.1
        %v1759 = vmul.f32 %v1735, 0.1
        %v1760 = vmul.f32 %v1736, 0.1
        %v1761 = vmul.f32 %v1737, 0.1
        %v1762 = vmul.f32 %v1738, 0.1
        %v1763 = vmul.f32 %v1739, 0.1
        %v1764 = vsel %vm1740, %v1728, %v1752
        %v1765 = vsel %vm1741, %v1729, %v1753
        %v1766 = vsel %vm1742, %v1730, %v1754
        %v1767 = vsel %vm1743, %v1731, %v1755
        %v1768 = vsel %vm1744, %v1732, %v1756
        %v1769 = vsel %vm1745, %v1733, %v1757
        %v1770 = vsel %vm1746, %v1734, %v1758
        %v1771 = vsel %vm1747, %v1735, %v1759
        %v1772 = vsel %vm1748, %v1736, %v1760
        %v1773 = vsel %vm1749, %v1737, %v1761
        %v1774 = vsel %vm1750, %v1738, %v1762
        %v1775 = vsel %vm1751, %v1739, %v1763
        %v1788 = vrot.slane %v1764, 1
        %v1789 = vrot.slane %v1765, 1
        %v1790 = vsel %vm632, %v1788, %v1789
        %v1791 = vrot.slane %v1766, 1
        %v1792 = vsel %vm632, %v1789, %v1791
        %v1793 = vrot.slane %v1767, 1
        %v1794 = vsel %vm632, %v1791, %v1793
        %v1795 = vrot.slane %v1768, 1
        %v1796 = vsel %vm632, %v1793, %v1795
        %v1797 = vrot.slane %v1769, 1
        %v1798 = vsel %vm632, %v1795, %v1797
        %v1799 = vrot.slane %v1770, 1
        %v1800 = vsel %vm632, %v1797, %v1799
        %v1801 = vrot.slane %v1771, 1
        %v1802 = vsel %vm632, %v1799, %v1801
        %v1803 = vrot.slane %v1772, 1
        %v1804 = vsel %vm632, %v1801, %v1803
        %v1805 = vrot.slane %v1773, 1
        %v1806 = vsel %vm632, %v1803, %v1805
        %v1807 = vrot.slane %v1774, 1
        %v1808 = vsel %vm632, %v1805, %v1807
        %v1809 = vrot.slane %v1775, 1
        %v1810 = vsel %vm632, %v1807, %v1809
        %1811 = vrot.lane.b32.xlu0 %v1790, 32
        %v1812 = vpop.permute.xlu0 %1811
        %1813 = vrot.lane.b32.xlu0 %v1792, 32
        %v1814 = vpop.permute.xlu0 %1813
        %1815 = vrot.lane.b32.xlu0 %v1794, 32
        %v1816 = vpop.permute.xlu0 %1815
        %1817 = vrot.lane.b32.xlu0 %v1796, 32
        %v1818 = vpop.permute.xlu0 %1817
        %1819 = vrot.lane.b32.xlu0 %v1798, 32
        %v1820 = vpop.permute.xlu0 %1819
        %1821 = vrot.lane.b32.xlu0 %v1800, 32
        %v1822 = vpop.permute.xlu0 %1821
        %1823 = vrot.lane.b32.xlu0 %v1802, 32
        %v1824 = vpop.permute.xlu0 %1823
        %1825 = vrot.lane.b32.xlu0 %v1804, 32
        %v1826 = vpop.permute.xlu0 %1825
        %1827 = vrot.lane.b32.xlu0 %v1806, 32
        %v1828 = vpop.permute.xlu0 %1827
        %1829 = vrot.lane.b32.xlu0 %v1808, 32
        %v1830 = vpop.permute.xlu0 %1829
        %1831 = vrot.lane.b32.xlu0 %v1810, 32
        %v1832 = vpop.permute.xlu0 %1831
        %1833 = vrot.lane.b32.xlu0 %v1809, 32
        %v1834 = vpop.permute.xlu0 %1833
        %v1847 = vrot.slane %v1764, 2
        %v1848 = vrot.slane %v1765, 2
        %v1849 = vsel %vm692, %v1847, %v1848
        %v1850 = vrot.slane %v1766, 2
        %v1851 = vsel %vm692, %v1848, %v1850
        %v1852 = vrot.slane %v1767, 2
        %v1853 = vsel %vm692, %v1850, %v1852
        %v1854 = vrot.slane %v1768, 2
        %v1855 = vsel %vm692, %v1852, %v1854
        %v1856 = vrot.slane %v1769, 2
        %v1857 = vsel %vm692, %v1854, %v1856
        %v1858 = vrot.slane %v1770, 2
        %v1859 = vsel %vm692, %v1856, %v1858
        %v1860 = vrot.slane %v1771, 2
        %v1861 = vsel %vm692, %v1858, %v1860
        %v1862 = vrot.slane %v1772, 2
        %v1863 = vsel %vm692, %v1860, %v1862
        %v1864 = vrot.slane %v1773, 2
        %v1865 = vsel %vm692, %v1862, %v1864
        %v1866 = vrot.slane %v1774, 2
        %v1867 = vsel %vm692, %v1864, %v1866
        %v1868 = vrot.slane %v1775, 2
        %v1869 = vsel %vm692, %v1866, %v1868
        %1870 = vrot.lane.b32.xlu0 %v1849, 64
        %v1871 = vpop.permute.xlu0 %1870
        %1872 = vrot.lane.b32.xlu0 %v1851, 64
        %v1873 = vpop.permute.xlu0 %1872
        %1874 = vrot.lane.b32.xlu0 %v1853, 64
        %v1875 = vpop.permute.xlu0 %1874
        %1876 = vrot.lane.b32.xlu0 %v1855, 64
        %v1877 = vpop.permute.xlu0 %1876
        %1878 = vrot.lane.b32.xlu0 %v1857, 64
        %v1879 = vpop.permute.xlu0 %1878
        %1880 = vrot.lane.b32.xlu0 %v1859, 64
        %v1881 = vpop.permute.xlu0 %1880
        %1882 = vrot.lane.b32.xlu0 %v1861, 64
        %v1883 = vpop.permute.xlu0 %1882
        %1884 = vrot.lane.b32.xlu0 %v1863, 64
        %v1885 = vpop.permute.xlu0 %1884
        %1886 = vrot.lane.b32.xlu0 %v1865, 64
        %v1887 = vpop.permute.xlu0 %1886
        %1888 = vrot.lane.b32.xlu0 %v1867, 64
        %v1889 = vpop.permute.xlu0 %1888
        %1890 = vrot.lane.b32.xlu0 %v1869, 64
        %v1891 = vpop.permute.xlu0 %1890
        %1892 = vrot.lane.b32.xlu0 %v1868, 64
        %v1893 = vpop.permute.xlu0 %1892
        %v1906 = vsel %vm752, %v1764, %v1812
        %v1907 = vsel %vm752, %v1765, %v1814
        %v1908 = vsel %vm752, %v1766, %v1816
        %v1909 = vsel %vm752, %v1767, %v1818
        %v1910 = vsel %vm752, %v1768, %v1820
        %v1911 = vsel %vm752, %v1769, %v1822
        %v1912 = vsel %vm752, %v1770, %v1824
        %v1913 = vsel %vm752, %v1771, %v1826
        %v1914 = vsel %vm752, %v1772, %v1828
        %v1915 = vsel %vm752, %v1773, %v1830
        %v1916 = vsel %vm752, %v1774, %v1832
        %v1917 = vsel %vm752, %v1775, %v1834
        %v1918 = vsel %vm765, %v1906, %v1871
        %v1919 = vsel %vm765, %v1907, %v1873
        %v1920 = vsel %vm765, %v1908, %v1875
        %v1921 = vsel %vm765, %v1909, %v1877
        %v1922 = vsel %vm765, %v1910, %v1879
        %v1923 = vsel %vm765, %v1911, %v1881
        %v1924 = vsel %vm765, %v1912, %v1883
        %v1925 = vsel %vm765, %v1913, %v1885
        %v1926 = vsel %vm765, %v1914, %v1887
        %v1927 = vsel %vm765, %v1915, %v1889
        %v1928 = vsel %vm765, %v1916, %v1891
        %v1929 = vsel %vm765, %v1917, %v1893
        %s1930 = scalar_lea.vmem %s5, 96
        %v1931 = vld [vmem:[%s1930] sm:$0xff]
        %v1932 = vld [vmem:[%s1930 + $0x8] sm:$0xff]
        %v1933 = vld [vmem:[%s1930 + $0x10] sm:$0xff]
        %v1934 = vld [vmem:[%s1930 + $0x18] sm:$0xff]
        %v1935 = vld [vmem:[%s1930 + $0x20] sm:$0xff]
        %v1936 = vld [vmem:[%s1930 + $0x28] sm:$0xff]
        %v1937 = vld [vmem:[%s1930 + $0x30] sm:$0xff]
        %v1938 = vld [vmem:[%s1930 + $0x38] sm:$0xff]
        %v1939 = vld [vmem:[%s1930 + $0x40] sm:$0xff]
        %v1940 = vld [vmem:[%s1930 + $0x48] sm:$0xff]
        %v1941 = vld [vmem:[%s1930 + $0x50] sm:$0xff]
        %v1942 = vld [vmem:[%s1930 + $0x58] sm:$0xff]
        %s1943 = scalar_lea.vmem %s6, 1
        %v1944 = vld [vmem:[%s1943] sm:$0x1]
        %v1946 = vperm.slane %v1944, 0
        %vm1960 = vcmask 1042432
        %v1961 = vrot.slane %v1918, 5
        %v1962 = vrot.slane %v1919, 5
        %v1963 = vsel %vm1960, %v1961, %v1962
        %v1964 = vrot.slane %v1920, 5
        %v1965 = vsel %vm1960, %v1962, %v1964
        %v1966 = vrot.slane %v1921, 5
        %v1967 = vsel %vm1960, %v1964, %v1966
        %v1968 = vrot.slane %v1922, 5
        %v1969 = vsel %vm1960, %v1966, %v1968
        %v1970 = vrot.slane %v1923, 5
        %v1971 = vsel %vm1960, %v1968, %v1970
        %v1972 = vrot.slane %v1924, 5
        %v1973 = vsel %vm1960, %v1970, %v1972
        %v1974 = vrot.slane %v1925, 5
        %v1975 = vsel %vm1960, %v1972, %v1974
        %v1976 = vrot.slane %v1926, 5
        %v1977 = vsel %vm1960, %v1974, %v1976
        %v1978 = vrot.slane %v1927, 5
        %v1979 = vsel %vm1960, %v1976, %v1978
        %v1980 = vrot.slane %v1928, 5
        %v1981 = vsel %vm1960, %v1978, %v1980
        %v1982 = vrot.slane %v1929, 5
        %v1983 = vsel %vm1960, %v1980, %v1982
        %v1984 = vsel %vm794, %v1963, 0
        %v1986 = vsel %vm794, %v1965, 0
        %v1988 = vsel %vm794, %v1967, 0
        %v1990 = vsel %vm794, %v1969, 0
        %v1992 = vsel %vm794, %v1971, 0
        %v1994 = vsel %vm794, %v1973, 0
        %v1996 = vsel %vm794, %v1975, 0
        %v1998 = vsel %vm794, %v1977, 0
        %v2000 = vsel %vm794, %v1979, 0
        %v2002 = vsel %vm794, %v1981, 0
        %v2004 = vsel %vm794, %v1983, 0
        %2006 = vmatpush.msra.mxu0 0.0
        %2007 = vmatpush.msra.mxu0 0.0
        %2008 = vmatpush.msra.mxu0 0.0
        %2009 = vmatpush.msra.mxu0 0.0
        %2010 = vmatpush.msra.mxu0 %v1942
        %2011 = vmatpush.msra.mxu0 %v1941
        %2012 = vmatpush.msra.mxu0 %v1940
        %2013 = vmatpush.msra.mxu0 %v1939
        %2014 = vmatpush.msra.mxu0 %v1938
        %2015 = vmatpush.msra.mxu0 %v1937
        %2016 = vmatpush.msra.mxu0 %v1936
        %2017 = vmatpush.msra.mxu0 %v1935
        %2018 = vmatpush.msra.mxu0 %v1934
        %2019 = vmatpush.msra.mxu0 %v1933
        %2020 = vmatpush.msra.mxu0 %v1932
        %2021 = vmatpush.msra.mxu0 %v1931
        %2022 = vmatmul.f32.gmra.mxu0 %v1984
        %v2023 = vpop.f32.mrf.mxu0
        %v2024 = vadd.f32 %v1946, %v2023
        %2025 = vmatmul.f32.gmra.mxu0 %v1986
        %v2026 = vpop.f32.mrf.mxu0
        %v2027 = vadd.f32 %v1946, %v2026
        %2028 = vmatmul.f32.gmra.mxu0 %v1988
        %v2029 = vpop.f32.mrf.mxu0
        %v2030 = vadd.f32 %v1946, %v2029
        %2031 = vmatmul.f32.gmra.mxu0 %v1990
        %v2032 = vpop.f32.mrf.mxu0
        %v2033 = vadd.f32 %v1946, %v2032
        %2034 = vmatmul.f32.gmra.mxu0 %v1992
        %v2035 = vpop.f32.mrf.mxu0
        %v2036 = vadd.f32 %v1946, %v2035
        %2037 = vmatmul.f32.gmra.mxu0 %v1994
        %v2038 = vpop.f32.mrf.mxu0
        %v2039 = vadd.f32 %v1946, %v2038
        %2040 = vmatmul.f32.gmra.mxu0 %v1996
        %v2041 = vpop.f32.mrf.mxu0
        %v2042 = vadd.f32 %v1946, %v2041
        %2043 = vmatmul.f32.gmra.mxu0 %v1998
        %v2044 = vpop.f32.mrf.mxu0
        %v2045 = vadd.f32 %v1946, %v2044
        %2046 = vmatmul.f32.gmra.mxu0 %v2000
        %v2047 = vpop.f32.mrf.mxu0
        %v2048 = vadd.f32 %v1946, %v2047
        %2049 = vmatmul.f32.gmra.mxu0 %v2002
        %v2050 = vpop.f32.mrf.mxu0
        %v2051 = vadd.f32 %v1946, %v2050
        %2052 = vmatmul.f32.gmra.mxu0 %v2004
        %v2053 = vpop.f32.mrf.mxu0
        %v2054 = vadd.f32 %v1946, %v2053
        %2055 = vdwg.mxu0
        %v2068 = vrot.slane %v1369, 6
        %v2069 = vrot.slane %v1370, 6
        %v2070 = vsel %vm1333, %v2068, %v2069
        %v2071 = vrot.slane %v1371, 6
        %v2072 = vsel %vm1333, %v2069, %v2071
        %v2073 = vrot.slane %v1372, 6
        %v2074 = vsel %vm1333, %v2071, %v2073
        %v2075 = vrot.slane %v1373, 6
        %v2076 = vsel %vm1333, %v2073, %v2075
        %v2077 = vrot.slane %v1374, 6
        %v2078 = vsel %vm1333, %v2075, %v2077
        %v2079 = vrot.slane %v1375, 6
        %v2080 = vsel %vm1333, %v2077, %v2079
        %v2081 = vrot.slane %v1376, 6
        %v2082 = vsel %vm1333, %v2079, %v2081
        %v2083 = vrot.slane %v1377, 6
        %v2084 = vsel %vm1333, %v2081, %v2083
        %v2085 = vrot.slane %v1378, 6
        %v2086 = vsel %vm1333, %v2083, %v2085
        %v2087 = vrot.slane %v1379, 6
        %v2088 = vsel %vm1333, %v2085, %v2087
        %v2089 = vrot.slane %v1380, 6
        %v2090 = vsel %vm1333, %v2087, %v2089
        %v2102 = vadd.f32 %v2024, %v2070
        %v2103 = vadd.f32 %v2027, %v2072
        %v2104 = vadd.f32 %v2030, %v2074
        %v2105 = vadd.f32 %v2033, %v2076
        %v2106 = vadd.f32 %v2036, %v2078
        %v2107 = vadd.f32 %v2039, %v2080
        %v2108 = vadd.f32 %v2042, %v2082
        %v2109 = vadd.f32 %v2045, %v2084
        %v2110 = vadd.f32 %v2048, %v2086
        %v2111 = vadd.f32 %v2051, %v2088
        %v2112 = vadd.f32 %v2054, %v2090
        %v2124 = vrot.slane %v2102, 2
        %v2125 = vrot.slane %v2103, 2
        %v2126 = vsel %vm692, %v2124, %v2125
        %v2127 = vrot.slane %v2104, 2
        %v2128 = vsel %vm692, %v2125, %v2127
        %v2129 = vrot.slane %v2105, 2
        %v2130 = vsel %vm692, %v2127, %v2129
        %v2131 = vrot.slane %v2106, 2
        %v2132 = vsel %vm692, %v2129, %v2131
        %v2133 = vrot.slane %v2107, 2
        %v2134 = vsel %vm692, %v2131, %v2133
        %v2135 = vrot.slane %v2108, 2
        %v2136 = vsel %vm692, %v2133, %v2135
        %v2137 = vrot.slane %v2109, 2
        %v2138 = vsel %vm692, %v2135, %v2137
        %v2139 = vrot.slane %v2110, 2
        %v2140 = vsel %vm692, %v2137, %v2139
        %v2141 = vrot.slane %v2111, 2
        %v2142 = vsel %vm692, %v2139, %v2141
        %v2143 = vrot.slane %v2112, 2
        %v2144 = vsel %vm692, %v2141, %v2143
        %v2157 = vsel %vm560, %v2124, 0.0
        %v2158 = vsel %vm561, %v2126, 0.0
        %v2159 = vsel %vm562, %v2128, 0.0
        %v2160 = vsel %vm563, %v2130, 0.0
        %v2161 = vsel %vm564, %v2132, 0.0
        %v2162 = vsel %vm565, %v2134, 0.0
        %v2163 = vsel %vm566, %v2136, 0.0
        %v2164 = vsel %vm567, %v2138, 0.0
        %v2165 = vsel %vm568, %v2140, 0.0
        %v2166 = vsel %vm569, %v2142, 0.0
        %v2167 = vsel %vm570, %v2144, 0.0
        %v2168 = vsel %vm571, %v2143, 0.0
        %vm2169 = vcmp.ge.f32.partialorder %v2157, 0.0
        %vm2170 = vcmp.ge.f32.partialorder %v2158, 0.0
        %vm2171 = vcmp.ge.f32.partialorder %v2159, 0.0
        %vm2172 = vcmp.ge.f32.partialorder %v2160, 0.0
        %vm2173 = vcmp.ge.f32.partialorder %v2161, 0.0
        %vm2174 = vcmp.ge.f32.partialorder %v2162, 0.0
        %vm2175 = vcmp.ge.f32.partialorder %v2163, 0.0
        %vm2176 = vcmp.ge.f32.partialorder %v2164, 0.0
        %vm2177 = vcmp.ge.f32.partialorder %v2165, 0.0
        %vm2178 = vcmp.ge.f32.partialorder %v2166, 0.0
        %vm2179 = vcmp.ge.f32.partialorder %v2167, 0.0
        %vm2180 = vcmp.ge.f32.partialorder %v2168, 0.0
        %v2181 = vmul.f32 %v2157, 0.1
        %v2182 = vmul.f32 %v2158, 0.1
        %v2183 = vmul.f32 %v2159, 0.1
        %v2184 = vmul.f32 %v2160, 0.1
        %v2185 = vmul.f32 %v2161, 0.1
        %v2186 = vmul.f32 %v2162, 0.1
        %v2187 = vmul.f32 %v2163, 0.1
        %v2188 = vmul.f32 %v2164, 0.1
        %v2189 = vmul.f32 %v2165, 0.1
        %v2190 = vmul.f32 %v2166, 0.1
        %v2191 = vmul.f32 %v2167, 0.1
        %v2192 = vmul.f32 %v2168, 0.1
        %v2193 = vsel %vm2169, %v2157, %v2181
        %v2194 = vsel %vm2170, %v2158, %v2182
        %v2195 = vsel %vm2171, %v2159, %v2183
        %v2196 = vsel %vm2172, %v2160, %v2184
        %v2197 = vsel %vm2173, %v2161, %v2185
        %v2198 = vsel %vm2174, %v2162, %v2186
        %v2199 = vsel %vm2175, %v2163, %v2187
        %v2200 = vsel %vm2176, %v2164, %v2188
        %v2201 = vsel %vm2177, %v2165, %v2189
        %v2202 = vsel %vm2178, %v2166, %v2190
        %v2203 = vsel %vm2179, %v2167, %v2191
        %v2204 = vsel %vm2180, %v2168, %v2192
        %v2215 = vrot.slane %v2194, 5
        %v2216 = vrot.slane %v2195, 5
        %v2217 = vsel %vm1960, %v2215, %v2216
        %v2218 = vrot.slane %v2196, 5
        %v2219 = vsel %vm1960, %v2216, %v2218
        %v2220 = vrot.slane %v2197, 5
        %v2221 = vsel %vm1960, %v2218, %v2220
        %v2222 = vrot.slane %v2198, 5
        %v2223 = vsel %vm1960, %v2220, %v2222
        %v2224 = vrot.slane %v2199, 5
        %v2225 = vsel %vm1960, %v2222, %v2224
        %v2226 = vrot.slane %v2200, 5
        %v2227 = vsel %vm1960, %v2224, %v2226
        %v2228 = vrot.slane %v2201, 5
        %v2229 = vsel %vm1960, %v2226, %v2228
        %v2230 = vrot.slane %v2202, 5
        %v2231 = vsel %vm1960, %v2228, %v2230
        %v2232 = vrot.slane %v2203, 5
        %v2233 = vsel %vm1960, %v2230, %v2232
        %2234 = vrot.lane.b32.xlu0 %v2215, 32
        %v2235 = vpop.permute.xlu0 %2234
        %2236 = vrot.lane.b32.xlu0 %v2217, 32
        %v2237 = vpop.permute.xlu0 %2236
        %2238 = vrot.lane.b32.xlu0 %v2219, 32
        %v2239 = vpop.permute.xlu0 %2238
        %2240 = vrot.lane.b32.xlu0 %v2221, 32
        %v2241 = vpop.permute.xlu0 %2240
        %2242 = vrot.lane.b32.xlu0 %v2223, 32
        %v2243 = vpop.permute.xlu0 %2242
        %2244 = vrot.lane.b32.xlu0 %v2225, 32
        %v2245 = vpop.permute.xlu0 %2244
        %2246 = vrot.lane.b32.xlu0 %v2227, 32
        %v2247 = vpop.permute.xlu0 %2246
        %2248 = vrot.lane.b32.xlu0 %v2229, 32
        %v2249 = vpop.permute.xlu0 %2248
        %2250 = vrot.lane.b32.xlu0 %v2231, 32
        %v2251 = vpop.permute.xlu0 %2250
        %2252 = vrot.lane.b32.xlu0 %v2233, 32
        %v2253 = vpop.permute.xlu0 %2252
        %v2265 = vrot.slane %v2195, 2
        %v2266 = vrot.slane %v2196, 2
        %v2267 = vsel %vm692, %v2265, %v2266
        %v2268 = vrot.slane %v2197, 2
        %v2269 = vsel %vm692, %v2266, %v2268
        %v2270 = vrot.slane %v2198, 2
        %v2271 = vsel %vm692, %v2268, %v2270
        %v2272 = vrot.slane %v2199, 2
        %v2273 = vsel %vm692, %v2270, %v2272
        %v2274 = vrot.slane %v2200, 2
        %v2275 = vsel %vm692, %v2272, %v2274
        %v2276 = vrot.slane %v2201, 2
        %v2277 = vsel %vm692, %v2274, %v2276
        %v2278 = vrot.slane %v2202, 2
        %v2279 = vsel %vm692, %v2276, %v2278
        %v2280 = vrot.slane %v2203, 2
        %v2281 = vsel %vm692, %v2278, %v2280
        %v2282 = vrot.slane %v2204, 2
        %v2283 = vsel %vm692, %v2280, %v2282
        %2284 = vrot.lane.b32.xlu0 %v2265, 64
        %v2285 = vpop.permute.xlu0 %2284
        %2286 = vrot.lane.b32.xlu0 %v2267, 64
        %v2287 = vpop.permute.xlu0 %2286
        %2288 = vrot.lane.b32.xlu0 %v2269, 64
        %v2289 = vpop.permute.xlu0 %2288
        %2290 = vrot.lane.b32.xlu0 %v2271, 64
        %v2291 = vpop.permute.xlu0 %2290
        %2292 = vrot.lane.b32.xlu0 %v2273, 64
        %v2293 = vpop.permute.xlu0 %2292
        %2294 = vrot.lane.b32.xlu0 %v2275, 64
        %v2295 = vpop.permute.xlu0 %2294
        %2296 = vrot.lane.b32.xlu0 %v2277, 64
        %v2297 = vpop.permute.xlu0 %2296
        %2298 = vrot.lane.b32.xlu0 %v2279, 64
        %v2299 = vpop.permute.xlu0 %2298
        %2300 = vrot.lane.b32.xlu0 %v2281, 64
        %v2301 = vpop.permute.xlu0 %2300
        %2302 = vrot.lane.b32.xlu0 %v2283, 64
        %v2303 = vpop.permute.xlu0 %2302
        %v2314 = vsel %vm752, %v2193, %v2235
        %v2315 = vsel %vm752, %v2194, %v2237
        %v2316 = vsel %vm752, %v2195, %v2239
        %v2317 = vsel %vm752, %v2196, %v2241
        %v2318 = vsel %vm752, %v2197, %v2243
        %v2319 = vsel %vm752, %v2198, %v2245
        %v2320 = vsel %vm752, %v2199, %v2247
        %v2321 = vsel %vm752, %v2200, %v2249
        %v2322 = vsel %vm752, %v2201, %v2251
        %v2323 = vsel %vm752, %v2202, %v2253
        %v2324 = vsel %vm765, %v2314, %v2285
        %v2325 = vsel %vm765, %v2315, %v2287
        %v2326 = vsel %vm765, %v2316, %v2289
        %v2327 = vsel %vm765, %v2317, %v2291
        %v2328 = vsel %vm765, %v2318, %v2293
        %v2329 = vsel %vm765, %v2319, %v2295
        %v2330 = vsel %vm765, %v2320, %v2297
        %v2331 = vsel %vm765, %v2321, %v2299
        %v2332 = vsel %vm765, %v2322, %v2301
        %v2333 = vsel %vm765, %v2323, %v2303
        %s2334 = scalar_lea.vmem %s3, 192
        %v2335 = vld [vmem:[%s2334] sm:$0xff]
        %v2336 = vld [vmem:[%s2334 + $0x8] sm:$0xff]
        %v2337 = vld [vmem:[%s2334 + $0x10] sm:$0xff]
        %v2338 = vld [vmem:[%s2334 + $0x18] sm:$0xff]
        %v2339 = vld [vmem:[%s2334 + $0x20] sm:$0xff]
        %v2340 = vld [vmem:[%s2334 + $0x28] sm:$0xff]
        %v2341 = vld [vmem:[%s2334 + $0x30] sm:$0xff]
        %v2342 = vld [vmem:[%s2334 + $0x38] sm:$0xff]
        %v2343 = vld [vmem:[%s2334 + $0x40] sm:$0xff]
        %v2344 = vld [vmem:[%s2334 + $0x48] sm:$0xff]
        %v2345 = vld [vmem:[%s2334 + $0x50] sm:$0xff]
        %v2346 = vld [vmem:[%s2334 + $0x58] sm:$0xff]
        %s2347 = scalar_lea.vmem %s4, 2
        %v2348 = vld [vmem:[%s2347] sm:$0x1]
        %v2350 = vperm.slane %v2348, 0
        %v2362 = vrot.slane %v2324, 6
        %v2363 = vrot.slane %v2325, 6
        %v2364 = vsel %vm1333, %v2362, %v2363
        %v2365 = vrot.slane %v2326, 6
        %v2366 = vsel %vm1333, %v2363, %v2365
        %v2367 = vrot.slane %v2327, 6
        %v2368 = vsel %vm1333, %v2365, %v2367
        %v2369 = vrot.slane %v2328, 6
        %v2370 = vsel %vm1333, %v2367, %v2369
        %v2371 = vrot.slane %v2329, 6
        %v2372 = vsel %vm1333, %v2369, %v2371
        %v2373 = vrot.slane %v2330, 6
        %v2374 = vsel %vm1333, %v2371, %v2373
        %v2375 = vrot.slane %v2331, 6
        %v2376 = vsel %vm1333, %v2373, %v2375
        %v2377 = vrot.slane %v2332, 6
        %v2378 = vsel %vm1333, %v2375, %v2377
        %v2379 = vrot.slane %v2333, 6
        %v2380 = vsel %vm1333, %v2377, %v2379
        %v2381 = vsel %vm794, %v2364, 0
        %v2383 = vsel %vm794, %v2366, 0
        %v2385 = vsel %vm794, %v2368, 0
        %v2387 = vsel %vm794, %v2370, 0
        %v2389 = vsel %vm794, %v2372, 0
        %v2391 = vsel %vm794, %v2374, 0
        %v2393 = vsel %vm794, %v2376, 0
        %v2395 = vsel %vm794, %v2378, 0
        %v2397 = vsel %vm794, %v2380, 0
        %v2399 = vsel %vm794, %v2379, 0
        %2401 = vmatpush.msra.mxu0 0.0
        %2402 = vmatpush.msra.mxu0 0.0
        %2403 = vmatpush.msra.mxu0 0.0
        %2404 = vmatpush.msra.mxu0 0.0
        %2405 = vmatpush.msra.mxu0 %v2346
        %2406 = vmatpush.msra.mxu0 %v2345
        %2407 = vmatpush.msra.mxu0 %v2344
        %2408 = vmatpush.msra.mxu0 %v2343
        %2409 = vmatpush.msra.mxu0 %v2342
        %2410 = vmatpush.msra.mxu0 %v2341
        %2411 = vmatpush.msra.mxu0 %v2340
        %2412 = vmatpush.msra.mxu0 %v2339
        %2413 = vmatpush.msra.mxu0 %v2338
        %2414 = vmatpush.msra.mxu0 %v2337
        %2415 = vmatpush.msra.mxu0 %v2336
        %2416 = vmatpush.msra.mxu0 %v2335
        %2417 = vmatmul.f32.gmra.mxu0 %v2381
        %v2418 = vpop.f32.mrf.mxu0
        %v2419 = vadd.f32 %v2350, %v2418
        %2420 = vmatmul.f32.gmra.mxu0 %v2383
        %v2421 = vpop.f32.mrf.mxu0
        %v2422 = vadd.f32 %v2350, %v2421
        %2423 = vmatmul.f32.gmra.mxu0 %v2385
        %v2424 = vpop.f32.mrf.mxu0
        %v2425 = vadd.f32 %v2350, %v2424
        %2426 = vmatmul.f32.gmra.mxu0 %v2387
        %v2427 = vpop.f32.mrf.mxu0
        %v2428 = vadd.f32 %v2350, %v2427
        %2429 = vmatmul.f32.gmra.mxu0 %v2389
        %v2430 = vpop.f32.mrf.mxu0
        %v2431 = vadd.f32 %v2350, %v2430
        %2432 = vmatmul.f32.gmra.mxu0 %v2391
        %v2433 = vpop.f32.mrf.mxu0
        %v2434 = vadd.f32 %v2350, %v2433
        %2435 = vmatmul.f32.gmra.mxu0 %v2393
        %v2436 = vpop.f32.mrf.mxu0
        %v2437 = vadd.f32 %v2350, %v2436
        %2438 = vmatmul.f32.gmra.mxu0 %v2395
        %v2439 = vpop.f32.mrf.mxu0
        %v2440 = vadd.f32 %v2350, %v2439
        %2441 = vmatmul.f32.gmra.mxu0 %v2397
        %v2442 = vpop.f32.mrf.mxu0
        %v2443 = vadd.f32 %v2350, %v2442
        %2444 = vmatmul.f32.gmra.mxu0 %v2399
        %v2445 = vpop.f32.mrf.mxu0
        %v2446 = vadd.f32 %v2350, %v2445
        %2447 = vdwg.mxu0
        %v2458 = vrot.slane %v2419, 5
        %v2459 = vrot.slane %v2422, 5
        %v2460 = vsel %vm1960, %v2458, %v2459
        %v2461 = vrot.slane %v2425, 5
        %v2462 = vsel %vm1960, %v2459, %v2461
        %v2463 = vrot.slane %v2428, 5
        %v2464 = vsel %vm1960, %v2461, %v2463
        %v2465 = vrot.slane %v2431, 5
        %v2466 = vsel %vm1960, %v2463, %v2465
        %v2467 = vrot.slane %v2434, 5
        %v2468 = vsel %vm1960, %v2465, %v2467
        %v2469 = vrot.slane %v2437, 5
        %v2470 = vsel %vm1960, %v2467, %v2469
        %v2471 = vrot.slane %v2440, 5
        %v2472 = vsel %vm1960, %v2469, %v2471
        %v2473 = vrot.slane %v2443, 5
        %v2474 = vsel %vm1960, %v2471, %v2473
        %v2475 = vrot.slane %v2446, 5
        %v2476 = vsel %vm1960, %v2473, %v2475
        %v2487 = vsel %vm561, %v2458, 0.0
        %v2488 = vsel %vm562, %v2460, 0.0
        %v2489 = vsel %vm563, %v2462, 0.0
        %v2490 = vsel %vm564, %v2464, 0.0
        %v2491 = vsel %vm565, %v2466, 0.0
        %v2492 = vsel %vm566, %v2468, 0.0
        %v2493 = vsel %vm567, %v2470, 0.0
        %v2494 = vsel %vm568, %v2472, 0.0
        %v2495 = vsel %vm569, %v2474, 0.0
        %v2496 = vsel %vm570, %v2476, 0.0
        %vm2497 = vcmp.ge.f32.partialorder %v2487, 0.0
        %vm2498 = vcmp.ge.f32.partialorder %v2488, 0.0
        %vm2499 = vcmp.ge.f32.partialorder %v2489, 0.0
        %vm2500 = vcmp.ge.f32.partialorder %v2490, 0.0
        %vm2501 = vcmp.ge.f32.partialorder %v2491, 0.0
        %vm2502 = vcmp.ge.f32.partialorder %v2492, 0.0
        %vm2503 = vcmp.ge.f32.partialorder %v2493, 0.0
        %vm2504 = vcmp.ge.f32.partialorder %v2494, 0.0
        %vm2505 = vcmp.ge.f32.partialorder %v2495, 0.0
        %vm2506 = vcmp.ge.f32.partialorder %v2496, 0.0
        %v2507 = vmul.f32 %v2487, 0.1
        %v2508 = vmul.f32 %v2488, 0.1
        %v2509 = vmul.f32 %v2489, 0.1
        %v2510 = vmul.f32 %v2490, 0.1
        %v2511 = vmul.f32 %v2491, 0.1
        %v2512 = vmul.f32 %v2492, 0.1
        %v2513 = vmul.f32 %v2493, 0.1
        %v2514 = vmul.f32 %v2494, 0.1
        %v2515 = vmul.f32 %v2495, 0.1
        %v2516 = vmul.f32 %v2496, 0.1
        %v2517 = vsel %vm2497, %v2487, %v2507
        %v2518 = vsel %vm2498, %v2488, %v2508
        %v2519 = vsel %vm2499, %v2489, %v2509
        %v2520 = vsel %vm2500, %v2490, %v2510
        %v2521 = vsel %vm2501, %v2491, %v2511
        %v2522 = vsel %vm2502, %v2492, %v2512
        %v2523 = vsel %vm2503, %v2493, %v2513
        %v2524 = vsel %vm2504, %v2494, %v2514
        %v2525 = vsel %vm2505, %v2495, %v2515
        %v2526 = vsel %vm2506, %v2496, %v2516
        %v2537 = vrot.slane %v2517, 1
        %v2538 = vrot.slane %v2518, 1
        %v2539 = vsel %vm632, %v2537, %v2538
        %v2540 = vrot.slane %v2519, 1
        %v2541 = vsel %vm632, %v2538, %v2540
        %v2542 = vrot.slane %v2520, 1
        %v2543 = vsel %vm632, %v2540, %v2542
        %v2544 = vrot.slane %v2521, 1
        %v2545 = vsel %vm632, %v2542, %v2544
        %v2546 = vrot.slane %v2522, 1
        %v2547 = vsel %vm632, %v2544, %v2546
        %v2548 = vrot.slane %v2523, 1
        %v2549 = vsel %vm632, %v2546, %v2548
        %v2550 = vrot.slane %v2524, 1
        %v2551 = vsel %vm632, %v2548, %v2550
        %v2552 = vrot.slane %v2525, 1
        %v2553 = vsel %vm632, %v2550, %v2552
        %v2554 = vrot.slane %v2526, 1
        %v2555 = vsel %vm632, %v2552, %v2554
        %2556 = vrot.lane.b32.xlu0 %v2539, 32
        %v2557 = vpop.permute.xlu0 %2556
        %2558 = vrot.lane.b32.xlu0 %v2541, 32
        %v2559 = vpop.permute.xlu0 %2558
        %2560 = vrot.lane.b32.xlu0 %v2543, 32
        %v2561 = vpop.permute.xlu0 %2560
        %2562 = vrot.lane.b32.xlu0 %v2545, 32
        %v2563 = vpop.permute.xlu0 %2562
        %2564 = vrot.lane.b32.xlu0 %v2547, 32
        %v2565 = vpop.permute.xlu0 %2564
        %2566 = vrot.lane.b32.xlu0 %v2549, 32
        %v2567 = vpop.permute.xlu0 %2566
        %2568 = vrot.lane.b32.xlu0 %v2551, 32
        %v2569 = vpop.permute.xlu0 %2568
        %2570 = vrot.lane.b32.xlu0 %v2553, 32
        %v2571 = vpop.permute.xlu0 %2570
        %2572 = vrot.lane.b32.xlu0 %v2555, 32
        %v2573 = vpop.permute.xlu0 %2572
        %2574 = vrot.lane.b32.xlu0 %v2554, 32
        %v2575 = vpop.permute.xlu0 %2574
        %v2586 = vrot.slane %v2517, 2
        %v2587 = vrot.slane %v2518, 2
        %v2588 = vsel %vm692, %v2586, %v2587
        %v2589 = vrot.slane %v2519, 2
        %v2590 = vsel %vm692, %v2587, %v2589
        %v2591 = vrot.slane %v2520, 2
        %v2592 = vsel %vm692, %v2589, %v2591
        %v2593 = vrot.slane %v2521, 2
        %v2594 = vsel %vm692, %v2591, %v2593
        %v2595 = vrot.slane %v2522, 2
        %v2596 = vsel %vm692, %v2593, %v2595
        %v2597 = vrot.slane %v2523, 2
        %v2598 = vsel %vm692, %v2595, %v2597
        %v2599 = vrot.slane %v2524, 2
        %v2600 = vsel %vm692, %v2597, %v2599
        %v2601 = vrot.slane %v2525, 2
        %v2602 = vsel %vm692, %v2599, %v2601
        %v2603 = vrot.slane %v2526, 2
        %v2604 = vsel %vm692, %v2601, %v2603
        %2605 = vrot.lane.b32.xlu0 %v2588, 64
        %v2606 = vpop.permute.xlu0 %2605
        %2607 = vrot.lane.b32.xlu0 %v2590, 64
        %v2608 = vpop.permute.xlu0 %2607
        %2609 = vrot.lane.b32.xlu0 %v2592, 64
        %v2610 = vpop.permute.xlu0 %2609
        %2611 = vrot.lane.b32.xlu0 %v2594, 64
        %v2612 = vpop.permute.xlu0 %2611
        %2613 = vrot.lane.b32.xlu0 %v2596, 64
        %v2614 = vpop.permute.xlu0 %2613
        %2615 = vrot.lane.b32.xlu0 %v2598, 64
        %v2616 = vpop.permute.xlu0 %2615
        %2617 = vrot.lane.b32.xlu0 %v2600, 64
        %v2618 = vpop.permute.xlu0 %2617
        %2619 = vrot.lane.b32.xlu0 %v2602, 64
        %v2620 = vpop.permute.xlu0 %2619
        %2621 = vrot.lane.b32.xlu0 %v2604, 64
        %v2622 = vpop.permute.xlu0 %2621
        %2623 = vrot.lane.b32.xlu0 %v2603, 64
        %v2624 = vpop.permute.xlu0 %2623
        %v2635 = vsel %vm752, %v2517, %v2557
        %v2636 = vsel %vm752, %v2518, %v2559
        %v2637 = vsel %vm752, %v2519, %v2561
        %v2638 = vsel %vm752, %v2520, %v2563
        %v2639 = vsel %vm752, %v2521, %v2565
        %v2640 = vsel %vm752, %v2522, %v2567
        %v2641 = vsel %vm752, %v2523, %v2569
        %v2642 = vsel %vm752, %v2524, %v2571
        %v2643 = vsel %vm752, %v2525, %v2573
        %v2644 = vsel %vm752, %v2526, %v2575
        %v2645 = vsel %vm765, %v2635, %v2606
        %v2646 = vsel %vm765, %v2636, %v2608
        %v2647 = vsel %vm765, %v2637, %v2610
        %v2648 = vsel %vm765, %v2638, %v2612
        %v2649 = vsel %vm765, %v2639, %v2614
        %v2650 = vsel %vm765, %v2640, %v2616
        %v2651 = vsel %vm765, %v2641, %v2618
        %v2652 = vsel %vm765, %v2642, %v2620
        %v2653 = vsel %vm765, %v2643, %v2622
        %v2654 = vsel %vm765, %v2644, %v2624
        %s2655 = scalar_lea.vmem %s5, 192
        %v2656 = vld [vmem:[%s2655] sm:$0xff]
        %v2657 = vld [vmem:[%s2655 + $0x8] sm:$0xff]
        %v2658 = vld [vmem:[%s2655 + $0x10] sm:$0xff]
        %v2659 = vld [vmem:[%s2655 + $0x18] sm:$0xff]
        %v2660 = vld [vmem:[%s2655 + $0x20] sm:$0xff]
        %v2661 = vld [vmem:[%s2655 + $0x28] sm:$0xff]
        %v2662 = vld [vmem:[%s2655 + $0x30] sm:$0xff]
        %v2663 = vld [vmem:[%s2655 + $0x38] sm:$0xff]
        %v2664 = vld [vmem:[%s2655 + $0x40] sm:$0xff]
        %v2665 = vld [vmem:[%s2655 + $0x48] sm:$0xff]
        %v2666 = vld [vmem:[%s2655 + $0x50] sm:$0xff]
        %v2667 = vld [vmem:[%s2655 + $0x58] sm:$0xff]
        %s2668 = scalar_lea.vmem %s6, 2
        %v2669 = vld [vmem:[%s2668] sm:$0x1]
        %v2671 = vperm.slane %v2669, 0
        %v2683 = vrot.slane %v2645, 3
        %v2684 = vrot.slane %v2646, 3
        %v2685 = vsel %vm1429, %v2683, %v2684
        %v2686 = vrot.slane %v2647, 3
        %v2687 = vsel %vm1429, %v2684, %v2686
        %v2688 = vrot.slane %v2648, 3
        %v2689 = vsel %vm1429, %v2686, %v2688
        %v2690 = vrot.slane %v2649, 3
        %v2691 = vsel %vm1429, %v2688, %v2690
        %v2692 = vrot.slane %v2650, 3
        %v2693 = vsel %vm1429, %v2690, %v2692
        %v2694 = vrot.slane %v2651, 3
        %v2695 = vsel %vm1429, %v2692, %v2694
        %v2696 = vrot.slane %v2652, 3
        %v2697 = vsel %vm1429, %v2694, %v2696
        %v2698 = vrot.slane %v2653, 3
        %v2699 = vsel %vm1429, %v2696, %v2698
        %v2700 = vrot.slane %v2654, 3
        %v2701 = vsel %vm1429, %v2698, %v2700
        %v2702 = vsel %vm794, %v2685, 0
        %v2704 = vsel %vm794, %v2687, 0
        %v2706 = vsel %vm794, %v2689, 0
        %v2708 = vsel %vm794, %v2691, 0
        %v2710 = vsel %vm794, %v2693, 0
        %v2712 = vsel %vm794, %v2695, 0
        %v2714 = vsel %vm794, %v2697, 0
        %v2716 = vsel %vm794, %v2699, 0
        %v2718 = vsel %vm794, %v2701, 0
        %2720 = vmatpush.msra.mxu0 0.0
        %2721 = vmatpush.msra.mxu0 0.0
        %2722 = vmatpush.msra.mxu0 0.0
        %2723 = vmatpush.msra.mxu0 0.0
        %2724 = vmatpush.msra.mxu0 %v2667
        %2725 = vmatpush.msra.mxu0 %v2666
        %2726 = vmatpush.msra.mxu0 %v2665
        %2727 = vmatpush.msra.mxu0 %v2664
        %2728 = vmatpush.msra.mxu0 %v2663
        %2729 = vmatpush.msra.mxu0 %v2662
        %2730 = vmatpush.msra.mxu0 %v2661
        %2731 = vmatpush.msra.mxu0 %v2660
        %2732 = vmatpush.msra.mxu0 %v2659
        %2733 = vmatpush.msra.mxu0 %v2658
        %2734 = vmatpush.msra.mxu0 %v2657
        %2735 = vmatpush.msra.mxu0 %v2656
        %2736 = vmatmul.f32.gmra.mxu0 %v2702
        %v2737 = vpop.f32.mrf.mxu0
        %v2738 = vadd.f32 %v2671, %v2737
        %2739 = vmatmul.f32.gmra.mxu0 %v2704
        %v2740 = vpop.f32.mrf.mxu0
        %v2741 = vadd.f32 %v2671, %v2740
        %2742 = vmatmul.f32.gmra.mxu0 %v2706
        %v2743 = vpop.f32.mrf.mxu0
        %v2744 = vadd.f32 %v2671, %v2743
        %2745 = vmatmul.f32.gmra.mxu0 %v2708
        %v2746 = vpop.f32.mrf.mxu0
        %v2747 = vadd.f32 %v2671, %v2746
        %2748 = vmatmul.f32.gmra.mxu0 %v2710
        %v2749 = vpop.f32.mrf.mxu0
        %v2750 = vadd.f32 %v2671, %v2749
        %2751 = vmatmul.f32.gmra.mxu0 %v2712
        %v2752 = vpop.f32.mrf.mxu0
        %v2753 = vadd.f32 %v2671, %v2752
        %2754 = vmatmul.f32.gmra.mxu0 %v2714
        %v2755 = vpop.f32.mrf.mxu0
        %v2756 = vadd.f32 %v2671, %v2755
        %2757 = vmatmul.f32.gmra.mxu0 %v2716
        %v2758 = vpop.f32.mrf.mxu0
        %v2759 = vadd.f32 %v2671, %v2758
        %2760 = vmatmul.f32.gmra.mxu0 %v2718
        %v2761 = vpop.f32.mrf.mxu0
        %v2762 = vadd.f32 %v2671, %v2761
        %2763 = vdwg.mxu0
        %vm2774 = vcmask 1043456
        %v2775 = vrot.slane %v2158, 4
        %v2776 = vrot.slane %v2159, 4
        %v2777 = vsel %vm2774, %v2775, %v2776
        %v2778 = vrot.slane %v2160, 4
        %v2779 = vsel %vm2774, %v2776, %v2778
        %v2780 = vrot.slane %v2161, 4
        %v2781 = vsel %vm2774, %v2778, %v2780
        %v2782 = vrot.slane %v2162, 4
        %v2783 = vsel %vm2774, %v2780, %v2782
        %v2784 = vrot.slane %v2163, 4
        %v2785 = vsel %vm2774, %v2782, %v2784
        %v2786 = vrot.slane %v2164, 4
        %v2787 = vsel %vm2774, %v2784, %v2786
        %v2788 = vrot.slane %v2165, 4
        %v2789 = vsel %vm2774, %v2786, %v2788
        %v2790 = vrot.slane %v2166, 4
        %v2791 = vsel %vm2774, %v2788, %v2790
        %v2792 = vrot.slane %v2167, 4
        %v2793 = vsel %vm2774, %v2790, %v2792
        %v2803 = vadd.f32 %v2738, %v2777
        %v2804 = vadd.f32 %v2741, %v2779
        %v2805 = vadd.f32 %v2744, %v2781
        %v2806 = vadd.f32 %v2747, %v2783
        %v2807 = vadd.f32 %v2750, %v2785
        %v2808 = vadd.f32 %v2753, %v2787
        %v2809 = vadd.f32 %v2756, %v2789
        %v2810 = vadd.f32 %v2759, %v2791
        %v2811 = vadd.f32 %v2762, %v2793
        %v2821 = vrot.slane %v2803, 4
        %v2822 = vrot.slane %v2804, 4
        %v2823 = vsel %vm2774, %v2821, %v2822
        %v2824 = vrot.slane %v2805, 4
        %v2825 = vsel %vm2774, %v2822, %v2824
        %v2826 = vrot.slane %v2806, 4
        %v2827 = vsel %vm2774, %v2824, %v2826
        %v2828 = vrot.slane %v2807, 4
        %v2829 = vsel %vm2774, %v2826, %v2828
        %v2830 = vrot.slane %v2808, 4
        %v2831 = vsel %vm2774, %v2828, %v2830
        %v2832 = vrot.slane %v2809, 4
        %v2833 = vsel %vm2774, %v2830, %v2832
        %v2834 = vrot.slane %v2810, 4
        %v2835 = vsel %vm2774, %v2832, %v2834
        %v2836 = vrot.slane %v2811, 4
        %v2837 = vsel %vm2774, %v2834, %v2836
        %v2846 = vsel %vm562, %v2823, 0.0
        %v2847 = vsel %vm563, %v2825, 0.0
        %v2848 = vsel %vm564, %v2827, 0.0
        %v2849 = vsel %vm565, %v2829, 0.0
        %v2850 = vsel %vm566, %v2831, 0.0
        %v2851 = vsel %vm567, %v2833, 0.0
        %v2852 = vsel %vm568, %v2835, 0.0
        %v2853 = vsel %vm569, %v2837, 0.0
        %2854 = vst.msk [vmem:[%s420] sm:$0xff] %vm752, %v2846
        %2855 = vst.msk [vmem:[%s420 + $0x8] sm:$0xff] %vm752, %v2847
        %2856 = vst.msk [vmem:[%s420 + $0x10] sm:$0xff] %vm752, %v2848
        %2857 = vst.msk [vmem:[%s420 + $0x18] sm:$0xff] %vm752, %v2849
        %2858 = vst.msk [vmem:[%s420 + $0x20] sm:$0xff] %vm752, %v2850
        %2859 = vst.msk [vmem:[%s420 + $0x28] sm:$0xff] %vm752, %v2851
        %2860 = vst.msk [vmem:[%s420 + $0x30] sm:$0xff] %vm752, %v2852
        %2861 = vst.msk [vmem:[%s420 + $0x38] sm:$0xff] %vm752, %v2853
        %s2862 = sand.u32 %s224, 1
        %s2863 = sand.u32 %s224, 1
        %s2864 = smul.addr %s2863, 64
        %s2865 = scalar_lea.vmem [#allocation2], %s2864
        // Predicated region
        $region49: #{tpu_custom_call.1} parent=47 // pred_check
          %p2866 = pneg %p234
        $region50: #{tpu_custom_call.1} parent=47 // pred_check_branch
          %2868 = sbr.rel (%p2866) target = $region52
        $region51: #{tpu_custom_call.1} parent=47 // pred_region
          %s2869 = smul.u32 8, %s23
          %s2870 = ssub.s32 25, %s2869
          %p2871 = scmp.lt.s32.totalorder %s2870, 8
          %s2872 = scalar_select %p2871, %s2870, 8
          %s2873 = smul.u32 8, %s2872
          %p2874 = scmp.ne.s32.totalorder 0, %s2873
          %s2875 = smul.addr %s22, 25
          %s2876 = sadd.s32 %s2869, %s2875
          %s2877 = smul.addr %s2876, 8
          %s2878 = scalar_lea.vmem %s7, %s2877
          // Predicated region
          $region53: #{tpu_custom_call.1} parent=51 // pred_check
            %p2879 = pneg %p2874
          $region54: #{tpu_custom_call.1} parent=51 // pred_check_branch
            %2881 = sbr.rel (%p2879) target = $region56
          $region55: #{tpu_custom_call.1} parent=51 // pred_region
            // Predicated region
            $region57: #{tpu_custom_call.1} parent=55 // pred_check
              _
            $region58: #{tpu_custom_call.1} parent=55 // pred_check_branch
              %2883 = sbr.rel (0) target = $region60
            $region59: #{tpu_custom_call.1} parent=55 // pred_region
              // Predicated region
              $region79: #{tpu_custom_call.1} parent=59 // pred_check
                _
              $region80: #{tpu_custom_call.1} parent=59 // pred_check_branch
                %2947 = sbr.rel (0) target = $region82
              $region81: #{tpu_custom_call.1} parent=59 // pred_region
                %s2948 = sshrl.u32 %s2872, 3
                // While loop
                $region83: #{tpu_custom_call.1} parent=81 // loop_pre_header
                  _
                $region84: #{tpu_custom_call.1} parent=81 // loop_header
                  %s2950 = sphi 0, %s2952
                  %p2951 = scmp.ge.s32.totalorder %s2950, %s2948
                  %s2955 = sphi 0, %s2976
                  %s2956 = sphi %s2865, %s2979
                  %s2957 = sphi %s2878, %s2980
                $region85: #{tpu_custom_call.1} parent=81 // loop_header_branch
                  %2954 = sbr.rel (%p2951) target = $region89
                $region86: #{tpu_custom_call.1} parent=81 // loop_body
                  %v2958 = vld [vmem:[%s2956] sm:$0xff]
                  %2959 = vst [vmem:[%s2957] sm:$0xff] %v2958
                  %v2960 = vld [vmem:[%s2956 + $0x8] sm:$0xff]
                  %2961 = vst [vmem:[%s2957 + $0x8] sm:$0xff] %v2960
                  %v2962 = vld [vmem:[%s2956 + $0x10] sm:$0xff]
                  %2963 = vst [vmem:[%s2957 + $0x10] sm:$0xff] %v2962
                  %v2964 = vld [vmem:[%s2956 + $0x18] sm:$0xff]
                  %2965 = vst [vmem:[%s2957 + $0x18] sm:$0xff] %v2964
                  %v2966 = vld [vmem:[%s2956 + $0x20] sm:$0xff]
                  %2967 = vst [vmem:[%s2957 + $0x20] sm:$0xff] %v2966
                  %v2968 = vld [vmem:[%s2956 + $0x28] sm:$0xff]
                  %2969 = vst [vmem:[%s2957 + $0x28] sm:$0xff] %v2968
                  %v2970 = vld [vmem:[%s2956 + $0x30] sm:$0xff]
                  %2971 = vst [vmem:[%s2957 + $0x30] sm:$0xff] %v2970
                  %v2972 = vld [vmem:[%s2956 + $0x38] sm:$0xff]
                  %2973 = vst [vmem:[%s2957 + $0x38] sm:$0xff] %v2972
                  %s2974 = sadd.s32 1, %s2955
                  %p2975 = scmp.ge.s32.totalorder %s2974, %s2948
                  %s2976 = scalar_select %p2975, 0, %s2974
                  %s2977 = smul.u32 %s2976, 64
                  %s2978 = smul.u32 %s2976, 64
                  %s2979 = scalar_lea.vmem %s2865, %s2977 [#allocation2]
                  %s2980 = scalar_lea.vmem %s2878, %s2978
                $region87: #{tpu_custom_call.1} parent=81 // loop_footer
                  %s2952 = sadd.s32 %s2950, 1
                $region88: #{tpu_custom_call.1} parent=81 // loop_footer_branch
                  %2949 = sbr.rel target = $region84
                $region89: #{tpu_custom_call.1} parent=81 // loop_exit
                  _
                %s2981 = sshrl.u32 %s2872, 3
                %s2982 = sand.u32 %s2872, 7
                %s2983 = smul.u32 %s2981, 8
                %s2984 = smul.u32 8, %s2983
                %s2985 = scalar_lea.vmem %s2865, %s2984 [#allocation2]
                %s2986 = smul.u32 8, %s2983
                %s2987 = scalar_lea.vmem %s2878, %s2986
                // While loop
                $region90: #{tpu_custom_call.1} parent=81 // loop_pre_header
                  _
                $region91: #{tpu_custom_call.1} parent=81 // loop_header
                  %s2989 = sphi 0, %s2991
                  %p2990 = scmp.ge.s32.totalorder %s2989, %s2982
                  %s2994 = sphi 0, %s3001
                  %s2995 = sphi %s2985, %s3004
                  %s2996 = sphi %s2987, %s3005
                $region92: #{tpu_custom_call.1} parent=81 // loop_header_branch
                  %2993 = sbr.rel (%p2990) target = $region96
                $region93: #{tpu_custom_call.1} parent=81 // loop_body
                  %v2997 = vld [vmem:[%s2995] sm:$0xff]
                  %2998 = vst [vmem:[%s2996] sm:$0xff] %v2997
                  %s2999 = sadd.s32 1, %s2994
                  %p3000 = scmp.ge.s32.totalorder %s2999, %s2982
                  %s3001 = scalar_select %p3000, 0, %s2999
                  %s3002 = smul.u32 %s3001, 8
                  %s3003 = smul.u32 %s3001, 8
                  %s3004 = scalar_lea.vmem %s2985, %s3002 [#allocation2]
                  %s3005 = scalar_lea.vmem %s2987, %s3003
                $region94: #{tpu_custom_call.1} parent=81 // loop_footer
                  %s2991 = sadd.s32 %s2989, 1
                $region95: #{tpu_custom_call.1} parent=81 // loop_footer_branch
                  %2988 = sbr.rel target = $region91
                $region96: #{tpu_custom_call.1} parent=81 // loop_exit
                  _
              $region82: #{tpu_custom_call.1} parent=59 // pred_fallthru
                _
              // Predicated region
              $region97: #{tpu_custom_call.1} parent=59 // pred_check
                _
              $region98: #{tpu_custom_call.1} parent=59 // pred_check_branch
                %3007 = sbr.rel target = $region100
              $region99: #{tpu_custom_call.1} parent=59 // pred_region
                _
              $region100: #{tpu_custom_call.1} parent=59 // pred_fallthru
                _
            $region60: #{tpu_custom_call.1} parent=55 // pred_fallthru
              _
            // Predicated region
            $region61: #{tpu_custom_call.1} parent=55 // pred_check
              _
            $region62: #{tpu_custom_call.1} parent=55 // pred_check_branch
              %2885 = sbr.rel target = $region64
            $region63: #{tpu_custom_call.1} parent=55 // pred_region
              %s2887 = ssub.s32 256, 1
              %s2888 = sshrl.u32 %s2872, 3
              // While loop
              $region65: #{tpu_custom_call.1} parent=63 // loop_pre_header
                _
              $region66: #{tpu_custom_call.1} parent=63 // loop_header
                %s2890 = sphi 0, %s2892
                %p2891 = scmp.ge.s32.totalorder %s2890, %s2888
                %s2895 = sphi 0, %s2916
                %s2896 = sphi %s2865, %s2919
                %s2897 = sphi %s2878, %s2920
              $region67: #{tpu_custom_call.1} parent=63 // loop_header_branch
                %2894 = sbr.rel (%p2891) target = $region71
              $region68: #{tpu_custom_call.1} parent=63 // loop_body
                %v2898 = vld [vmem:[%s2896] sm:%s2887]
                %2899 = vst [vmem:[%s2897] sm:%s2887] %v2898
                %v2900 = vld [vmem:[%s2896 + $0x8] sm:%s2887]
                %2901 = vst [vmem:[%s2897 + $0x8] sm:%s2887] %v2900
                %v2902 = vld [vmem:[%s2896 + $0x10] sm:%s2887]
                %2903 = vst [vmem:[%s2897 + $0x10] sm:%s2887] %v2902
                %v2904 = vld [vmem:[%s2896 + $0x18] sm:%s2887]
                %2905 = vst [vmem:[%s2897 + $0x18] sm:%s2887] %v2904
                %v2906 = vld [vmem:[%s2896 + $0x20] sm:%s2887]
                %2907 = vst [vmem:[%s2897 + $0x20] sm:%s2887] %v2906
                %v2908 = vld [vmem:[%s2896 + $0x28] sm:%s2887]
                %2909 = vst [vmem:[%s2897 + $0x28] sm:%s2887] %v2908
                %v2910 = vld [vmem:[%s2896 + $0x30] sm:%s2887]
                %2911 = vst [vmem:[%s2897 + $0x30] sm:%s2887] %v2910
                %v2912 = vld [vmem:[%s2896 + $0x38] sm:%s2887]
                %2913 = vst [vmem:[%s2897 + $0x38] sm:%s2887] %v2912
                %s2914 = sadd.s32 1, %s2895
                %p2915 = scmp.ge.s32.totalorder %s2914, %s2888
                %s2916 = scalar_select %p2915, 0, %s2914
                %s2917 = smul.u32 %s2916, 64
                %s2918 = smul.u32 %s2916, 64
                %s2919 = scalar_lea.vmem %s2865, %s2917 [#allocation2]
                %s2920 = scalar_lea.vmem %s2878, %s2918
              $region69: #{tpu_custom_call.1} parent=63 // loop_footer
                %s2892 = sadd.s32 %s2890, 1
              $region70: #{tpu_custom_call.1} parent=63 // loop_footer_branch
                %2889 = sbr.rel target = $region66
              $region71: #{tpu_custom_call.1} parent=63 // loop_exit
                _
              %s2921 = sshrl.u32 %s2872, 3
              %s2922 = sand.u32 %s2872, 7
              %s2923 = smul.u32 %s2921, 8
              %s2924 = smul.u32 8, %s2923
              %s2925 = scalar_lea.vmem %s2865, %s2924 [#allocation2]
              %s2926 = smul.u32 8, %s2923
              %s2927 = scalar_lea.vmem %s2878, %s2926
              // While loop
              $region72: #{tpu_custom_call.1} parent=63 // loop_pre_header
                _
              $region73: #{tpu_custom_call.1} parent=63 // loop_header
                %s2929 = sphi 0, %s2931
                %p2930 = scmp.ge.s32.totalorder %s2929, %s2922
                %s2934 = sphi 0, %s2941
                %s2935 = sphi %s2925, %s2944
                %s2936 = sphi %s2927, %s2945
              $region74: #{tpu_custom_call.1} parent=63 // loop_header_branch
                %2933 = sbr.rel (%p2930) target = $region78
              $region75: #{tpu_custom_call.1} parent=63 // loop_body
                %v2937 = vld [vmem:[%s2935] sm:%s2887]
                %2938 = vst [vmem:[%s2936] sm:%s2887] %v2937
                %s2939 = sadd.s32 1, %s2934
                %p2940 = scmp.ge.s32.totalorder %s2939, %s2922
                %s2941 = scalar_select %p2940, 0, %s2939
                %s2942 = smul.u32 %s2941, 8
                %s2943 = smul.u32 %s2941, 8
                %s2944 = scalar_lea.vmem %s2925, %s2942 [#allocation2]
                %s2945 = scalar_lea.vmem %s2927, %s2943
              $region76: #{tpu_custom_call.1} parent=63 // loop_footer
                %s2931 = sadd.s32 %s2929, 1
              $region77: #{tpu_custom_call.1} parent=63 // loop_footer_branch
                %2928 = sbr.rel target = $region73
              $region78: #{tpu_custom_call.1} parent=63 // loop_exit
                _
            $region64: #{tpu_custom_call.1} parent=55 // pred_fallthru
              _
          $region56: #{tpu_custom_call.1} parent=51 // pred_fallthru
            _
          %3008 = vnop
        $region52: #{tpu_custom_call.1} parent=47 // pred_fallthru
          _
      $region48: #{tpu_custom_call.1} parent=5 // pred_fallthru
        _
      %p3009 = scmp.le.s32.totalorder 2, %s13
      // Predicated region
      $region101: #{tpu_custom_call.1} parent=5 // pred_check
        %p3010 = pneg %p3009
      $region102: #{tpu_custom_call.1} parent=5 // pred_check_branch
        %3012 = sbr.rel (%p3010) target = $region104
      $region103: #{tpu_custom_call.1} parent=5 // pred_region
        %s3013 = ssub.s32 %s13, 2
        // Predicated region
        $region105: #{tpu_custom_call.1} parent=103 // pred_check
          %p3014 = pneg %p240
        $region106: #{tpu_custom_call.1} parent=103 // pred_check_branch
          %3016 = sbr.rel (%p3014) target = $region108
        $region107: #{tpu_custom_call.1} parent=103 // pred_region
          %s3017 = sand.u32 %s225, 1
          %s3018 = sand.u32 %s225, 1
          %s3019 = smul.addr %s3018, 64
          %s3020 = scalar_lea.vmem [#allocation2], %s3019
        $region108: #{tpu_custom_call.1} parent=103 // pred_fallthru
          _
      $region104: #{tpu_custom_call.1} parent=5 // pred_fallthru
        _
    $region6: #{tpu_custom_call.1} parent=1 // loop_footer
      %s17 = sadd.s32 1, %s13
    $region7: #{tpu_custom_call.1} parent=1 // loop_footer_branch
      %12 = sbr.rel target = $region3
    $region8: #{tpu_custom_call.1} parent=1 // loop_exit
      _

// kernel: tpu_custom_call.1
$region0: #{tpu_custom_call.1}
  #allocation0 [shape = 'u32[]', space=smem, size = 0x4, offset = 0x4, fixed_abs, tag = 'smem constant byte address 0x4 - core index']
  #allocation1 [shape = 'u32[72,128]{1,0:T(1,128)}', space=vmem, size = 0x9000, scoped, tag = 'internal scratch']
  %s0 = inlined_call_operand.vmem [shape: f32[2,200,32], index: 0, kind: input, shape index: {}]
  %s1 = inlined_call_operand.vmem [shape: f32[2,200,32], index: 1, kind: input, shape index: {}]
  %s2 = inlined_call_operand.vmem [shape: f32[2,200,32], index: 2, kind: input, shape index: {}]
  %s3 = inlined_call_operand.vmem [shape: f32[3,96,32], index: 3, kind: input, shape index: {}]
  %s4 = inlined_call_operand.vmem [shape: f32[3,1,32], index: 4, kind: input, shape index: {}]
  %s5 = inlined_call_operand.vmem [shape: f32[3,96,32], index: 5, kind: input, shape index: {}]
  %s6 = inlined_call_operand.vmem [shape: f32[3,1,32], index: 6, kind: input, shape index: {}]
  %s7 = inlined_call_operand.vmem [shape: f32[2,200,32], index: 7, kind: output, shape index: {}]
  %s8 = sld [smem:[#allocation0]]
  $region109: #{tpu_custom_call.1} parent=0
    _
  %s10 = ssub.s32 1, %s8
  %s11 = scalar_select 0, %s10, %s8
  $region1: #{tpu_custom_call.1} parent=0
    #allocation2 [shape = 'u8[65536]{0}', space=vmem, size = 0x10000, scoped, tag = 'output window, operand 0']
    loop: start=0, step=1, limit=10
    $region2: #{tpu_custom_call.1} parent=1 // loop_pre_header
      _
    $region3: #{tpu_custom_call.1} parent=1 // loop_header
      %s13 = sphi 0, %s17
      %p14 = scmp.ge.s32.totalorder %s13, 10
      %s20 = sphi 0, %s32
      %s21 = sphi 0, %s28
      %s22 = sphi 0, %s20
      %s23 = sphi 0, %s21
      %s24 = sphi 0, %s22
      %s25 = sphi 0, %s23
      %s37 = sphi 0, %s39
      %s40 = sphi 0, %s37
      %s41 = sphi 0, %s40
      %s57 = sphi 0, %s41
      %s73 = sphi 0, %s75
      %s76 = sphi 0, %s73
      %s77 = sphi 0, %s76
      %s93 = sphi 0, %s77
      %s109 = sphi 0, %s111
      %s112 = sphi 0, %s109
      %s113 = sphi 0, %s112
      %s129 = sphi 0, %s113
      %s133 = sphi 0, %s133
      %s135 = sphi 0, %s133
      %s136 = sphi 0, %s135
      %s150 = sphi 0, %s136
      %s154 = sphi 0, %s154
      %s156 = sphi 0, %s154
      %s157 = sphi 0, %s156
      %s171 = sphi 0, %s157
      %s175 = sphi 0, %s175
      %s177 = sphi 0, %s175
      %s178 = sphi 0, %s177
      %s192 = sphi 0, %s178
      %s196 = sphi 0, %s196
      %s198 = sphi 0, %s196
      %s199 = sphi 0, %s198
      %s213 = sphi 0, %s199
      %s221 = sphi 0, %s223
      %s224 = sphi 0, %s221
      %s225 = sphi 0, %s224
      %s241 = sphi 0, %s225
    $region4: #{tpu_custom_call.1} parent=1 // loop_header_branch
      %16 = sbr.rel (%p14) target = $region8
    $region5: #{tpu_custom_call.1} parent=1 // loop_body
      %s18 = ssub.s32 %s13, 1
      %s19 = ssub.s32 %s13, 2
      %s26 = sadd.s32 1, %s21
      %p27 = scmp.ge.s32.totalorder %s26, 4
      %s28 = scalar_select %p27, 0, %s26
      %s29 = sadd.s32 1, %s20
      %s30 = scalar_select %p27, %s29, %s20
      %p31 = scmp.ge.s32.totalorder %s30, 2
      %s32 = scalar_select %p31, 0, %s30
      %s33 = ssub.s32 %s20, %s32
      %s34 = ssub.s32 %s21, %s28
      %s35 = sor.u32 %s33, %s34
      %p36 = scmp.eq.s32.totalorder %s35, 0
      %s38 = sadd.s32 %s37, 1
      %s39 = scalar_select %p36, %s37, %s38
      %p42 = pneg %p36
      %p43 = scmp.eq.s32.totalorder %s13, 7
      %p44 = por %p42, %p43
      %p45 = scmp.ne.s32.totalorder %s37, %s40
      %p46 = scmp.eq.s32.totalorder %s13, 0
      %p47 = por %p45, %p46
      %p48 = scmp.ne.s32.totalorder %s37, %s40
      %p49 = scmp.eq.s32.totalorder %s18, 7
      %p50 = por %p48, %p49
      %p51 = scmp.ne.s32.totalorder %s40, %s41
      %p52 = scmp.eq.s32.totalorder %s18, 0
      %p53 = por %p51, %p52
      %p54 = scmp.ne.s32.totalorder %s40, %s41
      %p55 = scmp.eq.s32.totalorder %s19, 7
      %p56 = por %p54, %p55
      %p58 = scmp.ne.s32.totalorder %s41, %s57
      %p59 = scmp.eq.s32.totalorder %s19, 0
      %p60 = por %p58, %p59
      %s61 = smul.u32 %s21, 4
      %s62 = ssub.s32 %s61, 1
      %p63 = scmp.gt.s32.totalorder %s62, 0
      %s64 = scalar_select %p63, %s62, 0
      %s65 = smul.u32 %s28, 4
      %s66 = ssub.s32 %s65, 1
      %p67 = scmp.gt.s32.totalorder %s66, 0
      %s68 = scalar_select %p67, %s66, 0
      %s69 = ssub.s32 %s20, %s32
      %s70 = ssub.s32 %s64, %s68
      %s71 = sor.u32 %s69, %s70
      %p72 = scmp.eq.s32.totalorder %s71, 0
      %s74 = sadd.s32 %s73, 1
      %s75 = scalar_select %p72, %s73, %s74
      %p78 = pneg %p72
      %p79 = scmp.eq.s32.totalorder %s13, 7
      %p80 = por %p78, %p79
      %p81 = scmp.ne.s32.totalorder %s73, %s76
      %p82 = scmp.eq.s32.totalorder %s13, 0
      %p83 = por %p81, %p82
      %p84 = scmp.ne.s32.totalorder %s73, %s76
      %p85 = scmp.eq.s32.totalorder %s18, 7
      %p86 = por %p84, %p85
      %p87 = scmp.ne.s32.totalorder %s76, %s77
      %p88 = scmp.eq.s32.totalorder %s18, 0
      %p89 = por %p87, %p88
      %p90 = scmp.ne.s32.totalorder %s76, %s77
      %p91 = scmp.eq.s32.totalorder %s19, 7
      %p92 = por %p90, %p91
      %p94 = scmp.ne.s32.totalorder %s77, %s93
      %p95 = scmp.eq.s32.totalorder %s19, 0
      %p96 = por %p94, %p95
      %s97 = sadd.s32 %s21, 1
      %s98 = smul.u32 %s97, 4
      %p99 = scmp.lt.s32.totalorder %s98, 12
      %s100 = scalar_select %p99, %s98, 12
      %s101 = sadd.s32 %s28, 1
      %s102 = smul.u32 %s101, 4
      %p103 = scmp.lt.s32.totalorder %s102, 12
      %s104 = scalar_select %p103, %s102, 12
      %s105 = ssub.s32 %s20, %s32
      %s106 = ssub.s32 %s100, %s104
      %s107 = sor.u32 %s105, %s106
      %p108 = scmp.eq.s32.totalorder %s107, 0
      %s110 = sadd.s32 %s109, 1
      %s111 = scalar_select %p108, %s109, %s110
      %p114 = pneg %p108
      %p115 = scmp.eq.s32.totalorder %s13, 7
      %p116 = por %p114, %p115
      %p117 = scmp.ne.s32.totalorder %s109, %s112
      %p118 = scmp.eq.s32.totalorder %s13, 0
      %p119 = por %p117, %p118
      %p120 = scmp.ne.s32.totalorder %s109, %s112
      %p121 = scmp.eq.s32.totalorder %s18, 7
      %p122 = por %p120, %p121
      %p123 = scmp.ne.s32.totalorder %s112, %s113
      %p124 = scmp.eq.s32.totalorder %s18, 0
      %p125 = por %p123, %p124
      %p126 = scmp.ne.s32.totalorder %s112, %s113
      %p127 = scmp.eq.s32.totalorder %s19, 7
      %p128 = por %p126, %p127
      %p130 = scmp.ne.s32.totalorder %s113, %s129
      %p131 = scmp.eq.s32.totalorder %s19, 0
      %p132 = por %p130, %p131
      %s134 = sadd.s32 %s133, 1
      %p137 = scmp.eq.s32.totalorder %s13, 7
      %p138 = scmp.ne.s32.totalorder %s133, %s135
      %p139 = scmp.eq.s32.totalorder %s13, 0
      %p140 = por %p138, %p139
      %p141 = scmp.ne.s32.totalorder %s133, %s135
      %p142 = scmp.eq.s32.totalorder %s18, 7
      %p143 = por %p141, %p142
      %p144 = scmp.ne.s32.totalorder %s135, %s136
      %p145 = scmp.eq.s32.totalorder %s18, 0
      %p146 = por %p144, %p145
      %p147 = scmp.ne.s32.totalorder %s135, %s136
      %p148 = scmp.eq.s32.totalorder %s19, 7
      %p149 = por %p147, %p148
      %p151 = scmp.ne.s32.totalorder %s136, %s150
      %p152 = scmp.eq.s32.totalorder %s19, 0
      %p153 = por %p151, %p152
      %s155 = sadd.s32 %s154, 1
      %p158 = scmp.eq.s32.totalorder %s13, 7
      %p159 = scmp.ne.s32.totalorder %s154, %s156
      %p160 = scmp.eq.s32.totalorder %s13, 0
      %p161 = por %p159, %p160
      %p162 = scmp.ne.s32.totalorder %s154, %s156
      %p163 = scmp.eq.s32.totalorder %s18, 7
      %p164 = por %p162, %p163
      %p165 = scmp.ne.s32.totalorder %s156, %s157
      %p166 = scmp.eq.s32.totalorder %s18, 0
      %p167 = por %p165, %p166
      %p168 = scmp.ne.s32.totalorder %s156, %s157
      %p169 = scmp.eq.s32.totalorder %s19, 7
      %p170 = por %p168, %p169
      %p172 = scmp.ne.s32.totalorder %s157, %s171
      %p173 = scmp.eq.s32.totalorder %s19, 0
      %p174 = por %p172, %p173
      %s176 = sadd.s32 %s175, 1
      %p179 = scmp.eq.s32.totalorder %s13, 7
      %p180 = scmp.ne.s32.totalorder %s175, %s177
      %p181 = scmp.eq.s32.totalorder %s13, 0
      %p182 = por %p180, %p181
      %p183 = scmp.ne.s32.totalorder %s175, %s177
      %p184 = scmp.eq.s32.totalorder %s18, 7
      %p185 = por %p183, %p184
      %p186 = scmp.ne.s32.totalorder %s177, %s178
      %p187 = scmp.eq.s32.totalorder %s18, 0
      %p188 = por %p186, %p187
      %p189 = scmp.ne.s32.totalorder %s177, %s178
      %p190 = scmp.eq.s32.totalorder %s19, 7
      %p191 = por %p189, %p190
      %p193 = scmp.ne.s32.totalorder %s178, %s192
      %p194 = scmp.eq.s32.totalorder %s19, 0
      %p195 = por %p193, %p194
      %s197 = sadd.s32 %s196, 1
      %p200 = scmp.eq.s32.totalorder %s13, 7
      %p201 = scmp.ne.s32.totalorder %s196, %s198
      %p202 = scmp.eq.s32.totalorder %s13, 0
      %p203 = por %p201, %p202
      %p204 = scmp.ne.s32.totalorder %s196, %s198
      %p205 = scmp.eq.s32.totalorder %s18, 7
      %p206 = por %p204, %p205
      %p207 = scmp.ne.s32.totalorder %s198, %s199
      %p208 = scmp.eq.s32.totalorder %s18, 0
      %p209 = por %p207, %p208
      %p210 = scmp.ne.s32.totalorder %s198, %s199
      %p211 = scmp.eq.s32.totalorder %s19, 7
      %p212 = por %p210, %p211
      %p214 = scmp.ne.s32.totalorder %s199, %s213
      %p215 = scmp.eq.s32.totalorder %s19, 0
      %p216 = por %p214, %p215
      %s217 = ssub.s32 %s20, %s32
      %s218 = ssub.s32 %s21, %s28
      %s219 = sor.u32 %s217, %s218
      %p220 = scmp.eq.s32.totalorder %s219, 0
      %s222 = sadd.s32 %s221, 1
      %s223 = scalar_select %p220, %s221, %s222
      %p226 = pneg %p220
      %p227 = scmp.eq.s32.totalorder %s13, 7
      %p228 = por %p226, %p227
      %p229 = scmp.ne.s32.totalorder %s221, %s224
      %p230 = scmp.eq.s32.totalorder %s13, 0
      %p231 = por %p229, %p230
      %p232 = scmp.ne.s32.totalorder %s221, %s224
      %p233 = scmp.eq.s32.totalorder %s18, 7
      %p234 = por %p232, %p233
      %p235 = scmp.ne.s32.totalorder %s224, %s225
      %p236 = scmp.eq.s32.totalorder %s18, 0
      %p237 = por %p235, %p236
      %p238 = scmp.ne.s32.totalorder %s224, %s225
      %p239 = scmp.eq.s32.totalorder %s19, 7
      %p240 = por %p238, %p239
      %p242 = scmp.ne.s32.totalorder %s225, %s241
      %p243 = scmp.eq.s32.totalorder %s19, 0
      %p244 = por %p242, %p243
      %p245 = scmp.le.s32.totalorder 1, %s13
      %p246 = scmp.lt.s32.totalorder %s13, 9
      %p247 = pnand %p245, %p246
      %p248 = pneg %p247
      // Predicated region
      $region9: #{tpu_custom_call.1} parent=5 // pred_check
        _
      $region10: #{tpu_custom_call.1} parent=5 // pred_check_branch
        %250 = sbr.rel (%p247) target = $region12
      $region11: #{tpu_custom_call.1} parent=5 // pred_region
        %s251 = ssub.s32 %s13, 1
        // Predicated region
        $region13: #{tpu_custom_call.1} parent=11 // pred_check
          %p252 = pneg %p146
        $region14: #{tpu_custom_call.1} parent=11 // pred_check_branch
          %254 = sbr.rel (%p252) target = $region16
        $region15: #{tpu_custom_call.1} parent=11 // pred_region
          _
        $region16: #{tpu_custom_call.1} parent=11 // pred_fallthru
          _
        // Predicated region
        $region17: #{tpu_custom_call.1} parent=11 // pred_check
          %p255 = pneg %p167
        $region18: #{tpu_custom_call.1} parent=11 // pred_check_branch
          %257 = sbr.rel (%p255) target = $region20
        $region19: #{tpu_custom_call.1} parent=11 // pred_region
          _
        $region20: #{tpu_custom_call.1} parent=11 // pred_fallthru
          _
        // Predicated region
        $region21: #{tpu_custom_call.1} parent=11 // pred_check
          %p258 = pneg %p188
        $region22: #{tpu_custom_call.1} parent=11 // pred_check_branch
          %260 = sbr.rel (%p258) target = $region24
        $region23: #{tpu_custom_call.1} parent=11 // pred_region
          _
        $region24: #{tpu_custom_call.1} parent=11 // pred_fallthru
          _
        // Predicated region
        $region25: #{tpu_custom_call.1} parent=11 // pred_check
          %p261 = pneg %p209
        $region26: #{tpu_custom_call.1} parent=11 // pred_check_branch
          %263 = sbr.rel (%p261) target = $region28
        $region27: #{tpu_custom_call.1} parent=11 // pred_region
          _
        $region28: #{tpu_custom_call.1} parent=11 // pred_fallthru
          _
      $region12: #{tpu_custom_call.1} parent=5 // pred_fallthru
        _
      %p264 = scmp.lt.s32.totalorder %s13, 8
      // Predicated region
      $region29: #{tpu_custom_call.1} parent=5 // pred_check
        %p265 = pneg %p264
      $region30: #{tpu_custom_call.1} parent=5 // pred_check_branch
        %267 = sbr.rel (%p265) target = $region32
      $region31: #{tpu_custom_call.1} parent=5 // pred_region
        // Predicated region
        $region33: #{tpu_custom_call.1} parent=31 // pred_check
          %p268 = pneg %p47
        $region34: #{tpu_custom_call.1} parent=31 // pred_check_branch
          %270 = sbr.rel (%p268) target = $region36
        $region35: #{tpu_custom_call.1} parent=31 // pred_region
          %s271 = smul.u32 8, %s21
          %s272 = ssub.s32 25, %s271
          %p273 = scmp.lt.s32.totalorder %s272, 8
          %s274 = scalar_select %p273, %s272, 8
          %s275 = smul.u32 8, %s274
          %p276 = scmp.lt.s32.totalorder %s20, 1
          %s277 = scalar_select %p276, %s20, 1
          %p278 = scmp.lt.s32.totalorder %s271, 24
          %s279 = scalar_select %p278, %s271, 24
          %s280 = smul.addr %s277, 25
          %s281 = sadd.s32 %s279, %s280
          %s282 = smul.addr %s281, 8
          %s283 = scalar_lea.vmem %s0, %s282
          %s284 = smul.u32 8, %s21
          %s285 = ssub.s32 25, %s284
          %p286 = scmp.lt.s32.totalorder %s285, 8
          %s287 = scalar_select %p286, %s285, 8
          %s288 = smul.u32 8, %s287
        $region36: #{tpu_custom_call.1} parent=31 // pred_fallthru
          _
        // Predicated region
        $region37: #{tpu_custom_call.1} parent=31 // pred_check
          %p289 = pneg %p83
        $region38: #{tpu_custom_call.1} parent=31 // pred_check_branch
          %291 = sbr.rel (%p289) target = $region40
        $region39: #{tpu_custom_call.1} parent=31 // pred_region
          %s292 = smul.u32 %s21, 4
          %s293 = ssub.s32 %s292, 1
          %p294 = scmp.gt.s32.totalorder %s293, 0
          %s295 = scalar_select %p294, %s293, 0
          %s296 = smul.u32 2, %s295
          %s297 = ssub.s32 25, %s296
          %p298 = scmp.lt.s32.totalorder %s297, 2
          %s299 = scalar_select %p298, %s297, 2
          %s300 = smul.u32 8, %s299
          %p301 = scmp.lt.s32.totalorder %s20, 1
          %s302 = scalar_select %p301, %s20, 1
          %p303 = scmp.lt.s32.totalorder %s296, 24
          %s304 = scalar_select %p303, %s296, 24
          %s305 = smul.addr %s302, 25
          %s306 = sadd.s32 %s304, %s305
          %s307 = smul.addr %s306, 8
          %s308 = scalar_lea.vmem %s1, %s307
          %s309 = smul.u32 %s21, 4
          %s310 = ssub.s32 %s309, 1
          %p311 = scmp.gt.s32.totalorder %s310, 0
          %s312 = scalar_select %p311, %s310, 0
          %s313 = smul.u32 2, %s312
          %s314 = ssub.s32 25, %s313
          %p315 = scmp.lt.s32.totalorder %s314, 2
          %s316 = scalar_select %p315, %s314, 2
          %s317 = smul.u32 8, %s316
        $region40: #{tpu_custom_call.1} parent=31 // pred_fallthru
          _
        // Predicated region
        $region41: #{tpu_custom_call.1} parent=31 // pred_check
          %p318 = pneg %p119
        $region42: #{tpu_custom_call.1} parent=31 // pred_check_branch
          %320 = sbr.rel (%p318) target = $region44
        $region43: #{tpu_custom_call.1} parent=31 // pred_region
          %s321 = sadd.s32 %s21, 1
          %s322 = smul.u32 %s321, 4
          %p323 = scmp.lt.s32.totalorder %s322, 12
          %s324 = scalar_select %p323, %s322, 12
          %s325 = smul.u32 2, %s324
          %s326 = ssub.s32 25, %s325
          %p327 = scmp.lt.s32.totalorder %s326, 2
          %s328 = scalar_select %p327, %s326, 2
          %s329 = smul.u32 8, %s328
          %p330 = scmp.lt.s32.totalorder %s20, 1
          %s331 = scalar_select %p330, %s20, 1
          %p332 = scmp.lt.s32.totalorder %s325, 24
          %s333 = scalar_select %p332, %s325, 24
          %s334 = smul.addr %s331, 25
          %s335 = sadd.s32 %s333, %s334
          %s336 = smul.addr %s335, 8
          %s337 = scalar_lea.vmem %s2, %s336
          %s338 = sadd.s32 %s21, 1
          %s339 = smul.u32 %s338, 4
          %p340 = scmp.lt.s32.totalorder %s339, 12
          %s341 = scalar_select %p340, %s339, 12
          %s342 = smul.u32 2, %s341
          %s343 = ssub.s32 25, %s342
          %p344 = scmp.lt.s32.totalorder %s343, 2
          %s345 = scalar_select %p344, %s343, 2
          %s346 = smul.u32 8, %s345
        $region44: #{tpu_custom_call.1} parent=31 // pred_fallthru
          _
      $region32: #{tpu_custom_call.1} parent=5 // pred_fallthru
        _
      %p347 = scmp.le.s32.totalorder 1, %s13
      %p348 = scmp.lt.s32.totalorder %s13, 9
      %p349 = pnand %p347, %p348
      %p350 = pneg %p349
      // Predicated region
      $region45: #{tpu_custom_call.1} parent=5 // pred_check
        _
      $region46: #{tpu_custom_call.1} parent=5 // pred_check_branch
        %352 = sbr.rel (%p349) target = $region48
      $region47: #{tpu_custom_call.1} parent=5 // pred_region
        %s353 = ssub.s32 %s13, 1
        %s354 = smul.u32 8, %s23
        %s355 = ssub.s32 25, %s354
        %p356 = scmp.lt.s32.totalorder %s355, 8
        %s357 = scalar_select %p356, %s355, 8
        %s358 = smul.u32 8, %s357
        %p359 = scmp.lt.s32.totalorder %s22, 1
        %s360 = scalar_select %p359, %s22, 1
        %p361 = scmp.lt.s32.totalorder %s354, 24
        %s362 = scalar_select %p361, %s354, 24
        %s363 = smul.addr %s360, 25
        %s364 = sadd.s32 %s362, %s363
        %s365 = smul.addr %s364, 8
        %s366 = scalar_lea.vmem %s0, %s365
        %p367 = pneg %p53
        %p368 = pneg %p50
        %s369 = smul.u32 %s23, 4
        %s370 = ssub.s32 %s369, 1
        %p371 = scmp.gt.s32.totalorder %s370, 0
        %s372 = scalar_select %p371, %s370, 0
        %s373 = smul.u32 2, %s372
        %s374 = ssub.s32 25, %s373
        %p375 = scmp.lt.s32.totalorder %s374, 2
        %s376 = scalar_select %p375, %s374, 2
        %s377 = smul.u32 8, %s376
        %p378 = scmp.lt.s32.totalorder %s22, 1
        %s379 = scalar_select %p378, %s22, 1
        %p380 = scmp.lt.s32.totalorder %s373, 24
        %s381 = scalar_select %p380, %s373, 24
        %s382 = smul.addr %s379, 25
        %s383 = sadd.s32 %s381, %s382
        %s384 = smul.addr %s383, 8
        %s385 = scalar_lea.vmem %s1, %s384
        %p386 = pneg %p89
        %p387 = pneg %p86
        %s388 = sadd.s32 %s23, 1
        %s389 = smul.u32 %s388, 4
        %p390 = scmp.lt.s32.totalorder %s389, 12
        %s391 = scalar_select %p390, %s389, 12
        %s392 = smul.u32 2, %s391
        %s393 = ssub.s32 25, %s392
        %p394 = scmp.lt.s32.totalorder %s393, 2
        %s395 = scalar_select %p394, %s393, 2
        %s396 = smul.u32 8, %s395
        %p397 = scmp.lt.s32.totalorder %s22, 1
        %s398 = scalar_select %p397, %s22, 1
        %p399 = scmp.lt.s32.totalorder %s392, 24
        %s400 = scalar_select %p399, %s392, 24
        %s401 = smul.addr %s398, 25
        %s402 = sadd.s32 %s400, %s401
        %s403 = smul.addr %s402, 8
        %s404 = scalar_lea.vmem %s2, %s403
        %p405 = pneg %p125
        %p406 = pneg %p122
        %p407 = pneg %p146
        %p408 = pneg %p143
        %p409 = pneg %p167
        %p410 = pneg %p164
        %p411 = pneg %p188
        %p412 = pneg %p185
        %p413 = pneg %p209
        %p414 = pneg %p206
        %p415 = pneg %p237
        %p416 = pneg %p234
        %s417 = sand.u32 %s224, 1
        %s418 = sand.u32 %s224, 1
        %s419 = smul.addr %s418, 64
        %s420 = scalar_lea.vmem [#allocation2], %s419
        %s421 = smul.u32 8, %s23
        %s422 = ssub.s32 25, %s421
        %p423 = scmp.lt.s32.totalorder %s422, 8
        %s424 = scalar_select %p423, %s422, 8
        %s425 = smul.u32 8, %s424
        %p426 = scmp.lt.s32.totalorder %s22, 1
        %s427 = scalar_select %p426, %s22, 1
        %p428 = scmp.lt.s32.totalorder %s421, 24
        %s429 = scalar_select %p428, %s421, 24
        %s430 = smul.addr %s427, 25
        %s431 = sadd.s32 %s429, %s430
        %s432 = smul.addr %s431, 8
        %s433 = scalar_lea.vmem %s0, %s432
        %s434 = smul.u32 8, %s23
        %s435 = ssub.s32 25, %s434
        %p436 = scmp.lt.s32.totalorder %s435, 8
        %s437 = scalar_select %p436, %s435, 8
        %s438 = smul.u32 8, %s437
        %s439 = smul.u32 %s23, 4
        %s440 = ssub.s32 %s439, 1
        %p441 = scmp.gt.s32.totalorder %s440, 0
        %s442 = scalar_select %p441, %s440, 0
        %s443 = smul.u32 2, %s442
        %s444 = ssub.s32 25, %s443
        %p445 = scmp.lt.s32.totalorder %s444, 2
        %s446 = scalar_select %p445, %s444, 2
        %s447 = smul.u32 8, %s446
        %p448 = scmp.lt.s32.totalorder %s22, 1
        %s449 = scalar_select %p448, %s22, 1
        %p450 = scmp.lt.s32.totalorder %s443, 24
        %s451 = scalar_select %p450, %s443, 24
        %s452 = smul.addr %s449, 25
        %s453 = sadd.s32 %s451, %s452
        %s454 = smul.addr %s453, 8
        %s455 = scalar_lea.vmem %s1, %s454
        %s456 = smul.u32 %s23, 4
        %s457 = ssub.s32 %s456, 1
        %p458 = scmp.gt.s32.totalorder %s457, 0
        %s459 = scalar_select %p458, %s457, 0
        %s460 = smul.u32 2, %s459
        %s461 = ssub.s32 25, %s460
        %p462 = scmp.lt.s32.totalorder %s461, 2
        %s463 = scalar_select %p462, %s461, 2
        %s464 = smul.u32 8, %s463
        %s465 = sadd.s32 %s23, 1
        %s466 = smul.u32 %s465, 4
        %p467 = scmp.lt.s32.totalorder %s466, 12
        %s468 = scalar_select %p467, %s466, 12
        %s469 = smul.u32 2, %s468
        %s470 = ssub.s32 25, %s469
        %p471 = scmp.lt.s32.totalorder %s470, 2
        %s472 = scalar_select %p471, %s470, 2
        %s473 = smul.u32 8, %s472
        %p474 = scmp.lt.s32.totalorder %s22, 1
        %s475 = scalar_select %p474, %s22, 1
        %p476 = scmp.lt.s32.totalorder %s469, 24
        %s477 = scalar_select %p476, %s469, 24
        %s478 = smul.addr %s475, 25
        %s479 = sadd.s32 %s477, %s478
        %s480 = smul.addr %s479, 8
        %s481 = scalar_lea.vmem %s2, %s480
        %s482 = sadd.s32 %s23, 1
        %s483 = smul.u32 %s482, 4
        %p484 = scmp.lt.s32.totalorder %s483, 12
        %s485 = scalar_select %p484, %s483, 12
        %s486 = smul.u32 2, %s485
        %s487 = ssub.s32 25, %s486
        %p488 = scmp.lt.s32.totalorder %s487, 2
        %s489 = scalar_select %p488, %s487, 2
        %s490 = smul.u32 8, %s489
        %s491 = smul.u32 8, %s23
        %s492 = ssub.s32 25, %s491
        %p493 = scmp.lt.s32.totalorder %s492, 8
        %s494 = scalar_select %p493, %s492, 8
        %s495 = smul.u32 8, %s494
        %s496 = smul.u32 %s23, 64
        %v497 = vld [vmem:[%s455] sm:$0xff]
        %v498 = vld [vmem:[%s455 + $0x8] sm:$0xff]
        %v499 = vld [vmem:[%s433] sm:$0xff]
        %v500 = vld [vmem:[%s433 + $0x8] sm:$0xff]
        %v501 = vld [vmem:[%s433 + $0x10] sm:$0xff]
        %v502 = vld [vmem:[%s433 + $0x18] sm:$0xff]
        %v503 = vld [vmem:[%s433 + $0x20] sm:$0xff]
        %v504 = vld [vmem:[%s433 + $0x28] sm:$0xff]
        %v505 = vld [vmem:[%s433 + $0x30] sm:$0xff]
        %v506 = vld [vmem:[%s433 + $0x38] sm:$0xff]
        %v507 = vld [vmem:[%s481] sm:$0xff]
        %v508 = vld [vmem:[%s481 + $0x8] sm:$0xff]
        %v509 = vlaneseq
        %v510 = vshrl.u32 %v509, 7
        %v511 = vadd.s32 %v510, 8
        %v512 = vadd.s32 %v510, 16
        %v513 = vadd.s32 %v510, 24
        %v514 = vadd.s32 %v510, 32
        %v515 = vadd.s32 %v510, 40
        %v516 = vadd.s32 %v510, 48
        %v517 = vadd.s32 %v510, 56
        %v518 = vadd.s32 %v510, 64
        %v519 = vadd.s32 %v510, 72
        %v520 = vadd.s32 %v510, 80
        %v521 = vadd.s32 %v510, 88
        %s522 = ssub.s32 %s496, 16
        %v523 = vstv %s522
        %v524 = vadd.s32 %v510, %v523
        %v525 = vadd.s32 %v511, %v523
        %v526 = vadd.s32 %v512, %v523
        %v527 = vadd.s32 %v513, %v523
        %v528 = vadd.s32 %v514, %v523
        %v529 = vadd.s32 %v515, %v523
        %v530 = vadd.s32 %v516, %v523
        %v531 = vadd.s32 %v517, %v523
        %v532 = vadd.s32 %v518, %v523
        %v533 = vadd.s32 %v519, %v523
        %v534 = vadd.s32 %v520, %v523
        %v535 = vadd.s32 %v521, %v523
        %vm536 = vcmp.ge.s32.totalorder %v524, 0
        %vm537 = vcmp.ge.s32.totalorder %v525, 0
        %vm538 = vcmp.ge.s32.totalorder %v526, 0
        %vm539 = vcmp.ge.s32.totalorder %v527, 0
        %vm540 = vcmp.ge.s32.totalorder %v528, 0
        %vm541 = vcmp.ge.s32.totalorder %v529, 0
        %vm542 = vcmp.ge.s32.totalorder %v530, 0
        %vm543 = vcmp.ge.s32.totalorder %v531, 0
        %vm544 = vcmp.ge.s32.totalorder %v532, 0
        %vm545 = vcmp.ge.s32.totalorder %v533, 0
        %vm546 = vcmp.ge.s32.totalorder %v534, 0
        %vm547 = vcmp.ge.s32.totalorder %v535, 0
        %vm548 = vcmp.lt.s32.totalorder %v524, 200
        %vm549 = vcmp.lt.s32.totalorder %v525, 200
        %vm550 = vcmp.lt.s32.totalorder %v526, 200
        %vm551 = vcmp.lt.s32.totalorder %v527, 200
        %vm552 = vcmp.lt.s32.totalorder %v528, 200
        %vm553 = vcmp.lt.s32.totalorder %v529, 200
        %vm554 = vcmp.lt.s32.totalorder %v530, 200
        %vm555 = vcmp.lt.s32.totalorder %v531, 200
        %vm556 = vcmp.lt.s32.totalorder %v532, 200
        %vm557 = vcmp.lt.s32.totalorder %v533, 200
        %vm558 = vcmp.lt.s32.totalorder %v534, 200
        %vm559 = vcmp.lt.s32.totalorder %v535, 200
        %vm560 = vmand %vm536, %vm548
        %vm561 = vmand %vm537, %vm549
        %vm562 = vmand %vm538, %vm550
        %vm563 = vmand %vm539, %vm551
        %vm564 = vmand %vm540, %vm552
        %vm565 = vmand %vm541, %vm553
        %vm566 = vmand %vm542, %vm554
        %vm567 = vmand %vm543, %vm555
        %vm568 = vmand %vm544, %vm556
        %vm569 = vmand %vm545, %vm557
        %vm570 = vmand %vm546, %vm558
        %vm571 = vmand %vm547, %vm559
        %v572 = vsel %vm560, %v497, 0.0
        %v573 = vsel %vm561, %v498, 0.0
        %v574 = vsel %vm562, %v499, 0.0
        %v575 = vsel %vm563, %v500, 0.0
        %v576 = vsel %vm564, %v501, 0.0
        %v577 = vsel %vm565, %v502, 0.0
        %v578 = vsel %vm566, %v503, 0.0
        %v579 = vsel %vm567, %v504, 0.0
        %v580 = vsel %vm568, %v505, 0.0
        %v581 = vsel %vm569, %v506, 0.0
        %v582 = vsel %vm570, %v507, 0.0
        %v583 = vsel %vm571, %v508, 0.0
        %vm584 = vcmp.ge.f32.partialorder %v572, 0.0
        %vm585 = vcmp.ge.f32.partialorder %v573, 0.0
        %vm586 = vcmp.ge.f32.partialorder %v574, 0.0
        %vm587 = vcmp.ge.f32.partialorder %v575, 0.0
        %vm588 = vcmp.ge.f32.partialorder %v576, 0.0
        %vm589 = vcmp.ge.f32.partialorder %v577, 0.0
        %vm590 = vcmp.ge.f32.partialorder %v578, 0.0
        %vm591 = vcmp.ge.f32.partialorder %v579, 0.0
        %vm592 = vcmp.ge.f32.partialorder %v580, 0.0
        %vm593 = vcmp.ge.f32.partialorder %v581, 0.0
        %vm594 = vcmp.ge.f32.partialorder %v582, 0.0
        %vm595 = vcmp.ge.f32.partialorder %v583, 0.0
        %v596 = vmul.f32 %v572, 0.1
        %v597 = vmul.f32 %v573, 0.1
        %v598 = vmul.f32 %v574, 0.1
        %v599 = vmul.f32 %v575, 0.1
        %v600 = vmul.f32 %v576, 0.1
        %v601 = vmul.f32 %v577, 0.1
        %v602 = vmul.f32 %v578, 0.1
        %v603 = vmul.f32 %v579, 0.1
        %v604 = vmul.f32 %v580, 0.1
        %v605 = vmul.f32 %v581, 0.1
        %v606 = vmul.f32 %v582, 0.1
        %v607 = vmul.f32 %v583, 0.1
        %v608 = vsel %vm584, %v572, %v596
        %v609 = vsel %vm585, %v573, %v597
        %v610 = vsel %vm586, %v574, %v598
        %v611 = vsel %vm587, %v575, %v599
        %v612 = vsel %vm588, %v576, %v600
        %v613 = vsel %vm589, %v577, %v601
        %v614 = vsel %vm590, %v578, %v602
        %v615 = vsel %vm591, %v579, %v603
        %v616 = vsel %vm592, %v580, %v604
        %v617 = vsel %vm593, %v581, %v605
        %v618 = vsel %vm594, %v582, %v606
        %v619 = vsel %vm595, %v583, %v607
        %v620 = vld [vmem:[%s3] sm:$0xff]
        %v621 = vld [vmem:[%s3 + $0x8] sm:$0xff]
        %v622 = vld [vmem:[%s3 + $0x10] sm:$0xff]
        %v623 = vld [vmem:[%s3 + $0x18] sm:$0xff]
        %v624 = vld [vmem:[%s3 + $0x20] sm:$0xff]
        %v625 = vld [vmem:[%s3 + $0x28] sm:$0xff]
        %v626 = vld [vmem:[%s3 + $0x30] sm:$0xff]
        %v627 = vld [vmem:[%s3 + $0x38] sm:$0xff]
        %vm640 = vcmask 1046528
        %v641 = vrot.slane %v608, 1
        %v642 = vrot.slane %v609, 1
        %v643 = vsel %vm640, %v641, %v642
        %v644 = vrot.slane %v610, 1
        %v645 = vsel %vm640, %v642, %v644
        %v646 = vrot.slane %v611, 1
        %v647 = vsel %vm640, %v644, %v646
        %v648 = vrot.slane %v612, 1
        %v649 = vsel %vm640, %v646, %v648
        %v650 = vrot.slane %v613, 1
        %v651 = vsel %vm640, %v648, %v650
        %v652 = vrot.slane %v614, 1
        %v653 = vsel %vm640, %v650, %v652
        %v654 = vrot.slane %v615, 1
        %v655 = vsel %vm640, %v652, %v654
        %v656 = vrot.slane %v616, 1
        %v657 = vsel %vm640, %v654, %v656
        %v658 = vrot.slane %v617, 1
        %v659 = vsel %vm640, %v656, %v658
        %v660 = vrot.slane %v618, 1
        %v661 = vsel %vm640, %v658, %v660
        %v662 = vrot.slane %v619, 1
        %v663 = vsel %vm640, %v660, %v662
        %vm664 = vcmask 261120
        %v665 = vsel %vm664, %v643, 0
        %v667 = vsel %vm664, %v645, 0
        %v669 = vsel %vm664, %v647, 0
        %v671 = vsel %vm664, %v649, 0
        %v673 = vsel %vm664, %v651, 0
        %v675 = vsel %vm664, %v653, 0
        %v677 = vsel %vm664, %v655, 0
        %v679 = vsel %vm664, %v657, 0
        %v681 = vsel %vm664, %v659, 0
        %v683 = vsel %vm664, %v661, 0
        %v685 = vsel %vm664, %v663, 0
        %v687 = vsel %vm664, %v662, 0
        %689 = vmatpush.msra.mxu0 0.0
        %690 = vmatpush.msra.mxu0 0.0
        %691 = vmatpush.msra.mxu0 0.0
        %692 = vmatpush.msra.mxu0 0.0
        %693 = vmatpush.msra.mxu0 0.0
        %694 = vmatpush.msra.mxu0 0.0
        %695 = vmatpush.msra.mxu0 0.0
        %696 = vmatpush.msra.mxu0 0.0
        %697 = vmatpush.msra.mxu0 0.0
        %698 = vmatpush.msra.mxu0 0.0
        %699 = vmatpush.msra.mxu0 0.0
        %700 = vmatpush.msra.mxu0 0.0
        %701 = vmatpush.msra.mxu0 %v627
        %702 = vmatpush.msra.mxu0 %v626
        %703 = vmatpush.msra.mxu0 %v625
        %704 = vmatpush.msra.mxu0 %v624
        %705 = vmatmul.f32.gmra.mxu0 %v665
        %v706 = vpop.f32.mrf.mxu0
        %v707 = vadd.f32 0.0, %v706
        %708 = vmatmul.f32.gmra.mxu0 %v667
        %v709 = vpop.f32.mrf.mxu0
        %v710 = vadd.f32 0.0, %v709
        %711 = vmatmul.f32.gmra.mxu0 %v669
        %v712 = vpop.f32.mrf.mxu0
        %v713 = vadd.f32 0.0, %v712
        %714 = vmatmul.f32.gmra.mxu0 %v671
        %v715 = vpop.f32.mrf.mxu0
        %v716 = vadd.f32 0.0, %v715
        %717 = vmatmul.f32.gmra.mxu0 %v673
        %v718 = vpop.f32.mrf.mxu0
        %v719 = vadd.f32 0.0, %v718
        %720 = vmatmul.f32.gmra.mxu0 %v675
        %v721 = vpop.f32.mrf.mxu0
        %v722 = vadd.f32 0.0, %v721
        %723 = vmatmul.f32.gmra.mxu0 %v677
        %v724 = vpop.f32.mrf.mxu0
        %v725 = vadd.f32 0.0, %v724
        %726 = vmatmul.f32.gmra.mxu0 %v679
        %v727 = vpop.f32.mrf.mxu0
        %v728 = vadd.f32 0.0, %v727
        %729 = vmatmul.f32.gmra.mxu0 %v681
        %v730 = vpop.f32.mrf.mxu0
        %v731 = vadd.f32 0.0, %v730
        %732 = vmatmul.f32.gmra.mxu0 %v683
        %v733 = vpop.f32.mrf.mxu0
        %v734 = vadd.f32 0.0, %v733
        %735 = vmatmul.f32.gmra.mxu0 %v685
        %v736 = vpop.f32.mrf.mxu0
        %v737 = vadd.f32 0.0, %v736
        %738 = vmatmul.f32.gmra.mxu0 %v687
        %v739 = vpop.f32.mrf.mxu0
        %v740 = vadd.f32 0.0, %v739
        %741 = vdwg.mxu0
        %v742 = vsel %vm664, %v608, 0
        %v744 = vsel %vm664, %v609, 0
        %v746 = vsel %vm664, %v610, 0
        %v748 = vsel %vm664, %v611, 0
        %v750 = vsel %vm664, %v612, 0
        %v752 = vsel %vm664, %v613, 0
        %v754 = vsel %vm664, %v614, 0
        %v756 = vsel %vm664, %v615, 0
        %v758 = vsel %vm664, %v616, 0
        %v760 = vsel %vm664, %v617, 0
        %v762 = vsel %vm664, %v618, 0
        %v764 = vsel %vm664, %v619, 0
        %766 = vmatpush.msra.mxu0 0.0
        %767 = vmatpush.msra.mxu0 0.0
        %768 = vmatpush.msra.mxu0 0.0
        %769 = vmatpush.msra.mxu0 0.0
        %770 = vmatpush.msra.mxu0 0.0
        %771 = vmatpush.msra.mxu0 0.0
        %772 = vmatpush.msra.mxu0 0.0
        %773 = vmatpush.msra.mxu0 0.0
        %774 = vmatpush.msra.mxu0 0.0
        %775 = vmatpush.msra.mxu0 0.0
        %776 = vmatpush.msra.mxu0 0.0
        %777 = vmatpush.msra.mxu0 0.0
        %778 = vmatpush.msra.mxu0 %v623
        %779 = vmatpush.msra.mxu0 %v622
        %780 = vmatpush.msra.mxu0 %v621
        %781 = vmatpush.msra.mxu0 %v620
        %782 = vmatmul.f32.gmra.mxu0 %v742
        %v783 = vpop.f32.mrf.mxu0
        %v784 = vadd.f32 %v707, %v783
        %785 = vmatmul.f32.gmra.mxu0 %v744
        %v786 = vpop.f32.mrf.mxu0
        %v787 = vadd.f32 %v710, %v786
        %788 = vmatmul.f32.gmra.mxu0 %v746
        %v789 = vpop.f32.mrf.mxu0
        %v790 = vadd.f32 %v713, %v789
        %791 = vmatmul.f32.gmra.mxu0 %v748
        %v792 = vpop.f32.mrf.mxu0
        %v793 = vadd.f32 %v716, %v792
        %794 = vmatmul.f32.gmra.mxu0 %v750
        %v795 = vpop.f32.mrf.mxu0
        %v796 = vadd.f32 %v719, %v795
        %797 = vmatmul.f32.gmra.mxu0 %v752
        %v798 = vpop.f32.mrf.mxu0
        %v799 = vadd.f32 %v722, %v798
        %800 = vmatmul.f32.gmra.mxu0 %v754
        %v801 = vpop.f32.mrf.mxu0
        %v802 = vadd.f32 %v725, %v801
        %803 = vmatmul.f32.gmra.mxu0 %v756
        %v804 = vpop.f32.mrf.mxu0
        %v805 = vadd.f32 %v728, %v804
        %806 = vmatmul.f32.gmra.mxu0 %v758
        %v807 = vpop.f32.mrf.mxu0
        %v808 = vadd.f32 %v731, %v807
        %809 = vmatmul.f32.gmra.mxu0 %v760
        %v810 = vpop.f32.mrf.mxu0
        %v811 = vadd.f32 %v734, %v810
        %812 = vmatmul.f32.gmra.mxu0 %v762
        %v813 = vpop.f32.mrf.mxu0
        %v814 = vadd.f32 %v737, %v813
        %815 = vmatmul.f32.gmra.mxu0 %v764
        %v816 = vpop.f32.mrf.mxu0
        %v817 = vadd.f32 %v740, %v816
        %818 = vdwg.mxu0
        %v819 = vld [vmem:[%s3 + $0x40] sm:$0xff]
        %v820 = vld [vmem:[%s3 + $0x48] sm:$0xff]
        %v821 = vld [vmem:[%s3 + $0x50] sm:$0xff]
        %v822 = vld [vmem:[%s3 + $0x58] sm:$0xff]
        %vm823 = vcmask 1045504
        %v824 = vrot.slane %v608, 2
        %v825 = vrot.slane %v609, 2
        %v826 = vsel %vm823, %v824, %v825
        %v827 = vrot.slane %v610, 2
        %v828 = vsel %vm823, %v825, %v827
        %v829 = vrot.slane %v611, 2
        %v830 = vsel %vm823, %v827, %v829
        %v831 = vrot.slane %v612, 2
        %v832 = vsel %vm823, %v829, %v831
        %v833 = vrot.slane %v613, 2
        %v834 = vsel %vm823, %v831, %v833
        %v835 = vrot.slane %v614, 2
        %v836 = vsel %vm823, %v833, %v835
        %v837 = vrot.slane %v615, 2
        %v838 = vsel %vm823, %v835, %v837
        %v839 = vrot.slane %v616, 2
        %v840 = vsel %vm823, %v837, %v839
        %v841 = vrot.slane %v617, 2
        %v842 = vsel %vm823, %v839, %v841
        %v843 = vrot.slane %v618, 2
        %v844 = vsel %vm823, %v841, %v843
        %v845 = vrot.slane %v619, 2
        %v846 = vsel %vm823, %v843, %v845
        %v847 = vsel %vm664, %v826, 0
        %v849 = vsel %vm664, %v828, 0
        %v851 = vsel %vm664, %v830, 0
        %v853 = vsel %vm664, %v832, 0
        %v855 = vsel %vm664, %v834, 0
        %v857 = vsel %vm664, %v836, 0
        %v859 = vsel %vm664, %v838, 0
        %v861 = vsel %vm664, %v840, 0
        %v863 = vsel %vm664, %v842, 0
        %v865 = vsel %vm664, %v844, 0
        %v867 = vsel %vm664, %v846, 0
        %v869 = vsel %vm664, %v845, 0
        %871 = vmatpush.msra.mxu0 0.0
        %872 = vmatpush.msra.mxu0 0.0
        %873 = vmatpush.msra.mxu0 0.0
        %874 = vmatpush.msra.mxu0 0.0
        %875 = vmatpush.msra.mxu0 0.0
        %876 = vmatpush.msra.mxu0 0.0
        %877 = vmatpush.msra.mxu0 0.0
        %878 = vmatpush.msra.mxu0 0.0
        %879 = vmatpush.msra.mxu0 0.0
        %880 = vmatpush.msra.mxu0 0.0
        %881 = vmatpush.msra.mxu0 0.0
        %882 = vmatpush.msra.mxu0 0.0
        %883 = vmatpush.msra.mxu0 %v822
        %884 = vmatpush.msra.mxu0 %v821
        %885 = vmatpush.msra.mxu0 %v820
        %886 = vmatpush.msra.mxu0 %v819
        %887 = vmatmul.f32.gmra.mxu0 %v847
        %v888 = vpop.f32.mrf.mxu0
        %v889 = vadd.f32 0.0, %v888
        %890 = vmatmul.f32.gmra.mxu0 %v849
        %v891 = vpop.f32.mrf.mxu0
        %v892 = vadd.f32 0.0, %v891
        %893 = vmatmul.f32.gmra.mxu0 %v851
        %v894 = vpop.f32.mrf.mxu0
        %v895 = vadd.f32 0.0, %v894
        %896 = vmatmul.f32.gmra.mxu0 %v853
        %v897 = vpop.f32.mrf.mxu0
        %v898 = vadd.f32 0.0, %v897
        %899 = vmatmul.f32.gmra.mxu0 %v855
        %v900 = vpop.f32.mrf.mxu0
        %v901 = vadd.f32 0.0, %v900
        %902 = vmatmul.f32.gmra.mxu0 %v857
        %v903 = vpop.f32.mrf.mxu0
        %v904 = vadd.f32 0.0, %v903
        %905 = vmatmul.f32.gmra.mxu0 %v859
        %v906 = vpop.f32.mrf.mxu0
        %v907 = vadd.f32 0.0, %v906
        %908 = vmatmul.f32.gmra.mxu0 %v861
        %v909 = vpop.f32.mrf.mxu0
        %v910 = vadd.f32 0.0, %v909
        %911 = vmatmul.f32.gmra.mxu0 %v863
        %v912 = vpop.f32.mrf.mxu0
        %v913 = vadd.f32 0.0, %v912
        %914 = vmatmul.f32.gmra.mxu0 %v865
        %v915 = vpop.f32.mrf.mxu0
        %v916 = vadd.f32 0.0, %v915
        %917 = vmatmul.f32.gmra.mxu0 %v867
        %v918 = vpop.f32.mrf.mxu0
        %v919 = vadd.f32 0.0, %v918
        %920 = vmatmul.f32.gmra.mxu0 %v869
        %v921 = vpop.f32.mrf.mxu0
        %v922 = vadd.f32 0.0, %v921
        %923 = vdwg.mxu0
        %v924 = vadd.f32 %v784, %v889
        %v925 = vadd.f32 %v787, %v892
        %v926 = vadd.f32 %v790, %v895
        %v927 = vadd.f32 %v793, %v898
        %v928 = vadd.f32 %v796, %v901
        %v929 = vadd.f32 %v799, %v904
        %v930 = vadd.f32 %v802, %v907
        %v931 = vadd.f32 %v805, %v910
        %v932 = vadd.f32 %v808, %v913
        %v933 = vadd.f32 %v811, %v916
        %v934 = vadd.f32 %v814, %v919
        %v935 = vadd.f32 %v817, %v922
        %v936 = vld [vmem:[%s4] sm:$0x1]
        %v938 = vperm.slane %v936, 0
        %v940 = vadd.f32 %v924, %v938
        %v941 = vadd.f32 %v925, %v938
        %v942 = vadd.f32 %v926, %v938
        %v943 = vadd.f32 %v927, %v938
        %v944 = vadd.f32 %v928, %v938
        %v945 = vadd.f32 %v929, %v938
        %v946 = vadd.f32 %v930, %v938
        %v947 = vadd.f32 %v931, %v938
        %v948 = vadd.f32 %v932, %v938
        %v949 = vadd.f32 %v933, %v938
        %v950 = vadd.f32 %v934, %v938
        %v951 = vadd.f32 %v935, %v938
        %vm964 = vcmask 1040384
        %v965 = vrot.slane %v940, 7
        %v966 = vrot.slane %v941, 7
        %v967 = vsel %vm964, %v965, %v966
        %v968 = vrot.slane %v942, 7
        %v969 = vsel %vm964, %v966, %v968
        %v970 = vrot.slane %v943, 7
        %v971 = vsel %vm964, %v968, %v970
        %v972 = vrot.slane %v944, 7
        %v973 = vsel %vm964, %v970, %v972
        %v974 = vrot.slane %v945, 7
        %v975 = vsel %vm964, %v972, %v974
        %v976 = vrot.slane %v946, 7
        %v977 = vsel %vm964, %v974, %v976
        %v978 = vrot.slane %v947, 7
        %v979 = vsel %vm964, %v976, %v978
        %v980 = vrot.slane %v948, 7
        %v981 = vsel %vm964, %v978, %v980
        %v982 = vrot.slane %v949, 7
        %v983 = vsel %vm964, %v980, %v982
        %v984 = vrot.slane %v950, 7
        %v985 = vsel %vm964, %v982, %v984
        %v986 = vrot.slane %v951, 7
        %v987 = vsel %vm964, %v984, %v986
        %v1000 = vsel %vm560, %v965, 0.0
        %v1001 = vsel %vm561, %v967, 0.0
        %v1002 = vsel %vm562, %v969, 0.0
        %v1003 = vsel %vm563, %v971, 0.0
        %v1004 = vsel %vm564, %v973, 0.0
        %v1005 = vsel %vm565, %v975, 0.0
        %v1006 = vsel %vm566, %v977, 0.0
        %v1007 = vsel %vm567, %v979, 0.0
        %v1008 = vsel %vm568, %v981, 0.0
        %v1009 = vsel %vm569, %v983, 0.0
        %v1010 = vsel %vm570, %v985, 0.0
        %v1011 = vsel %vm571, %v987, 0.0
        %vm1012 = vcmp.ge.f32.partialorder %v1000, 0.0
        %vm1013 = vcmp.ge.f32.partialorder %v1001, 0.0
        %vm1014 = vcmp.ge.f32.partialorder %v1002, 0.0
        %vm1015 = vcmp.ge.f32.partialorder %v1003, 0.0
        %vm1016 = vcmp.ge.f32.partialorder %v1004, 0.0
        %vm1017 = vcmp.ge.f32.partialorder %v1005, 0.0
        %vm1018 = vcmp.ge.f32.partialorder %v1006, 0.0
        %vm1019 = vcmp.ge.f32.partialorder %v1007, 0.0
        %vm1020 = vcmp.ge.f32.partialorder %v1008, 0.0
        %vm1021 = vcmp.ge.f32.partialorder %v1009, 0.0
        %vm1022 = vcmp.ge.f32.partialorder %v1010, 0.0
        %vm1023 = vcmp.ge.f32.partialorder %v1011, 0.0
        %v1024 = vmul.f32 %v1000, 0.1
        %v1025 = vmul.f32 %v1001, 0.1
        %v1026 = vmul.f32 %v1002, 0.1
        %v1027 = vmul.f32 %v1003, 0.1
        %v1028 = vmul.f32 %v1004, 0.1
        %v1029 = vmul.f32 %v1005, 0.1
        %v1030 = vmul.f32 %v1006, 0.1
        %v1031 = vmul.f32 %v1007, 0.1
        %v1032 = vmul.f32 %v1008, 0.1
        %v1033 = vmul.f32 %v1009, 0.1
        %v1034 = vmul.f32 %v1010, 0.1
        %v1035 = vmul.f32 %v1011, 0.1
        %v1036 = vsel %vm1012, %v1000, %v1024
        %v1037 = vsel %vm1013, %v1001, %v1025
        %v1038 = vsel %vm1014, %v1002, %v1026
        %v1039 = vsel %vm1015, %v1003, %v1027
        %v1040 = vsel %vm1016, %v1004, %v1028
        %v1041 = vsel %vm1017, %v1005, %v1029
        %v1042 = vsel %vm1018, %v1006, %v1030
        %v1043 = vsel %vm1019, %v1007, %v1031
        %v1044 = vsel %vm1020, %v1008, %v1032
        %v1045 = vsel %vm1021, %v1009, %v1033
        %v1046 = vsel %vm1022, %v1010, %v1034
        %v1047 = vsel %vm1023, %v1011, %v1035
        %v1048 = vld [vmem:[%s5] sm:$0xff]
        %v1049 = vld [vmem:[%s5 + $0x8] sm:$0xff]
        %v1050 = vld [vmem:[%s5 + $0x10] sm:$0xff]
        %v1051 = vld [vmem:[%s5 + $0x18] sm:$0xff]
        %v1052 = vld [vmem:[%s5 + $0x20] sm:$0xff]
        %v1053 = vld [vmem:[%s5 + $0x28] sm:$0xff]
        %v1054 = vld [vmem:[%s5 + $0x30] sm:$0xff]
        %v1055 = vld [vmem:[%s5 + $0x38] sm:$0xff]
        %v1068 = vrot.slane %v1036, 2
        %v1069 = vrot.slane %v1037, 2
        %v1070 = vsel %vm823, %v1068, %v1069
        %v1071 = vrot.slane %v1038, 2
        %v1072 = vsel %vm823, %v1069, %v1071
        %v1073 = vrot.slane %v1039, 2
        %v1074 = vsel %vm823, %v1071, %v1073
        %v1075 = vrot.slane %v1040, 2
        %v1076 = vsel %vm823, %v1073, %v1075
        %v1077 = vrot.slane %v1041, 2
        %v1078 = vsel %vm823, %v1075, %v1077
        %v1079 = vrot.slane %v1042, 2
        %v1080 = vsel %vm823, %v1077, %v1079
        %v1081 = vrot.slane %v1043, 2
        %v1082 = vsel %vm823, %v1079, %v1081
        %v1083 = vrot.slane %v1044, 2
        %v1084 = vsel %vm823, %v1081, %v1083
        %v1085 = vrot.slane %v1045, 2
        %v1086 = vsel %vm823, %v1083, %v1085
        %v1087 = vrot.slane %v1046, 2
        %v1088 = vsel %vm823, %v1085, %v1087
        %v1089 = vrot.slane %v1047, 2
        %v1090 = vsel %vm823, %v1087, %v1089
        %v1091 = vsel %vm664, %v1070, 0
        %v1093 = vsel %vm664, %v1072, 0
        %v1095 = vsel %vm664, %v1074, 0
        %v1097 = vsel %vm664, %v1076, 0
        %v1099 = vsel %vm664, %v1078, 0
        %v1101 = vsel %vm664, %v1080, 0
        %v1103 = vsel %vm664, %v1082, 0
        %v1105 = vsel %vm664, %v1084, 0
        %v1107 = vsel %vm664, %v1086, 0
        %v1109 = vsel %vm664, %v1088, 0
        %v1111 = vsel %vm664, %v1090, 0
        %v1113 = vsel %vm664, %v1089, 0
        %1115 = vmatpush.msra.mxu0 0.0
        %1116 = vmatpush.msra.mxu0 0.0
        %1117 = vmatpush.msra.mxu0 0.0
        %1118 = vmatpush.msra.mxu0 0.0
        %1119 = vmatpush.msra.mxu0 0.0
        %1120 = vmatpush.msra.mxu0 0.0
        %1121 = vmatpush.msra.mxu0 0.0
        %1122 = vmatpush.msra.mxu0 0.0
        %1123 = vmatpush.msra.mxu0 0.0
        %1124 = vmatpush.msra.mxu0 0.0
        %1125 = vmatpush.msra.mxu0 0.0
        %1126 = vmatpush.msra.mxu0 0.0
        %1127 = vmatpush.msra.mxu0 %v1055
        %1128 = vmatpush.msra.mxu0 %v1054
        %1129 = vmatpush.msra.mxu0 %v1053
        %1130 = vmatpush.msra.mxu0 %v1052
        %1131 = vmatmul.f32.gmra.mxu0 %v1091
        %v1132 = vpop.f32.mrf.mxu0
        %v1133 = vadd.f32 0.0, %v1132
        %1134 = vmatmul.f32.gmra.mxu0 %v1093
        %v1135 = vpop.f32.mrf.mxu0
        %v1136 = vadd.f32 0.0, %v1135
        %1137 = vmatmul.f32.gmra.mxu0 %v1095
        %v1138 = vpop.f32.mrf.mxu0
        %v1139 = vadd.f32 0.0, %v1138
        %1140 = vmatmul.f32.gmra.mxu0 %v1097
        %v1141 = vpop.f32.mrf.mxu0
        %v1142 = vadd.f32 0.0, %v1141
        %1143 = vmatmul.f32.gmra.mxu0 %v1099
        %v1144 = vpop.f32.mrf.mxu0
        %v1145 = vadd.f32 0.0, %v1144
        %1146 = vmatmul.f32.gmra.mxu0 %v1101
        %v1147 = vpop.f32.mrf.mxu0
        %v1148 = vadd.f32 0.0, %v1147
        %1149 = vmatmul.f32.gmra.mxu0 %v1103
        %v1150 = vpop.f32.mrf.mxu0
        %v1151 = vadd.f32 0.0, %v1150
        %1152 = vmatmul.f32.gmra.mxu0 %v1105
        %v1153 = vpop.f32.mrf.mxu0
        %v1154 = vadd.f32 0.0, %v1153
        %1155 = vmatmul.f32.gmra.mxu0 %v1107
        %v1156 = vpop.f32.mrf.mxu0
        %v1157 = vadd.f32 0.0, %v1156
        %1158 = vmatmul.f32.gmra.mxu0 %v1109
        %v1159 = vpop.f32.mrf.mxu0
        %v1160 = vadd.f32 0.0, %v1159
        %1161 = vmatmul.f32.gmra.mxu0 %v1111
        %v1162 = vpop.f32.mrf.mxu0
        %v1163 = vadd.f32 0.0, %v1162
        %1164 = vmatmul.f32.gmra.mxu0 %v1113
        %v1165 = vpop.f32.mrf.mxu0
        %v1166 = vadd.f32 0.0, %v1165
        %1167 = vdwg.mxu0
        %v1168 = vrot.slane %v1036, 1
        %v1169 = vrot.slane %v1037, 1
        %v1170 = vsel %vm640, %v1168, %v1169
        %v1171 = vrot.slane %v1038, 1
        %v1172 = vsel %vm640, %v1169, %v1171
        %v1173 = vrot.slane %v1039, 1
        %v1174 = vsel %vm640, %v1171, %v1173
        %v1175 = vrot.slane %v1040, 1
        %v1176 = vsel %vm640, %v1173, %v1175
        %v1177 = vrot.slane %v1041, 1
        %v1178 = vsel %vm640, %v1175, %v1177
        %v1179 = vrot.slane %v1042, 1
        %v1180 = vsel %vm640, %v1177, %v1179
        %v1181 = vrot.slane %v1043, 1
        %v1182 = vsel %vm640, %v1179, %v1181
        %v1183 = vrot.slane %v1044, 1
        %v1184 = vsel %vm640, %v1181, %v1183
        %v1185 = vrot.slane %v1045, 1
        %v1186 = vsel %vm640, %v1183, %v1185
        %v1187 = vrot.slane %v1046, 1
        %v1188 = vsel %vm640, %v1185, %v1187
        %v1189 = vrot.slane %v1047, 1
        %v1190 = vsel %vm640, %v1187, %v1189
        %v1191 = vsel %vm664, %v1170, 0
        %v1193 = vsel %vm664, %v1172, 0
        %v1195 = vsel %vm664, %v1174, 0
        %v1197 = vsel %vm664, %v1176, 0
        %v1199 = vsel %vm664, %v1178, 0
        %v1201 = vsel %vm664, %v1180, 0
        %v1203 = vsel %vm664, %v1182, 0
        %v1205 = vsel %vm664, %v1184, 0
        %v1207 = vsel %vm664, %v1186, 0
        %v1209 = vsel %vm664, %v1188, 0
        %v1211 = vsel %vm664, %v1190, 0
        %v1213 = vsel %vm664, %v1189, 0
        %1215 = vmatpush.msra.mxu0 0.0
        %1216 = vmatpush.msra.mxu0 0.0
        %1217 = vmatpush.msra.mxu0 0.0
        %1218 = vmatpush.msra.mxu0 0.0
        %1219 = vmatpush.msra.mxu0 0.0
        %1220 = vmatpush.msra.mxu0 0.0
        %1221 = vmatpush.msra.mxu0 0.0
        %1222 = vmatpush.msra.mxu0 0.0
        %1223 = vmatpush.msra.mxu0 0.0
        %1224 = vmatpush.msra.mxu0 0.0
        %1225 = vmatpush.msra.mxu0 0.0
        %1226 = vmatpush.msra.mxu0 0.0
        %1227 = vmatpush.msra.mxu0 %v1051
        %1228 = vmatpush.msra.mxu0 %v1050
        %1229 = vmatpush.msra.mxu0 %v1049
        %1230 = vmatpush.msra.mxu0 %v1048
        %1231 = vmatmul.f32.gmra.mxu0 %v1191
        %v1232 = vpop.f32.mrf.mxu0
        %v1233 = vadd.f32 %v1133, %v1232
        %1234 = vmatmul.f32.gmra.mxu0 %v1193
        %v1235 = vpop.f32.mrf.mxu0
        %v1236 = vadd.f32 %v1136, %v1235
        %1237 = vmatmul.f32.gmra.mxu0 %v1195
        %v1238 = vpop.f32.mrf.mxu0
        %v1239 = vadd.f32 %v1139, %v1238
        %1240 = vmatmul.f32.gmra.mxu0 %v1197
        %v1241 = vpop.f32.mrf.mxu0
        %v1242 = vadd.f32 %v1142, %v1241
        %1243 = vmatmul.f32.gmra.mxu0 %v1199
        %v1244 = vpop.f32.mrf.mxu0
        %v1245 = vadd.f32 %v1145, %v1244
        %1246 = vmatmul.f32.gmra.mxu0 %v1201
        %v1247 = vpop.f32.mrf.mxu0
        %v1248 = vadd.f32 %v1148, %v1247
        %1249 = vmatmul.f32.gmra.mxu0 %v1203
        %v1250 = vpop.f32.mrf.mxu0
        %v1251 = vadd.f32 %v1151, %v1250
        %1252 = vmatmul.f32.gmra.mxu0 %v1205
        %v1253 = vpop.f32.mrf.mxu0
        %v1254 = vadd.f32 %v1154, %v1253
        %1255 = vmatmul.f32.gmra.mxu0 %v1207
        %v1256 = vpop.f32.mrf.mxu0
        %v1257 = vadd.f32 %v1157, %v1256
        %1258 = vmatmul.f32.gmra.mxu0 %v1209
        %v1259 = vpop.f32.mrf.mxu0
        %v1260 = vadd.f32 %v1160, %v1259
        %1261 = vmatmul.f32.gmra.mxu0 %v1211
        %v1262 = vpop.f32.mrf.mxu0
        %v1263 = vadd.f32 %v1163, %v1262
        %1264 = vmatmul.f32.gmra.mxu0 %v1213
        %v1265 = vpop.f32.mrf.mxu0
        %v1266 = vadd.f32 %v1166, %v1265
        %1267 = vdwg.mxu0
        %v1268 = vld [vmem:[%s5 + $0x40] sm:$0xff]
        %v1269 = vld [vmem:[%s5 + $0x48] sm:$0xff]
        %v1270 = vld [vmem:[%s5 + $0x50] sm:$0xff]
        %v1271 = vld [vmem:[%s5 + $0x58] sm:$0xff]
        %vm1272 = vcmask 1044480
        %v1273 = vrot.slane %v1036, 3
        %v1274 = vrot.slane %v1037, 3
        %v1275 = vsel %vm1272, %v1273, %v1274
        %v1276 = vrot.slane %v1038, 3
        %v1277 = vsel %vm1272, %v1274, %v1276
        %v1278 = vrot.slane %v1039, 3
        %v1279 = vsel %vm1272, %v1276, %v1278
        %v1280 = vrot.slane %v1040, 3
        %v1281 = vsel %vm1272, %v1278, %v1280
        %v1282 = vrot.slane %v1041, 3
        %v1283 = vsel %vm1272, %v1280, %v1282
        %v1284 = vrot.slane %v1042, 3
        %v1285 = vsel %vm1272, %v1282, %v1284
        %v1286 = vrot.slane %v1043, 3
        %v1287 = vsel %vm1272, %v1284, %v1286
        %v1288 = vrot.slane %v1044, 3
        %v1289 = vsel %vm1272, %v1286, %v1288
        %v1290 = vrot.slane %v1045, 3
        %v1291 = vsel %vm1272, %v1288, %v1290
        %v1292 = vrot.slane %v1046, 3
        %v1293 = vsel %vm1272, %v1290, %v1292
        %v1294 = vrot.slane %v1047, 3
        %v1295 = vsel %vm1272, %v1292, %v1294
        %v1296 = vsel %vm664, %v1275, 0
        %v1298 = vsel %vm664, %v1277, 0
        %v1300 = vsel %vm664, %v1279, 0
        %v1302 = vsel %vm664, %v1281, 0
        %v1304 = vsel %vm664, %v1283, 0
        %v1306 = vsel %vm664, %v1285, 0
        %v1308 = vsel %vm664, %v1287, 0
        %v1310 = vsel %vm664, %v1289, 0
        %v1312 = vsel %vm664, %v1291, 0
        %v1314 = vsel %vm664, %v1293, 0
        %v1316 = vsel %vm664, %v1295, 0
        %v1318 = vsel %vm664, %v1294, 0
        %1320 = vmatpush.msra.mxu0 0.0
        %1321 = vmatpush.msra.mxu0 0.0
        %1322 = vmatpush.msra.mxu0 0.0
        %1323 = vmatpush.msra.mxu0 0.0
        %1324 = vmatpush.msra.mxu0 0.0
        %1325 = vmatpush.msra.mxu0 0.0
        %1326 = vmatpush.msra.mxu0 0.0
        %1327 = vmatpush.msra.mxu0 0.0
        %1328 = vmatpush.msra.mxu0 0.0
        %1329 = vmatpush.msra.mxu0 0.0
        %1330 = vmatpush.msra.mxu0 0.0
        %1331 = vmatpush.msra.mxu0 0.0
        %1332 = vmatpush.msra.mxu0 %v1271
        %1333 = vmatpush.msra.mxu0 %v1270
        %1334 = vmatpush.msra.mxu0 %v1269
        %1335 = vmatpush.msra.mxu0 %v1268
        %1336 = vmatmul.f32.gmra.mxu0 %v1296
        %v1337 = vpop.f32.mrf.mxu0
        %v1338 = vadd.f32 0.0, %v1337
        %1339 = vmatmul.f32.gmra.mxu0 %v1298
        %v1340 = vpop.f32.mrf.mxu0
        %v1341 = vadd.f32 0.0, %v1340
        %1342 = vmatmul.f32.gmra.mxu0 %v1300
        %v1343 = vpop.f32.mrf.mxu0
        %v1344 = vadd.f32 0.0, %v1343
        %1345 = vmatmul.f32.gmra.mxu0 %v1302
        %v1346 = vpop.f32.mrf.mxu0
        %v1347 = vadd.f32 0.0, %v1346
        %1348 = vmatmul.f32.gmra.mxu0 %v1304
        %v1349 = vpop.f32.mrf.mxu0
        %v1350 = vadd.f32 0.0, %v1349
        %1351 = vmatmul.f32.gmra.mxu0 %v1306
        %v1352 = vpop.f32.mrf.mxu0
        %v1353 = vadd.f32 0.0, %v1352
        %1354 = vmatmul.f32.gmra.mxu0 %v1308
        %v1355 = vpop.f32.mrf.mxu0
        %v1356 = vadd.f32 0.0, %v1355
        %1357 = vmatmul.f32.gmra.mxu0 %v1310
        %v1358 = vpop.f32.mrf.mxu0
        %v1359 = vadd.f32 0.0, %v1358
        %1360 = vmatmul.f32.gmra.mxu0 %v1312
        %v1361 = vpop.f32.mrf.mxu0
        %v1362 = vadd.f32 0.0, %v1361
        %1363 = vmatmul.f32.gmra.mxu0 %v1314
        %v1364 = vpop.f32.mrf.mxu0
        %v1365 = vadd.f32 0.0, %v1364
        %1366 = vmatmul.f32.gmra.mxu0 %v1316
        %v1367 = vpop.f32.mrf.mxu0
        %v1368 = vadd.f32 0.0, %v1367
        %1369 = vmatmul.f32.gmra.mxu0 %v1318
        %v1370 = vpop.f32.mrf.mxu0
        %v1371 = vadd.f32 0.0, %v1370
        %1372 = vdwg.mxu0
        %v1373 = vadd.f32 %v1233, %v1338
        %v1374 = vadd.f32 %v1236, %v1341
        %v1375 = vadd.f32 %v1239, %v1344
        %v1376 = vadd.f32 %v1242, %v1347
        %v1377 = vadd.f32 %v1245, %v1350
        %v1378 = vadd.f32 %v1248, %v1353
        %v1379 = vadd.f32 %v1251, %v1356
        %v1380 = vadd.f32 %v1254, %v1359
        %v1381 = vadd.f32 %v1257, %v1362
        %v1382 = vadd.f32 %v1260, %v1365
        %v1383 = vadd.f32 %v1263, %v1368
        %v1384 = vadd.f32 %v1266, %v1371
        %v1385 = vld [vmem:[%s6] sm:$0x1]
        %v1387 = vperm.slane %v1385, 0
        %v1389 = vadd.f32 %v1373, %v1387
        %v1390 = vadd.f32 %v1374, %v1387
        %v1391 = vadd.f32 %v1375, %v1387
        %v1392 = vadd.f32 %v1376, %v1387
        %v1393 = vadd.f32 %v1377, %v1387
        %v1394 = vadd.f32 %v1378, %v1387
        %v1395 = vadd.f32 %v1379, %v1387
        %v1396 = vadd.f32 %v1380, %v1387
        %v1397 = vadd.f32 %v1381, %v1387
        %v1398 = vadd.f32 %v1382, %v1387
        %v1399 = vadd.f32 %v1383, %v1387
        %v1400 = vadd.f32 %v1384, %v1387
        %v1413 = vrot.slane %v572, 2
        %v1414 = vrot.slane %v573, 2
        %v1415 = vsel %vm823, %v1413, %v1414
        %v1416 = vrot.slane %v574, 2
        %v1417 = vsel %vm823, %v1414, %v1416
        %v1418 = vrot.slane %v575, 2
        %v1419 = vsel %vm823, %v1416, %v1418
        %v1420 = vrot.slane %v576, 2
        %v1421 = vsel %vm823, %v1418, %v1420
        %v1422 = vrot.slane %v577, 2
        %v1423 = vsel %vm823, %v1420, %v1422
        %v1424 = vrot.slane %v578, 2
        %v1425 = vsel %vm823, %v1422, %v1424
        %v1426 = vrot.slane %v579, 2
        %v1427 = vsel %vm823, %v1424, %v1426
        %v1428 = vrot.slane %v580, 2
        %v1429 = vsel %vm823, %v1426, %v1428
        %v1430 = vrot.slane %v581, 2
        %v1431 = vsel %vm823, %v1428, %v1430
        %v1432 = vrot.slane %v582, 2
        %v1433 = vsel %vm823, %v1430, %v1432
        %v1434 = vrot.slane %v583, 2
        %v1435 = vsel %vm823, %v1432, %v1434
        %v1448 = vadd.f32 %v1389, %v1415
        %v1449 = vadd.f32 %v1390, %v1417
        %v1450 = vadd.f32 %v1391, %v1419
        %v1451 = vadd.f32 %v1392, %v1421
        %v1452 = vadd.f32 %v1393, %v1423
        %v1453 = vadd.f32 %v1394, %v1425
        %v1454 = vadd.f32 %v1395, %v1427
        %v1455 = vadd.f32 %v1396, %v1429
        %v1456 = vadd.f32 %v1397, %v1431
        %v1457 = vadd.f32 %v1398, %v1433
        %v1458 = vadd.f32 %v1399, %v1435
        %v1459 = vadd.f32 %v1400, %v1434
        %vm1472 = vcmask 1041408
        %v1473 = vrot.slane %v1448, 6
        %v1474 = vrot.slane %v1449, 6
        %v1475 = vsel %vm1472, %v1473, %v1474
        %v1476 = vrot.slane %v1450, 6
        %v1477 = vsel %vm1472, %v1474, %v1476
        %v1478 = vrot.slane %v1451, 6
        %v1479 = vsel %vm1472, %v1476, %v1478
        %v1480 = vrot.slane %v1452, 6
        %v1481 = vsel %vm1472, %v1478, %v1480
        %v1482 = vrot.slane %v1453, 6
        %v1483 = vsel %vm1472, %v1480, %v1482
        %v1484 = vrot.slane %v1454, 6
        %v1485 = vsel %vm1472, %v1482, %v1484
        %v1486 = vrot.slane %v1455, 6
        %v1487 = vsel %vm1472, %v1484, %v1486
        %v1488 = vrot.slane %v1456, 6
        %v1489 = vsel %vm1472, %v1486, %v1488
        %v1490 = vrot.slane %v1457, 6
        %v1491 = vsel %vm1472, %v1488, %v1490
        %v1492 = vrot.slane %v1458, 6
        %v1493 = vsel %vm1472, %v1490, %v1492
        %v1494 = vrot.slane %v1459, 6
        %v1495 = vsel %vm1472, %v1492, %v1494
        %v1508 = vsel %vm560, %v1473, 0.0
        %v1509 = vsel %vm561, %v1475, 0.0
        %v1510 = vsel %vm562, %v1477, 0.0
        %v1511 = vsel %vm563, %v1479, 0.0
        %v1512 = vsel %vm564, %v1481, 0.0
        %v1513 = vsel %vm565, %v1483, 0.0
        %v1514 = vsel %vm566, %v1485, 0.0
        %v1515 = vsel %vm567, %v1487, 0.0
        %v1516 = vsel %vm568, %v1489, 0.0
        %v1517 = vsel %vm569, %v1491, 0.0
        %v1518 = vsel %vm570, %v1493, 0.0
        %v1519 = vsel %vm571, %v1495, 0.0
        %vm1520 = vcmp.ge.f32.partialorder %v1508, 0.0
        %vm1521 = vcmp.ge.f32.partialorder %v1509, 0.0
        %vm1522 = vcmp.ge.f32.partialorder %v1510, 0.0
        %vm1523 = vcmp.ge.f32.partialorder %v1511, 0.0
        %vm1524 = vcmp.ge.f32.partialorder %v1512, 0.0
        %vm1525 = vcmp.ge.f32.partialorder %v1513, 0.0
        %vm1526 = vcmp.ge.f32.partialorder %v1514, 0.0
        %vm1527 = vcmp.ge.f32.partialorder %v1515, 0.0
        %vm1528 = vcmp.ge.f32.partialorder %v1516, 0.0
        %vm1529 = vcmp.ge.f32.partialorder %v1517, 0.0
        %vm1530 = vcmp.ge.f32.partialorder %v1518, 0.0
        %vm1531 = vcmp.ge.f32.partialorder %v1519, 0.0
        %v1532 = vmul.f32 %v1508, 0.1
        %v1533 = vmul.f32 %v1509, 0.1
        %v1534 = vmul.f32 %v1510, 0.1
        %v1535 = vmul.f32 %v1511, 0.1
        %v1536 = vmul.f32 %v1512, 0.1
        %v1537 = vmul.f32 %v1513, 0.1
        %v1538 = vmul.f32 %v1514, 0.1
        %v1539 = vmul.f32 %v1515, 0.1
        %v1540 = vmul.f32 %v1516, 0.1
        %v1541 = vmul.f32 %v1517, 0.1
        %v1542 = vmul.f32 %v1518, 0.1
        %v1543 = vmul.f32 %v1519, 0.1
        %v1544 = vsel %vm1520, %v1508, %v1532
        %v1545 = vsel %vm1521, %v1509, %v1533
        %v1546 = vsel %vm1522, %v1510, %v1534
        %v1547 = vsel %vm1523, %v1511, %v1535
        %v1548 = vsel %vm1524, %v1512, %v1536
        %v1549 = vsel %vm1525, %v1513, %v1537
        %v1550 = vsel %vm1526, %v1514, %v1538
        %v1551 = vsel %vm1527, %v1515, %v1539
        %v1552 = vsel %vm1528, %v1516, %v1540
        %v1553 = vsel %vm1529, %v1517, %v1541
        %v1554 = vsel %vm1530, %v1518, %v1542
        %v1555 = vsel %vm1531, %v1519, %v1543
        %s1556 = scalar_lea.vmem %s3, 96
        %v1557 = vld [vmem:[%s1556] sm:$0xff]
        %v1558 = vld [vmem:[%s1556 + $0x8] sm:$0xff]
        %v1559 = vld [vmem:[%s1556 + $0x10] sm:$0xff]
        %v1560 = vld [vmem:[%s1556 + $0x18] sm:$0xff]
        %v1561 = vld [vmem:[%s1556 + $0x20] sm:$0xff]
        %v1562 = vld [vmem:[%s1556 + $0x28] sm:$0xff]
        %v1563 = vld [vmem:[%s1556 + $0x30] sm:$0xff]
        %v1564 = vld [vmem:[%s1556 + $0x38] sm:$0xff]
        %vm1577 = vcmask 1042432
        %v1578 = vrot.slane %v1544, 5
        %v1579 = vrot.slane %v1545, 5
        %v1580 = vsel %vm1577, %v1578, %v1579
        %v1581 = vrot.slane %v1546, 5
        %v1582 = vsel %vm1577, %v1579, %v1581
        %v1583 = vrot.slane %v1547, 5
        %v1584 = vsel %vm1577, %v1581, %v1583
        %v1585 = vrot.slane %v1548, 5
        %v1586 = vsel %vm1577, %v1583, %v1585
        %v1587 = vrot.slane %v1549, 5
        %v1588 = vsel %vm1577, %v1585, %v1587
        %v1589 = vrot.slane %v1550, 5
        %v1590 = vsel %vm1577, %v1587, %v1589
        %v1591 = vrot.slane %v1551, 5
        %v1592 = vsel %vm1577, %v1589, %v1591
        %v1593 = vrot.slane %v1552, 5
        %v1594 = vsel %vm1577, %v1591, %v1593
        %v1595 = vrot.slane %v1553, 5
        %v1596 = vsel %vm1577, %v1593, %v1595
        %v1597 = vrot.slane %v1554, 5
        %v1598 = vsel %vm1577, %v1595, %v1597
        %v1599 = vrot.slane %v1555, 5
        %v1600 = vsel %vm1577, %v1597, %v1599
        %v1601 = vsel %vm664, %v1580, 0
        %v1603 = vsel %vm664, %v1582, 0
        %v1605 = vsel %vm664, %v1584, 0
        %v1607 = vsel %vm664, %v1586, 0
        %v1609 = vsel %vm664, %v1588, 0
        %v1611 = vsel %vm664, %v1590, 0
        %v1613 = vsel %vm664, %v1592, 0
        %v1615 = vsel %vm664, %v1594, 0
        %v1617 = vsel %vm664, %v1596, 0
        %v1619 = vsel %vm664, %v1598, 0
        %v1621 = vsel %vm664, %v1600, 0
        %1623 = vmatpush.msra.mxu0 0.0
        %1624 = vmatpush.msra.mxu0 0.0
        %1625 = vmatpush.msra.mxu0 0.0
        %1626 = vmatpush.msra.mxu0 0.0
        %1627 = vmatpush.msra.mxu0 0.0
        %1628 = vmatpush.msra.mxu0 0.0
        %1629 = vmatpush.msra.mxu0 0.0
        %1630 = vmatpush.msra.mxu0 0.0
        %1631 = vmatpush.msra.mxu0 0.0
        %1632 = vmatpush.msra.mxu0 0.0
        %1633 = vmatpush.msra.mxu0 0.0
        %1634 = vmatpush.msra.mxu0 0.0
        %1635 = vmatpush.msra.mxu0 %v1564
        %1636 = vmatpush.msra.mxu0 %v1563
        %1637 = vmatpush.msra.mxu0 %v1562
        %1638 = vmatpush.msra.mxu0 %v1561
        %1639 = vmatmul.f32.gmra.mxu0 %v1601
        %v1640 = vpop.f32.mrf.mxu0
        %v1641 = vadd.f32 0.0, %v1640
        %1642 = vmatmul.f32.gmra.mxu0 %v1603
        %v1643 = vpop.f32.mrf.mxu0
        %v1644 = vadd.f32 0.0, %v1643
        %1645 = vmatmul.f32.gmra.mxu0 %v1605
        %v1646 = vpop.f32.mrf.mxu0
        %v1647 = vadd.f32 0.0, %v1646
        %1648 = vmatmul.f32.gmra.mxu0 %v1607
        %v1649 = vpop.f32.mrf.mxu0
        %v1650 = vadd.f32 0.0, %v1649
        %1651 = vmatmul.f32.gmra.mxu0 %v1609
        %v1652 = vpop.f32.mrf.mxu0
        %v1653 = vadd.f32 0.0, %v1652
        %1654 = vmatmul.f32.gmra.mxu0 %v1611
        %v1655 = vpop.f32.mrf.mxu0
        %v1656 = vadd.f32 0.0, %v1655
        %1657 = vmatmul.f32.gmra.mxu0 %v1613
        %v1658 = vpop.f32.mrf.mxu0
        %v1659 = vadd.f32 0.0, %v1658
        %1660 = vmatmul.f32.gmra.mxu0 %v1615
        %v1661 = vpop.f32.mrf.mxu0
        %v1662 = vadd.f32 0.0, %v1661
        %1663 = vmatmul.f32.gmra.mxu0 %v1617
        %v1664 = vpop.f32.mrf.mxu0
        %v1665 = vadd.f32 0.0, %v1664
        %1666 = vmatmul.f32.gmra.mxu0 %v1619
        %v1667 = vpop.f32.mrf.mxu0
        %v1668 = vadd.f32 0.0, %v1667
        %1669 = vmatmul.f32.gmra.mxu0 %v1621
        %v1670 = vpop.f32.mrf.mxu0
        %v1671 = vadd.f32 0.0, %v1670
        %1672 = vdwg.mxu0
        %v1673 = vrot.slane %v1544, 2
        %v1674 = vrot.slane %v1545, 2
        %v1675 = vsel %vm823, %v1673, %v1674
        %v1676 = vrot.slane %v1546, 2
        %v1677 = vsel %vm823, %v1674, %v1676
        %v1678 = vrot.slane %v1547, 2
        %v1679 = vsel %vm823, %v1676, %v1678
        %v1680 = vrot.slane %v1548, 2
        %v1681 = vsel %vm823, %v1678, %v1680
        %v1682 = vrot.slane %v1549, 2
        %v1683 = vsel %vm823, %v1680, %v1682
        %v1684 = vrot.slane %v1550, 2
        %v1685 = vsel %vm823, %v1682, %v1684
        %v1686 = vrot.slane %v1551, 2
        %v1687 = vsel %vm823, %v1684, %v1686
        %v1688 = vrot.slane %v1552, 2
        %v1689 = vsel %vm823, %v1686, %v1688
        %v1690 = vrot.slane %v1553, 2
        %v1691 = vsel %vm823, %v1688, %v1690
        %v1692 = vrot.slane %v1554, 2
        %v1693 = vsel %vm823, %v1690, %v1692
        %v1694 = vsel %vm664, %v1675, 0
        %v1696 = vsel %vm664, %v1677, 0
        %v1698 = vsel %vm664, %v1679, 0
        %v1700 = vsel %vm664, %v1681, 0
        %v1702 = vsel %vm664, %v1683, 0
        %v1704 = vsel %vm664, %v1685, 0
        %v1706 = vsel %vm664, %v1687, 0
        %v1708 = vsel %vm664, %v1689, 0
        %v1710 = vsel %vm664, %v1691, 0
        %v1712 = vsel %vm664, %v1693, 0
        %v1714 = vsel %vm664, %v1692, 0
        %1716 = vmatpush.msra.mxu0 0.0
        %1717 = vmatpush.msra.mxu0 0.0
        %1718 = vmatpush.msra.mxu0 0.0
        %1719 = vmatpush.msra.mxu0 0.0
        %1720 = vmatpush.msra.mxu0 0.0
        %1721 = vmatpush.msra.mxu0 0.0
        %1722 = vmatpush.msra.mxu0 0.0
        %1723 = vmatpush.msra.mxu0 0.0
        %1724 = vmatpush.msra.mxu0 0.0
        %1725 = vmatpush.msra.mxu0 0.0
        %1726 = vmatpush.msra.mxu0 0.0
        %1727 = vmatpush.msra.mxu0 0.0
        %1728 = vmatpush.msra.mxu0 %v1560
        %1729 = vmatpush.msra.mxu0 %v1559
        %1730 = vmatpush.msra.mxu0 %v1558
        %1731 = vmatpush.msra.mxu0 %v1557
        %1732 = vmatmul.f32.gmra.mxu0 %v1694
        %v1733 = vpop.f32.mrf.mxu0
        %v1734 = vadd.f32 %v1641, %v1733
        %1735 = vmatmul.f32.gmra.mxu0 %v1696
        %v1736 = vpop.f32.mrf.mxu0
        %v1737 = vadd.f32 %v1644, %v1736
        %1738 = vmatmul.f32.gmra.mxu0 %v1698
        %v1739 = vpop.f32.mrf.mxu0
        %v1740 = vadd.f32 %v1647, %v1739
        %1741 = vmatmul.f32.gmra.mxu0 %v1700
        %v1742 = vpop.f32.mrf.mxu0
        %v1743 = vadd.f32 %v1650, %v1742
        %1744 = vmatmul.f32.gmra.mxu0 %v1702
        %v1745 = vpop.f32.mrf.mxu0
        %v1746 = vadd.f32 %v1653, %v1745
        %1747 = vmatmul.f32.gmra.mxu0 %v1704
        %v1748 = vpop.f32.mrf.mxu0
        %v1749 = vadd.f32 %v1656, %v1748
        %1750 = vmatmul.f32.gmra.mxu0 %v1706
        %v1751 = vpop.f32.mrf.mxu0
        %v1752 = vadd.f32 %v1659, %v1751
        %1753 = vmatmul.f32.gmra.mxu0 %v1708
        %v1754 = vpop.f32.mrf.mxu0
        %v1755 = vadd.f32 %v1662, %v1754
        %1756 = vmatmul.f32.gmra.mxu0 %v1710
        %v1757 = vpop.f32.mrf.mxu0
        %v1758 = vadd.f32 %v1665, %v1757
        %1759 = vmatmul.f32.gmra.mxu0 %v1712
        %v1760 = vpop.f32.mrf.mxu0
        %v1761 = vadd.f32 %v1668, %v1760
        %1762 = vmatmul.f32.gmra.mxu0 %v1714
        %v1763 = vpop.f32.mrf.mxu0
        %v1764 = vadd.f32 %v1671, %v1763
        %1765 = vdwg.mxu0
        %v1766 = vld [vmem:[%s1556 + $0x40] sm:$0xff]
        %v1767 = vld [vmem:[%s1556 + $0x48] sm:$0xff]
        %v1768 = vld [vmem:[%s1556 + $0x50] sm:$0xff]
        %v1769 = vld [vmem:[%s1556 + $0x58] sm:$0xff]
        %v1770 = vsel %vm664, %v1545, 0
        %v1772 = vsel %vm664, %v1546, 0
        %v1774 = vsel %vm664, %v1547, 0
        %v1776 = vsel %vm664, %v1548, 0
        %v1778 = vsel %vm664, %v1549, 0
        %v1780 = vsel %vm664, %v1550, 0
        %v1782 = vsel %vm664, %v1551, 0
        %v1784 = vsel %vm664, %v1552, 0
        %v1786 = vsel %vm664, %v1553, 0
        %v1788 = vsel %vm664, %v1554, 0
        %v1790 = vsel %vm664, %v1555, 0
        %1792 = vmatpush.msra.mxu0 0.0
        %1793 = vmatpush.msra.mxu0 0.0
        %1794 = vmatpush.msra.mxu0 0.0
        %1795 = vmatpush.msra.mxu0 0.0
        %1796 = vmatpush.msra.mxu0 0.0
        %1797 = vmatpush.msra.mxu0 0.0
        %1798 = vmatpush.msra.mxu0 0.0
        %1799 = vmatpush.msra.mxu0 0.0
        %1800 = vmatpush.msra.mxu0 0.0
        %1801 = vmatpush.msra.mxu0 0.0
        %1802 = vmatpush.msra.mxu0 0.0
        %1803 = vmatpush.msra.mxu0 0.0
        %1804 = vmatpush.msra.mxu0 %v1769
        %1805 = vmatpush.msra.mxu0 %v1768
        %1806 = vmatpush.msra.mxu0 %v1767
        %1807 = vmatpush.msra.mxu0 %v1766
        %1808 = vmatmul.f32.gmra.mxu0 %v1770
        %v1809 = vpop.f32.mrf.mxu0
        %v1810 = vadd.f32 0.0, %v1809
        %1811 = vmatmul.f32.gmra.mxu0 %v1772
        %v1812 = vpop.f32.mrf.mxu0
        %v1813 = vadd.f32 0.0, %v1812
        %1814 = vmatmul.f32.gmra.mxu0 %v1774
        %v1815 = vpop.f32.mrf.mxu0
        %v1816 = vadd.f32 0.0, %v1815
        %1817 = vmatmul.f32.gmra.mxu0 %v1776
        %v1818 = vpop.f32.mrf.mxu0
        %v1819 = vadd.f32 0.0, %v1818
        %1820 = vmatmul.f32.gmra.mxu0 %v1778
        %v1821 = vpop.f32.mrf.mxu0
        %v1822 = vadd.f32 0.0, %v1821
        %1823 = vmatmul.f32.gmra.mxu0 %v1780
        %v1824 = vpop.f32.mrf.mxu0
        %v1825 = vadd.f32 0.0, %v1824
        %1826 = vmatmul.f32.gmra.mxu0 %v1782
        %v1827 = vpop.f32.mrf.mxu0
        %v1828 = vadd.f32 0.0, %v1827
        %1829 = vmatmul.f32.gmra.mxu0 %v1784
        %v1830 = vpop.f32.mrf.mxu0
        %v1831 = vadd.f32 0.0, %v1830
        %1832 = vmatmul.f32.gmra.mxu0 %v1786
        %v1833 = vpop.f32.mrf.mxu0
        %v1834 = vadd.f32 0.0, %v1833
        %1835 = vmatmul.f32.gmra.mxu0 %v1788
        %v1836 = vpop.f32.mrf.mxu0
        %v1837 = vadd.f32 0.0, %v1836
        %1838 = vmatmul.f32.gmra.mxu0 %v1790
        %v1839 = vpop.f32.mrf.mxu0
        %v1840 = vadd.f32 0.0, %v1839
        %1841 = vdwg.mxu0
        %v1842 = vadd.f32 %v1734, %v1810
        %v1843 = vadd.f32 %v1737, %v1813
        %v1844 = vadd.f32 %v1740, %v1816
        %v1845 = vadd.f32 %v1743, %v1819
        %v1846 = vadd.f32 %v1746, %v1822
        %v1847 = vadd.f32 %v1749, %v1825
        %v1848 = vadd.f32 %v1752, %v1828
        %v1849 = vadd.f32 %v1755, %v1831
        %v1850 = vadd.f32 %v1758, %v1834
        %v1851 = vadd.f32 %v1761, %v1837
        %v1852 = vadd.f32 %v1764, %v1840
        %s1853 = scalar_lea.vmem %s4, 1
        %v1854 = vld [vmem:[%s1853] sm:$0x1]
        %v1856 = vperm.slane %v1854, 0
        %v1858 = vadd.f32 %v1842, %v1856
        %v1859 = vadd.f32 %v1843, %v1856
        %v1860 = vadd.f32 %v1844, %v1856
        %v1861 = vadd.f32 %v1845, %v1856
        %v1862 = vadd.f32 %v1846, %v1856
        %v1863 = vadd.f32 %v1847, %v1856
        %v1864 = vadd.f32 %v1848, %v1856
        %v1865 = vadd.f32 %v1849, %v1856
        %v1866 = vadd.f32 %v1850, %v1856
        %v1867 = vadd.f32 %v1851, %v1856
        %v1868 = vadd.f32 %v1852, %v1856
        %v1880 = vrot.slane %v1858, 3
        %v1881 = vrot.slane %v1859, 3
        %v1882 = vsel %vm1272, %v1880, %v1881
        %v1883 = vrot.slane %v1860, 3
        %v1884 = vsel %vm1272, %v1881, %v1883
        %v1885 = vrot.slane %v1861, 3
        %v1886 = vsel %vm1272, %v1883, %v1885
        %v1887 = vrot.slane %v1862, 3
        %v1888 = vsel %vm1272, %v1885, %v1887
        %v1889 = vrot.slane %v1863, 3
        %v1890 = vsel %vm1272, %v1887, %v1889
        %v1891 = vrot.slane %v1864, 3
        %v1892 = vsel %vm1272, %v1889, %v1891
        %v1893 = vrot.slane %v1865, 3
        %v1894 = vsel %vm1272, %v1891, %v1893
        %v1895 = vrot.slane %v1866, 3
        %v1896 = vsel %vm1272, %v1893, %v1895
        %v1897 = vrot.slane %v1867, 3
        %v1898 = vsel %vm1272, %v1895, %v1897
        %v1899 = vrot.slane %v1868, 3
        %v1900 = vsel %vm1272, %v1897, %v1899
        %v1913 = vsel %vm560, %v1880, 0.0
        %v1914 = vsel %vm561, %v1882, 0.0
        %v1915 = vsel %vm562, %v1884, 0.0
        %v1916 = vsel %vm563, %v1886, 0.0
        %v1917 = vsel %vm564, %v1888, 0.0
        %v1918 = vsel %vm565, %v1890, 0.0
        %v1919 = vsel %vm566, %v1892, 0.0
        %v1920 = vsel %vm567, %v1894, 0.0
        %v1921 = vsel %vm568, %v1896, 0.0
        %v1922 = vsel %vm569, %v1898, 0.0
        %v1923 = vsel %vm570, %v1900, 0.0
        %v1924 = vsel %vm571, %v1899, 0.0
        %vm1925 = vcmp.ge.f32.partialorder %v1913, 0.0
        %vm1926 = vcmp.ge.f32.partialorder %v1914, 0.0
        %vm1927 = vcmp.ge.f32.partialorder %v1915, 0.0
        %vm1928 = vcmp.ge.f32.partialorder %v1916, 0.0
        %vm1929 = vcmp.ge.f32.partialorder %v1917, 0.0
        %vm1930 = vcmp.ge.f32.partialorder %v1918, 0.0
        %vm1931 = vcmp.ge.f32.partialorder %v1919, 0.0
        %vm1932 = vcmp.ge.f32.partialorder %v1920, 0.0
        %vm1933 = vcmp.ge.f32.partialorder %v1921, 0.0
        %vm1934 = vcmp.ge.f32.partialorder %v1922, 0.0
        %vm1935 = vcmp.ge.f32.partialorder %v1923, 0.0
        %vm1936 = vcmp.ge.f32.partialorder %v1924, 0.0
        %v1937 = vmul.f32 %v1913, 0.1
        %v1938 = vmul.f32 %v1914, 0.1
        %v1939 = vmul.f32 %v1915, 0.1
        %v1940 = vmul.f32 %v1916, 0.1
        %v1941 = vmul.f32 %v1917, 0.1
        %v1942 = vmul.f32 %v1918, 0.1
        %v1943 = vmul.f32 %v1919, 0.1
        %v1944 = vmul.f32 %v1920, 0.1
        %v1945 = vmul.f32 %v1921, 0.1
        %v1946 = vmul.f32 %v1922, 0.1
        %v1947 = vmul.f32 %v1923, 0.1
        %v1948 = vmul.f32 %v1924, 0.1
        %v1949 = vsel %vm1925, %v1913, %v1937
        %v1950 = vsel %vm1926, %v1914, %v1938
        %v1951 = vsel %vm1927, %v1915, %v1939
        %v1952 = vsel %vm1928, %v1916, %v1940
        %v1953 = vsel %vm1929, %v1917, %v1941
        %v1954 = vsel %vm1930, %v1918, %v1942
        %v1955 = vsel %vm1931, %v1919, %v1943
        %v1956 = vsel %vm1932, %v1920, %v1944
        %v1957 = vsel %vm1933, %v1921, %v1945
        %v1958 = vsel %vm1934, %v1922, %v1946
        %v1959 = vsel %vm1935, %v1923, %v1947
        %v1960 = vsel %vm1936, %v1924, %v1948
        %s1961 = scalar_lea.vmem %s5, 96
        %v1962 = vld [vmem:[%s1961] sm:$0xff]
        %v1963 = vld [vmem:[%s1961 + $0x8] sm:$0xff]
        %v1964 = vld [vmem:[%s1961 + $0x10] sm:$0xff]
        %v1965 = vld [vmem:[%s1961 + $0x18] sm:$0xff]
        %v1966 = vld [vmem:[%s1961 + $0x20] sm:$0xff]
        %v1967 = vld [vmem:[%s1961 + $0x28] sm:$0xff]
        %v1968 = vld [vmem:[%s1961 + $0x30] sm:$0xff]
        %v1969 = vld [vmem:[%s1961 + $0x38] sm:$0xff]
        %v1982 = vrot.slane %v1949, 6
        %v1983 = vrot.slane %v1950, 6
        %v1984 = vsel %vm1472, %v1982, %v1983
        %v1985 = vrot.slane %v1951, 6
        %v1986 = vsel %vm1472, %v1983, %v1985
        %v1987 = vrot.slane %v1952, 6
        %v1988 = vsel %vm1472, %v1985, %v1987
        %v1989 = vrot.slane %v1953, 6
        %v1990 = vsel %vm1472, %v1987, %v1989
        %v1991 = vrot.slane %v1954, 6
        %v1992 = vsel %vm1472, %v1989, %v1991
        %v1993 = vrot.slane %v1955, 6
        %v1994 = vsel %vm1472, %v1991, %v1993
        %v1995 = vrot.slane %v1956, 6
        %v1996 = vsel %vm1472, %v1993, %v1995
        %v1997 = vrot.slane %v1957, 6
        %v1998 = vsel %vm1472, %v1995, %v1997
        %v1999 = vrot.slane %v1958, 6
        %v2000 = vsel %vm1472, %v1997, %v1999
        %v2001 = vrot.slane %v1959, 6
        %v2002 = vsel %vm1472, %v1999, %v2001
        %v2003 = vrot.slane %v1960, 6
        %v2004 = vsel %vm1472, %v2001, %v2003
        %v2005 = vsel %vm664, %v1984, 0
        %v2007 = vsel %vm664, %v1986, 0
        %v2009 = vsel %vm664, %v1988, 0
        %v2011 = vsel %vm664, %v1990, 0
        %v2013 = vsel %vm664, %v1992, 0
        %v2015 = vsel %vm664, %v1994, 0
        %v2017 = vsel %vm664, %v1996, 0
        %v2019 = vsel %vm664, %v1998, 0
        %v2021 = vsel %vm664, %v2000, 0
        %v2023 = vsel %vm664, %v2002, 0
        %v2025 = vsel %vm664, %v2004, 0
        %2027 = vmatpush.msra.mxu0 0.0
        %2028 = vmatpush.msra.mxu0 0.0
        %2029 = vmatpush.msra.mxu0 0.0
        %2030 = vmatpush.msra.mxu0 0.0
        %2031 = vmatpush.msra.mxu0 0.0
        %2032 = vmatpush.msra.mxu0 0.0
        %2033 = vmatpush.msra.mxu0 0.0
        %2034 = vmatpush.msra.mxu0 0.0
        %2035 = vmatpush.msra.mxu0 0.0
        %2036 = vmatpush.msra.mxu0 0.0
        %2037 = vmatpush.msra.mxu0 0.0
        %2038 = vmatpush.msra.mxu0 0.0
        %2039 = vmatpush.msra.mxu0 %v1969
        %2040 = vmatpush.msra.mxu0 %v1968
        %2041 = vmatpush.msra.mxu0 %v1967
        %2042 = vmatpush.msra.mxu0 %v1966
        %2043 = vmatmul.f32.gmra.mxu0 %v2005
        %v2044 = vpop.f32.mrf.mxu0
        %v2045 = vadd.f32 0.0, %v2044
        %2046 = vmatmul.f32.gmra.mxu0 %v2007
        %v2047 = vpop.f32.mrf.mxu0
        %v2048 = vadd.f32 0.0, %v2047
        %2049 = vmatmul.f32.gmra.mxu0 %v2009
        %v2050 = vpop.f32.mrf.mxu0
        %v2051 = vadd.f32 0.0, %v2050
        %2052 = vmatmul.f32.gmra.mxu0 %v2011
        %v2053 = vpop.f32.mrf.mxu0
        %v2054 = vadd.f32 0.0, %v2053
        %2055 = vmatmul.f32.gmra.mxu0 %v2013
        %v2056 = vpop.f32.mrf.mxu0
        %v2057 = vadd.f32 0.0, %v2056
        %2058 = vmatmul.f32.gmra.mxu0 %v2015
        %v2059 = vpop.f32.mrf.mxu0
        %v2060 = vadd.f32 0.0, %v2059
        %2061 = vmatmul.f32.gmra.mxu0 %v2017
        %v2062 = vpop.f32.mrf.mxu0
        %v2063 = vadd.f32 0.0, %v2062
        %2064 = vmatmul.f32.gmra.mxu0 %v2019
        %v2065 = vpop.f32.mrf.mxu0
        %v2066 = vadd.f32 0.0, %v2065
        %2067 = vmatmul.f32.gmra.mxu0 %v2021
        %v2068 = vpop.f32.mrf.mxu0
        %v2069 = vadd.f32 0.0, %v2068
        %2070 = vmatmul.f32.gmra.mxu0 %v2023
        %v2071 = vpop.f32.mrf.mxu0
        %v2072 = vadd.f32 0.0, %v2071
        %2073 = vmatmul.f32.gmra.mxu0 %v2025
        %v2074 = vpop.f32.mrf.mxu0
        %v2075 = vadd.f32 0.0, %v2074
        %2076 = vdwg.mxu0
        %v2077 = vrot.slane %v1949, 5
        %v2078 = vrot.slane %v1950, 5
        %v2079 = vsel %vm1577, %v2077, %v2078
        %v2080 = vrot.slane %v1951, 5
        %v2081 = vsel %vm1577, %v2078, %v2080
        %v2082 = vrot.slane %v1952, 5
        %v2083 = vsel %vm1577, %v2080, %v2082
        %v2084 = vrot.slane %v1953, 5
        %v2085 = vsel %vm1577, %v2082, %v2084
        %v2086 = vrot.slane %v1954, 5
        %v2087 = vsel %vm1577, %v2084, %v2086
        %v2088 = vrot.slane %v1955, 5
        %v2089 = vsel %vm1577, %v2086, %v2088
        %v2090 = vrot.slane %v1956, 5
        %v2091 = vsel %vm1577, %v2088, %v2090
        %v2092 = vrot.slane %v1957, 5
        %v2093 = vsel %vm1577, %v2090, %v2092
        %v2094 = vrot.slane %v1958, 5
        %v2095 = vsel %vm1577, %v2092, %v2094
        %v2096 = vrot.slane %v1959, 5
        %v2097 = vsel %vm1577, %v2094, %v2096
        %v2098 = vrot.slane %v1960, 5
        %v2099 = vsel %vm1577, %v2096, %v2098
        %v2100 = vsel %vm664, %v2079, 0
        %v2102 = vsel %vm664, %v2081, 0
        %v2104 = vsel %vm664, %v2083, 0
        %v2106 = vsel %vm664, %v2085, 0
        %v2108 = vsel %vm664, %v2087, 0
        %v2110 = vsel %vm664, %v2089, 0
        %v2112 = vsel %vm664, %v2091, 0
        %v2114 = vsel %vm664, %v2093, 0
        %v2116 = vsel %vm664, %v2095, 0
        %v2118 = vsel %vm664, %v2097, 0
        %v2120 = vsel %vm664, %v2099, 0
        %2122 = vmatpush.msra.mxu0 0.0
        %2123 = vmatpush.msra.mxu0 0.0
        %2124 = vmatpush.msra.mxu0 0.0
        %2125 = vmatpush.msra.mxu0 0.0
        %2126 = vmatpush.msra.mxu0 0.0
        %2127 = vmatpush.msra.mxu0 0.0
        %2128 = vmatpush.msra.mxu0 0.0
        %2129 = vmatpush.msra.mxu0 0.0
        %2130 = vmatpush.msra.mxu0 0.0
        %2131 = vmatpush.msra.mxu0 0.0
        %2132 = vmatpush.msra.mxu0 0.0
        %2133 = vmatpush.msra.mxu0 0.0
        %2134 = vmatpush.msra.mxu0 %v1965
        %2135 = vmatpush.msra.mxu0 %v1964
        %2136 = vmatpush.msra.mxu0 %v1963
        %2137 = vmatpush.msra.mxu0 %v1962
        %2138 = vmatmul.f32.gmra.mxu0 %v2100
        %v2139 = vpop.f32.mrf.mxu0
        %v2140 = vadd.f32 %v2045, %v2139
        %2141 = vmatmul.f32.gmra.mxu0 %v2102
        %v2142 = vpop.f32.mrf.mxu0
        %v2143 = vadd.f32 %v2048, %v2142
        %2144 = vmatmul.f32.gmra.mxu0 %v2104
        %v2145 = vpop.f32.mrf.mxu0
        %v2146 = vadd.f32 %v2051, %v2145
        %2147 = vmatmul.f32.gmra.mxu0 %v2106
        %v2148 = vpop.f32.mrf.mxu0
        %v2149 = vadd.f32 %v2054, %v2148
        %2150 = vmatmul.f32.gmra.mxu0 %v2108
        %v2151 = vpop.f32.mrf.mxu0
        %v2152 = vadd.f32 %v2057, %v2151
        %2153 = vmatmul.f32.gmra.mxu0 %v2110
        %v2154 = vpop.f32.mrf.mxu0
        %v2155 = vadd.f32 %v2060, %v2154
        %2156 = vmatmul.f32.gmra.mxu0 %v2112
        %v2157 = vpop.f32.mrf.mxu0
        %v2158 = vadd.f32 %v2063, %v2157
        %2159 = vmatmul.f32.gmra.mxu0 %v2114
        %v2160 = vpop.f32.mrf.mxu0
        %v2161 = vadd.f32 %v2066, %v2160
        %2162 = vmatmul.f32.gmra.mxu0 %v2116
        %v2163 = vpop.f32.mrf.mxu0
        %v2164 = vadd.f32 %v2069, %v2163
        %2165 = vmatmul.f32.gmra.mxu0 %v2118
        %v2166 = vpop.f32.mrf.mxu0
        %v2167 = vadd.f32 %v2072, %v2166
        %2168 = vmatmul.f32.gmra.mxu0 %v2120
        %v2169 = vpop.f32.mrf.mxu0
        %v2170 = vadd.f32 %v2075, %v2169
        %2171 = vdwg.mxu0
        %v2172 = vld [vmem:[%s1961 + $0x40] sm:$0xff]
        %v2173 = vld [vmem:[%s1961 + $0x48] sm:$0xff]
        %v2174 = vld [vmem:[%s1961 + $0x50] sm:$0xff]
        %v2175 = vld [vmem:[%s1961 + $0x58] sm:$0xff]
        %v2176 = vrot.slane %v1949, 7
        %v2177 = vrot.slane %v1950, 7
        %v2178 = vsel %vm964, %v2176, %v2177
        %v2179 = vrot.slane %v1951, 7
        %v2180 = vsel %vm964, %v2177, %v2179
        %v2181 = vrot.slane %v1952, 7
        %v2182 = vsel %vm964, %v2179, %v2181
        %v2183 = vrot.slane %v1953, 7
        %v2184 = vsel %vm964, %v2181, %v2183
        %v2185 = vrot.slane %v1954, 7
        %v2186 = vsel %vm964, %v2183, %v2185
        %v2187 = vrot.slane %v1955, 7
        %v2188 = vsel %vm964, %v2185, %v2187
        %v2189 = vrot.slane %v1956, 7
        %v2190 = vsel %vm964, %v2187, %v2189
        %v2191 = vrot.slane %v1957, 7
        %v2192 = vsel %vm964, %v2189, %v2191
        %v2193 = vrot.slane %v1958, 7
        %v2194 = vsel %vm964, %v2191, %v2193
        %v2195 = vrot.slane %v1959, 7
        %v2196 = vsel %vm964, %v2193, %v2195
        %v2197 = vrot.slane %v1960, 7
        %v2198 = vsel %vm964, %v2195, %v2197
        %v2199 = vsel %vm664, %v2178, 0
        %v2201 = vsel %vm664, %v2180, 0
        %v2203 = vsel %vm664, %v2182, 0
        %v2205 = vsel %vm664, %v2184, 0
        %v2207 = vsel %vm664, %v2186, 0
        %v2209 = vsel %vm664, %v2188, 0
        %v2211 = vsel %vm664, %v2190, 0
        %v2213 = vsel %vm664, %v2192, 0
        %v2215 = vsel %vm664, %v2194, 0
        %v2217 = vsel %vm664, %v2196, 0
        %v2219 = vsel %vm664, %v2198, 0
        %2221 = vmatpush.msra.mxu0 0.0
        %2222 = vmatpush.msra.mxu0 0.0
        %2223 = vmatpush.msra.mxu0 0.0
        %2224 = vmatpush.msra.mxu0 0.0
        %2225 = vmatpush.msra.mxu0 0.0
        %2226 = vmatpush.msra.mxu0 0.0
        %2227 = vmatpush.msra.mxu0 0.0
        %2228 = vmatpush.msra.mxu0 0.0
        %2229 = vmatpush.msra.mxu0 0.0
        %2230 = vmatpush.msra.mxu0 0.0
        %2231 = vmatpush.msra.mxu0 0.0
        %2232 = vmatpush.msra.mxu0 0.0
        %2233 = vmatpush.msra.mxu0 %v2175
        %2234 = vmatpush.msra.mxu0 %v2174
        %2235 = vmatpush.msra.mxu0 %v2173
        %2236 = vmatpush.msra.mxu0 %v2172
        %2237 = vmatmul.f32.gmra.mxu0 %v2199
        %v2238 = vpop.f32.mrf.mxu0
        %v2239 = vadd.f32 0.0, %v2238
        %2240 = vmatmul.f32.gmra.mxu0 %v2201
        %v2241 = vpop.f32.mrf.mxu0
        %v2242 = vadd.f32 0.0, %v2241
        %2243 = vmatmul.f32.gmra.mxu0 %v2203
        %v2244 = vpop.f32.mrf.mxu0
        %v2245 = vadd.f32 0.0, %v2244
        %2246 = vmatmul.f32.gmra.mxu0 %v2205
        %v2247 = vpop.f32.mrf.mxu0
        %v2248 = vadd.f32 0.0, %v2247
        %2249 = vmatmul.f32.gmra.mxu0 %v2207
        %v2250 = vpop.f32.mrf.mxu0
        %v2251 = vadd.f32 0.0, %v2250
        %2252 = vmatmul.f32.gmra.mxu0 %v2209
        %v2253 = vpop.f32.mrf.mxu0
        %v2254 = vadd.f32 0.0, %v2253
        %2255 = vmatmul.f32.gmra.mxu0 %v2211
        %v2256 = vpop.f32.mrf.mxu0
        %v2257 = vadd.f32 0.0, %v2256
        %2258 = vmatmul.f32.gmra.mxu0 %v2213
        %v2259 = vpop.f32.mrf.mxu0
        %v2260 = vadd.f32 0.0, %v2259
        %2261 = vmatmul.f32.gmra.mxu0 %v2215
        %v2262 = vpop.f32.mrf.mxu0
        %v2263 = vadd.f32 0.0, %v2262
        %2264 = vmatmul.f32.gmra.mxu0 %v2217
        %v2265 = vpop.f32.mrf.mxu0
        %v2266 = vadd.f32 0.0, %v2265
        %2267 = vmatmul.f32.gmra.mxu0 %v2219
        %v2268 = vpop.f32.mrf.mxu0
        %v2269 = vadd.f32 0.0, %v2268
        %2270 = vdwg.mxu0
        %v2271 = vadd.f32 %v2140, %v2239
        %v2272 = vadd.f32 %v2143, %v2242
        %v2273 = vadd.f32 %v2146, %v2245
        %v2274 = vadd.f32 %v2149, %v2248
        %v2275 = vadd.f32 %v2152, %v2251
        %v2276 = vadd.f32 %v2155, %v2254
        %v2277 = vadd.f32 %v2158, %v2257
        %v2278 = vadd.f32 %v2161, %v2260
        %v2279 = vadd.f32 %v2164, %v2263
        %v2280 = vadd.f32 %v2167, %v2266
        %v2281 = vadd.f32 %v2170, %v2269
        %s2282 = scalar_lea.vmem %s6, 1
        %v2283 = vld [vmem:[%s2282] sm:$0x1]
        %v2285 = vperm.slane %v2283, 0
        %v2287 = vadd.f32 %v2271, %v2285
        %v2288 = vadd.f32 %v2272, %v2285
        %v2289 = vadd.f32 %v2273, %v2285
        %v2290 = vadd.f32 %v2274, %v2285
        %v2291 = vadd.f32 %v2275, %v2285
        %v2292 = vadd.f32 %v2276, %v2285
        %v2293 = vadd.f32 %v2277, %v2285
        %v2294 = vadd.f32 %v2278, %v2285
        %v2295 = vadd.f32 %v2279, %v2285
        %v2296 = vadd.f32 %v2280, %v2285
        %v2297 = vadd.f32 %v2281, %v2285
        %v2310 = vrot.slane %v1508, 6
        %v2311 = vrot.slane %v1509, 6
        %v2312 = vsel %vm1472, %v2310, %v2311
        %v2313 = vrot.slane %v1510, 6
        %v2314 = vsel %vm1472, %v2311, %v2313
        %v2315 = vrot.slane %v1511, 6
        %v2316 = vsel %vm1472, %v2313, %v2315
        %v2317 = vrot.slane %v1512, 6
        %v2318 = vsel %vm1472, %v2315, %v2317
        %v2319 = vrot.slane %v1513, 6
        %v2320 = vsel %vm1472, %v2317, %v2319
        %v2321 = vrot.slane %v1514, 6
        %v2322 = vsel %vm1472, %v2319, %v2321
        %v2323 = vrot.slane %v1515, 6
        %v2324 = vsel %vm1472, %v2321, %v2323
        %v2325 = vrot.slane %v1516, 6
        %v2326 = vsel %vm1472, %v2323, %v2325
        %v2327 = vrot.slane %v1517, 6
        %v2328 = vsel %vm1472, %v2325, %v2327
        %v2329 = vrot.slane %v1518, 6
        %v2330 = vsel %vm1472, %v2327, %v2329
        %v2331 = vrot.slane %v1519, 6
        %v2332 = vsel %vm1472, %v2329, %v2331
        %v2344 = vadd.f32 %v2287, %v2312
        %v2345 = vadd.f32 %v2288, %v2314
        %v2346 = vadd.f32 %v2289, %v2316
        %v2347 = vadd.f32 %v2290, %v2318
        %v2348 = vadd.f32 %v2291, %v2320
        %v2349 = vadd.f32 %v2292, %v2322
        %v2350 = vadd.f32 %v2293, %v2324
        %v2351 = vadd.f32 %v2294, %v2326
        %v2352 = vadd.f32 %v2295, %v2328
        %v2353 = vadd.f32 %v2296, %v2330
        %v2354 = vadd.f32 %v2297, %v2332
        %v2366 = vrot.slane %v2344, 2
        %v2367 = vrot.slane %v2345, 2
        %v2368 = vsel %vm823, %v2366, %v2367
        %v2369 = vrot.slane %v2346, 2
        %v2370 = vsel %vm823, %v2367, %v2369
        %v2371 = vrot.slane %v2347, 2
        %v2372 = vsel %vm823, %v2369, %v2371
        %v2373 = vrot.slane %v2348, 2
        %v2374 = vsel %vm823, %v2371, %v2373
        %v2375 = vrot.slane %v2349, 2
        %v2376 = vsel %vm823, %v2373, %v2375
        %v2377 = vrot.slane %v2350, 2
        %v2378 = vsel %vm823, %v2375, %v2377
        %v2379 = vrot.slane %v2351, 2
        %v2380 = vsel %vm823, %v2377, %v2379
        %v2381 = vrot.slane %v2352, 2
        %v2382 = vsel %vm823, %v2379, %v2381
        %v2383 = vrot.slane %v2353, 2
        %v2384 = vsel %vm823, %v2381, %v2383
        %v2385 = vrot.slane %v2354, 2
        %v2386 = vsel %vm823, %v2383, %v2385
        %v2399 = vsel %vm560, %v2366, 0.0
        %v2400 = vsel %vm561, %v2368, 0.0
        %v2401 = vsel %vm562, %v2370, 0.0
        %v2402 = vsel %vm563, %v2372, 0.0
        %v2403 = vsel %vm564, %v2374, 0.0
        %v2404 = vsel %vm565, %v2376, 0.0
        %v2405 = vsel %vm566, %v2378, 0.0
        %v2406 = vsel %vm567, %v2380, 0.0
        %v2407 = vsel %vm568, %v2382, 0.0
        %v2408 = vsel %vm569, %v2384, 0.0
        %v2409 = vsel %vm570, %v2386, 0.0
        %v2410 = vsel %vm571, %v2385, 0.0
        %vm2411 = vcmp.ge.f32.partialorder %v2399, 0.0
        %vm2412 = vcmp.ge.f32.partialorder %v2400, 0.0
        %vm2413 = vcmp.ge.f32.partialorder %v2401, 0.0
        %vm2414 = vcmp.ge.f32.partialorder %v2402, 0.0
        %vm2415 = vcmp.ge.f32.partialorder %v2403, 0.0
        %vm2416 = vcmp.ge.f32.partialorder %v2404, 0.0
        %vm2417 = vcmp.ge.f32.partialorder %v2405, 0.0
        %vm2418 = vcmp.ge.f32.partialorder %v2406, 0.0
        %vm2419 = vcmp.ge.f32.partialorder %v2407, 0.0
        %vm2420 = vcmp.ge.f32.partialorder %v2408, 0.0
        %vm2421 = vcmp.ge.f32.partialorder %v2409, 0.0
        %vm2422 = vcmp.ge.f32.partialorder %v2410, 0.0
        %v2423 = vmul.f32 %v2399, 0.1
        %v2424 = vmul.f32 %v2400, 0.1
        %v2425 = vmul.f32 %v2401, 0.1
        %v2426 = vmul.f32 %v2402, 0.1
        %v2427 = vmul.f32 %v2403, 0.1
        %v2428 = vmul.f32 %v2404, 0.1
        %v2429 = vmul.f32 %v2405, 0.1
        %v2430 = vmul.f32 %v2406, 0.1
        %v2431 = vmul.f32 %v2407, 0.1
        %v2432 = vmul.f32 %v2408, 0.1
        %v2433 = vmul.f32 %v2409, 0.1
        %v2434 = vmul.f32 %v2410, 0.1
        %v2435 = vsel %vm2411, %v2399, %v2423
        %v2436 = vsel %vm2412, %v2400, %v2424
        %v2437 = vsel %vm2413, %v2401, %v2425
        %v2438 = vsel %vm2414, %v2402, %v2426
        %v2439 = vsel %vm2415, %v2403, %v2427
        %v2440 = vsel %vm2416, %v2404, %v2428
        %v2441 = vsel %vm2417, %v2405, %v2429
        %v2442 = vsel %vm2418, %v2406, %v2430
        %v2443 = vsel %vm2419, %v2407, %v2431
        %v2444 = vsel %vm2420, %v2408, %v2432
        %v2445 = vsel %vm2421, %v2409, %v2433
        %v2446 = vsel %vm2422, %v2410, %v2434
        %s2447 = scalar_lea.vmem %s3, 192
        %v2448 = vld [vmem:[%s2447] sm:$0xff]
        %v2449 = vld [vmem:[%s2447 + $0x8] sm:$0xff]
        %v2450 = vld [vmem:[%s2447 + $0x10] sm:$0xff]
        %v2451 = vld [vmem:[%s2447 + $0x18] sm:$0xff]
        %v2452 = vld [vmem:[%s2447 + $0x20] sm:$0xff]
        %v2453 = vld [vmem:[%s2447 + $0x28] sm:$0xff]
        %v2454 = vld [vmem:[%s2447 + $0x30] sm:$0xff]
        %v2455 = vld [vmem:[%s2447 + $0x38] sm:$0xff]
        %v2466 = vrot.slane %v2436, 3
        %v2467 = vrot.slane %v2437, 3
        %v2468 = vsel %vm1272, %v2466, %v2467
        %v2469 = vrot.slane %v2438, 3
        %v2470 = vsel %vm1272, %v2467, %v2469
        %v2471 = vrot.slane %v2439, 3
        %v2472 = vsel %vm1272, %v2469, %v2471
        %v2473 = vrot.slane %v2440, 3
        %v2474 = vsel %vm1272, %v2471, %v2473
        %v2475 = vrot.slane %v2441, 3
        %v2476 = vsel %vm1272, %v2473, %v2475
        %v2477 = vrot.slane %v2442, 3
        %v2478 = vsel %vm1272, %v2475, %v2477
        %v2479 = vrot.slane %v2443, 3
        %v2480 = vsel %vm1272, %v2477, %v2479
        %v2481 = vrot.slane %v2444, 3
        %v2482 = vsel %vm1272, %v2479, %v2481
        %v2483 = vrot.slane %v2445, 3
        %v2484 = vsel %vm1272, %v2481, %v2483
        %v2485 = vsel %vm664, %v2468, 0
        %v2487 = vsel %vm664, %v2470, 0
        %v2489 = vsel %vm664, %v2472, 0
        %v2491 = vsel %vm664, %v2474, 0
        %v2493 = vsel %vm664, %v2476, 0
        %v2495 = vsel %vm664, %v2478, 0
        %v2497 = vsel %vm664, %v2480, 0
        %v2499 = vsel %vm664, %v2482, 0
        %v2501 = vsel %vm664, %v2484, 0
        %v2503 = vsel %vm664, %v2483, 0
        %2505 = vmatpush.msra.mxu0 0.0
        %2506 = vmatpush.msra.mxu0 0.0
        %2507 = vmatpush.msra.mxu0 0.0
        %2508 = vmatpush.msra.mxu0 0.0
        %2509 = vmatpush.msra.mxu0 0.0
        %2510 = vmatpush.msra.mxu0 0.0
        %2511 = vmatpush.msra.mxu0 0.0
        %2512 = vmatpush.msra.mxu0 0.0
        %2513 = vmatpush.msra.mxu0 0.0
        %2514 = vmatpush.msra.mxu0 0.0
        %2515 = vmatpush.msra.mxu0 0.0
        %2516 = vmatpush.msra.mxu0 0.0
        %2517 = vmatpush.msra.mxu0 %v2455
        %2518 = vmatpush.msra.mxu0 %v2454
        %2519 = vmatpush.msra.mxu0 %v2453
        %2520 = vmatpush.msra.mxu0 %v2452
        %2521 = vmatmul.f32.gmra.mxu0 %v2485
        %v2522 = vpop.f32.mrf.mxu0
        %v2523 = vadd.f32 0.0, %v2522
        %2524 = vmatmul.f32.gmra.mxu0 %v2487
        %v2525 = vpop.f32.mrf.mxu0
        %v2526 = vadd.f32 0.0, %v2525
        %2527 = vmatmul.f32.gmra.mxu0 %v2489
        %v2528 = vpop.f32.mrf.mxu0
        %v2529 = vadd.f32 0.0, %v2528
        %2530 = vmatmul.f32.gmra.mxu0 %v2491
        %v2531 = vpop.f32.mrf.mxu0
        %v2532 = vadd.f32 0.0, %v2531
        %2533 = vmatmul.f32.gmra.mxu0 %v2493
        %v2534 = vpop.f32.mrf.mxu0
        %v2535 = vadd.f32 0.0, %v2534
        %2536 = vmatmul.f32.gmra.mxu0 %v2495
        %v2537 = vpop.f32.mrf.mxu0
        %v2538 = vadd.f32 0.0, %v2537
        %2539 = vmatmul.f32.gmra.mxu0 %v2497
        %v2540 = vpop.f32.mrf.mxu0
        %v2541 = vadd.f32 0.0, %v2540
        %2542 = vmatmul.f32.gmra.mxu0 %v2499
        %v2543 = vpop.f32.mrf.mxu0
        %v2544 = vadd.f32 0.0, %v2543
        %2545 = vmatmul.f32.gmra.mxu0 %v2501
        %v2546 = vpop.f32.mrf.mxu0
        %v2547 = vadd.f32 0.0, %v2546
        %2548 = vmatmul.f32.gmra.mxu0 %v2503
        %v2549 = vpop.f32.mrf.mxu0
        %v2550 = vadd.f32 0.0, %v2549
        %2551 = vdwg.mxu0
        %v2553 = vrot.slane %v2435, 6
        %v2554 = vrot.slane %v2436, 6
        %v2555 = vsel %vm1472, %v2553, %v2554
        %v2556 = vrot.slane %v2437, 6
        %v2557 = vsel %vm1472, %v2554, %v2556
        %v2558 = vrot.slane %v2438, 6
        %v2559 = vsel %vm1472, %v2556, %v2558
        %v2560 = vrot.slane %v2439, 6
        %v2561 = vsel %vm1472, %v2558, %v2560
        %v2562 = vrot.slane %v2440, 6
        %v2563 = vsel %vm1472, %v2560, %v2562
        %v2564 = vrot.slane %v2441, 6
        %v2565 = vsel %vm1472, %v2562, %v2564
        %v2566 = vrot.slane %v2442, 6
        %v2567 = vsel %vm1472, %v2564, %v2566
        %v2568 = vrot.slane %v2443, 6
        %v2569 = vsel %vm1472, %v2566, %v2568
        %v2570 = vrot.slane %v2444, 6
        %v2571 = vsel %vm1472, %v2568, %v2570
        %v2572 = vsel %vm664, %v2555, 0
        %v2574 = vsel %vm664, %v2557, 0
        %v2576 = vsel %vm664, %v2559, 0
        %v2578 = vsel %vm664, %v2561, 0
        %v2580 = vsel %vm664, %v2563, 0
        %v2582 = vsel %vm664, %v2565, 0
        %v2584 = vsel %vm664, %v2567, 0
        %v2586 = vsel %vm664, %v2569, 0
        %v2588 = vsel %vm664, %v2571, 0
        %v2590 = vsel %vm664, %v2570, 0
        %2592 = vmatpush.msra.mxu0 0.0
        %2593 = vmatpush.msra.mxu0 0.0
        %2594 = vmatpush.msra.mxu0 0.0
        %2595 = vmatpush.msra.mxu0 0.0
        %2596 = vmatpush.msra.mxu0 0.0
        %2597 = vmatpush.msra.mxu0 0.0
        %2598 = vmatpush.msra.mxu0 0.0
        %2599 = vmatpush.msra.mxu0 0.0
        %2600 = vmatpush.msra.mxu0 0.0
        %2601 = vmatpush.msra.mxu0 0.0
        %2602 = vmatpush.msra.mxu0 0.0
        %2603 = vmatpush.msra.mxu0 0.0
        %2604 = vmatpush.msra.mxu0 %v2451
        %2605 = vmatpush.msra.mxu0 %v2450
        %2606 = vmatpush.msra.mxu0 %v2449
        %2607 = vmatpush.msra.mxu0 %v2448
        %2608 = vmatmul.f32.gmra.mxu0 %v2572
        %v2609 = vpop.f32.mrf.mxu0
        %v2610 = vadd.f32 %v2523, %v2609
        %2611 = vmatmul.f32.gmra.mxu0 %v2574
        %v2612 = vpop.f32.mrf.mxu0
        %v2613 = vadd.f32 %v2526, %v2612
        %2614 = vmatmul.f32.gmra.mxu0 %v2576
        %v2615 = vpop.f32.mrf.mxu0
        %v2616 = vadd.f32 %v2529, %v2615
        %2617 = vmatmul.f32.gmra.mxu0 %v2578
        %v2618 = vpop.f32.mrf.mxu0
        %v2619 = vadd.f32 %v2532, %v2618
        %2620 = vmatmul.f32.gmra.mxu0 %v2580
        %v2621 = vpop.f32.mrf.mxu0
        %v2622 = vadd.f32 %v2535, %v2621
        %2623 = vmatmul.f32.gmra.mxu0 %v2582
        %v2624 = vpop.f32.mrf.mxu0
        %v2625 = vadd.f32 %v2538, %v2624
        %2626 = vmatmul.f32.gmra.mxu0 %v2584
        %v2627 = vpop.f32.mrf.mxu0
        %v2628 = vadd.f32 %v2541, %v2627
        %2629 = vmatmul.f32.gmra.mxu0 %v2586
        %v2630 = vpop.f32.mrf.mxu0
        %v2631 = vadd.f32 %v2544, %v2630
        %2632 = vmatmul.f32.gmra.mxu0 %v2588
        %v2633 = vpop.f32.mrf.mxu0
        %v2634 = vadd.f32 %v2547, %v2633
        %2635 = vmatmul.f32.gmra.mxu0 %v2590
        %v2636 = vpop.f32.mrf.mxu0
        %v2637 = vadd.f32 %v2550, %v2636
        %2638 = vdwg.mxu0
        %v2639 = vld [vmem:[%s2447 + $0x40] sm:$0xff]
        %v2640 = vld [vmem:[%s2447 + $0x48] sm:$0xff]
        %v2641 = vld [vmem:[%s2447 + $0x50] sm:$0xff]
        %v2642 = vld [vmem:[%s2447 + $0x58] sm:$0xff]
        %v2643 = vsel %vm664, %v2437, 0
        %v2645 = vsel %vm664, %v2438, 0
        %v2647 = vsel %vm664, %v2439, 0
        %v2649 = vsel %vm664, %v2440, 0
        %v2651 = vsel %vm664, %v2441, 0
        %v2653 = vsel %vm664, %v2442, 0
        %v2655 = vsel %vm664, %v2443, 0
        %v2657 = vsel %vm664, %v2444, 0
        %v2659 = vsel %vm664, %v2445, 0
        %v2662 = vsel %vm664, %v2446, 0
        %2664 = vmatpush.msra.mxu0 0.0
        %2665 = vmatpush.msra.mxu0 0.0
        %2666 = vmatpush.msra.mxu0 0.0
        %2667 = vmatpush.msra.mxu0 0.0
        %2668 = vmatpush.msra.mxu0 0.0
        %2669 = vmatpush.msra.mxu0 0.0
        %2670 = vmatpush.msra.mxu0 0.0
        %2671 = vmatpush.msra.mxu0 0.0
        %2672 = vmatpush.msra.mxu0 0.0
        %2673 = vmatpush.msra.mxu0 0.0
        %2674 = vmatpush.msra.mxu0 0.0
        %2675 = vmatpush.msra.mxu0 0.0
        %2676 = vmatpush.msra.mxu0 %v2642
        %2677 = vmatpush.msra.mxu0 %v2641
        %2678 = vmatpush.msra.mxu0 %v2640
        %2679 = vmatpush.msra.mxu0 %v2639
        %2680 = vmatmul.f32.gmra.mxu0 %v2643
        %v2681 = vpop.f32.mrf.mxu0
        %v2682 = vadd.f32 0.0, %v2681
        %2683 = vmatmul.f32.gmra.mxu0 %v2645
        %v2684 = vpop.f32.mrf.mxu0
        %v2685 = vadd.f32 0.0, %v2684
        %2686 = vmatmul.f32.gmra.mxu0 %v2647
        %v2687 = vpop.f32.mrf.mxu0
        %v2688 = vadd.f32 0.0, %v2687
        %2689 = vmatmul.f32.gmra.mxu0 %v2649
        %v2690 = vpop.f32.mrf.mxu0
        %v2691 = vadd.f32 0.0, %v2690
        %2692 = vmatmul.f32.gmra.mxu0 %v2651
        %v2693 = vpop.f32.mrf.mxu0
        %v2694 = vadd.f32 0.0, %v2693
        %2695 = vmatmul.f32.gmra.mxu0 %v2653
        %v2696 = vpop.f32.mrf.mxu0
        %v2697 = vadd.f32 0.0, %v2696
        %2698 = vmatmul.f32.gmra.mxu0 %v2655
        %v2699 = vpop.f32.mrf.mxu0
        %v2700 = vadd.f32 0.0, %v2699
        %2701 = vmatmul.f32.gmra.mxu0 %v2657
        %v2702 = vpop.f32.mrf.mxu0
        %v2703 = vadd.f32 0.0, %v2702
        %2704 = vmatmul.f32.gmra.mxu0 %v2659
        %v2705 = vpop.f32.mrf.mxu0
        %v2706 = vadd.f32 0.0, %v2705
        %2707 = vmatmul.f32.gmra.mxu0 %v2662
        %v2708 = vpop.f32.mrf.mxu0
        %v2709 = vadd.f32 0.0, %v2708
        %2710 = vdwg.mxu0
        %v2711 = vadd.f32 %v2610, %v2682
        %v2712 = vadd.f32 %v2613, %v2685
        %v2713 = vadd.f32 %v2616, %v2688
        %v2714 = vadd.f32 %v2619, %v2691
        %v2715 = vadd.f32 %v2622, %v2694
        %v2716 = vadd.f32 %v2625, %v2697
        %v2717 = vadd.f32 %v2628, %v2700
        %v2718 = vadd.f32 %v2631, %v2703
        %v2719 = vadd.f32 %v2634, %v2706
        %v2720 = vadd.f32 %v2637, %v2709
        %s2721 = scalar_lea.vmem %s4, 2
        %v2722 = vld [vmem:[%s2721] sm:$0x1]
        %v2724 = vperm.slane %v2722, 0
        %v2726 = vadd.f32 %v2711, %v2724
        %v2727 = vadd.f32 %v2712, %v2724
        %v2728 = vadd.f32 %v2713, %v2724
        %v2729 = vadd.f32 %v2714, %v2724
        %v2730 = vadd.f32 %v2715, %v2724
        %v2731 = vadd.f32 %v2716, %v2724
        %v2732 = vadd.f32 %v2717, %v2724
        %v2733 = vadd.f32 %v2718, %v2724
        %v2734 = vadd.f32 %v2719, %v2724
        %v2735 = vadd.f32 %v2720, %v2724
        %v2746 = vrot.slane %v2726, 5
        %v2747 = vrot.slane %v2727, 5
        %v2748 = vsel %vm1577, %v2746, %v2747
        %v2749 = vrot.slane %v2728, 5
        %v2750 = vsel %vm1577, %v2747, %v2749
        %v2751 = vrot.slane %v2729, 5
        %v2752 = vsel %vm1577, %v2749, %v2751
        %v2753 = vrot.slane %v2730, 5
        %v2754 = vsel %vm1577, %v2751, %v2753
        %v2755 = vrot.slane %v2731, 5
        %v2756 = vsel %vm1577, %v2753, %v2755
        %v2757 = vrot.slane %v2732, 5
        %v2758 = vsel %vm1577, %v2755, %v2757
        %v2759 = vrot.slane %v2733, 5
        %v2760 = vsel %vm1577, %v2757, %v2759
        %v2761 = vrot.slane %v2734, 5
        %v2762 = vsel %vm1577, %v2759, %v2761
        %v2763 = vrot.slane %v2735, 5
        %v2764 = vsel %vm1577, %v2761, %v2763
        %v2775 = vsel %vm561, %v2746, 0.0
        %v2776 = vsel %vm562, %v2748, 0.0
        %v2777 = vsel %vm563, %v2750, 0.0
        %v2778 = vsel %vm564, %v2752, 0.0
        %v2779 = vsel %vm565, %v2754, 0.0
        %v2780 = vsel %vm566, %v2756, 0.0
        %v2781 = vsel %vm567, %v2758, 0.0
        %v2782 = vsel %vm568, %v2760, 0.0
        %v2783 = vsel %vm569, %v2762, 0.0
        %v2784 = vsel %vm570, %v2764, 0.0
        %vm2785 = vcmp.ge.f32.partialorder %v2775, 0.0
        %vm2786 = vcmp.ge.f32.partialorder %v2776, 0.0
        %vm2787 = vcmp.ge.f32.partialorder %v2777, 0.0
        %vm2788 = vcmp.ge.f32.partialorder %v2778, 0.0
        %vm2789 = vcmp.ge.f32.partialorder %v2779, 0.0
        %vm2790 = vcmp.ge.f32.partialorder %v2780, 0.0
        %vm2791 = vcmp.ge.f32.partialorder %v2781, 0.0
        %vm2792 = vcmp.ge.f32.partialorder %v2782, 0.0
        %vm2793 = vcmp.ge.f32.partialorder %v2783, 0.0
        %vm2794 = vcmp.ge.f32.partialorder %v2784, 0.0
        %v2795 = vmul.f32 %v2775, 0.1
        %v2796 = vmul.f32 %v2776, 0.1
        %v2797 = vmul.f32 %v2777, 0.1
        %v2798 = vmul.f32 %v2778, 0.1
        %v2799 = vmul.f32 %v2779, 0.1
        %v2800 = vmul.f32 %v2780, 0.1
        %v2801 = vmul.f32 %v2781, 0.1
        %v2802 = vmul.f32 %v2782, 0.1
        %v2803 = vmul.f32 %v2783, 0.1
        %v2804 = vmul.f32 %v2784, 0.1
        %v2805 = vsel %vm2785, %v2775, %v2795
        %v2806 = vsel %vm2786, %v2776, %v2796
        %v2807 = vsel %vm2787, %v2777, %v2797
        %v2808 = vsel %vm2788, %v2778, %v2798
        %v2809 = vsel %vm2789, %v2779, %v2799
        %v2810 = vsel %vm2790, %v2780, %v2800
        %v2811 = vsel %vm2791, %v2781, %v2801
        %v2812 = vsel %vm2792, %v2782, %v2802
        %v2813 = vsel %vm2793, %v2783, %v2803
        %v2814 = vsel %vm2794, %v2784, %v2804
        %s2815 = scalar_lea.vmem %s5, 192
        %v2816 = vld [vmem:[%s2815] sm:$0xff]
        %v2817 = vld [vmem:[%s2815 + $0x8] sm:$0xff]
        %v2818 = vld [vmem:[%s2815 + $0x10] sm:$0xff]
        %v2819 = vld [vmem:[%s2815 + $0x18] sm:$0xff]
        %v2820 = vld [vmem:[%s2815 + $0x20] sm:$0xff]
        %v2821 = vld [vmem:[%s2815 + $0x28] sm:$0xff]
        %v2822 = vld [vmem:[%s2815 + $0x30] sm:$0xff]
        %v2823 = vld [vmem:[%s2815 + $0x38] sm:$0xff]
        %vm2834 = vcmask 1043456
        %v2835 = vrot.slane %v2805, 4
        %v2836 = vrot.slane %v2806, 4
        %v2837 = vsel %vm2834, %v2835, %v2836
        %v2838 = vrot.slane %v2807, 4
        %v2839 = vsel %vm2834, %v2836, %v2838
        %v2840 = vrot.slane %v2808, 4
        %v2841 = vsel %vm2834, %v2838, %v2840
        %v2842 = vrot.slane %v2809, 4
        %v2843 = vsel %vm2834, %v2840, %v2842
        %v2844 = vrot.slane %v2810, 4
        %v2845 = vsel %vm2834, %v2842, %v2844
        %v2846 = vrot.slane %v2811, 4
        %v2847 = vsel %vm2834, %v2844, %v2846
        %v2848 = vrot.slane %v2812, 4
        %v2849 = vsel %vm2834, %v2846, %v2848
        %v2850 = vrot.slane %v2813, 4
        %v2851 = vsel %vm2834, %v2848, %v2850
        %v2852 = vrot.slane %v2814, 4
        %v2853 = vsel %vm2834, %v2850, %v2852
        %v2854 = vsel %vm664, %v2837, 0
        %v2856 = vsel %vm664, %v2839, 0
        %v2858 = vsel %vm664, %v2841, 0
        %v2860 = vsel %vm664, %v2843, 0
        %v2862 = vsel %vm664, %v2845, 0
        %v2864 = vsel %vm664, %v2847, 0
        %v2866 = vsel %vm664, %v2849, 0
        %v2868 = vsel %vm664, %v2851, 0
        %v2870 = vsel %vm664, %v2853, 0
        %2872 = vmatpush.msra.mxu0 0.0
        %2873 = vmatpush.msra.mxu0 0.0
        %2874 = vmatpush.msra.mxu0 0.0
        %2875 = vmatpush.msra.mxu0 0.0
        %2876 = vmatpush.msra.mxu0 0.0
        %2877 = vmatpush.msra.mxu0 0.0
        %2878 = vmatpush.msra.mxu0 0.0
        %2879 = vmatpush.msra.mxu0 0.0
        %2880 = vmatpush.msra.mxu0 0.0
        %2881 = vmatpush.msra.mxu0 0.0
        %2882 = vmatpush.msra.mxu0 0.0
        %2883 = vmatpush.msra.mxu0 0.0
        %2884 = vmatpush.msra.mxu0 %v2823
        %2885 = vmatpush.msra.mxu0 %v2822
        %2886 = vmatpush.msra.mxu0 %v2821
        %2887 = vmatpush.msra.mxu0 %v2820
        %2888 = vmatmul.f32.gmra.mxu0 %v2854
        %v2889 = vpop.f32.mrf.mxu0
        %v2890 = vadd.f32 0.0, %v2889
        %2891 = vmatmul.f32.gmra.mxu0 %v2856
        %v2892 = vpop.f32.mrf.mxu0
        %v2893 = vadd.f32 0.0, %v2892
        %2894 = vmatmul.f32.gmra.mxu0 %v2858
        %v2895 = vpop.f32.mrf.mxu0
        %v2896 = vadd.f32 0.0, %v2895
        %2897 = vmatmul.f32.gmra.mxu0 %v2860
        %v2898 = vpop.f32.mrf.mxu0
        %v2899 = vadd.f32 0.0, %v2898
        %2900 = vmatmul.f32.gmra.mxu0 %v2862
        %v2901 = vpop.f32.mrf.mxu0
        %v2902 = vadd.f32 0.0, %v2901
        %2903 = vmatmul.f32.gmra.mxu0 %v2864
        %v2904 = vpop.f32.mrf.mxu0
        %v2905 = vadd.f32 0.0, %v2904
        %2906 = vmatmul.f32.gmra.mxu0 %v2866
        %v2907 = vpop.f32.mrf.mxu0
        %v2908 = vadd.f32 0.0, %v2907
        %2909 = vmatmul.f32.gmra.mxu0 %v2868
        %v2910 = vpop.f32.mrf.mxu0
        %v2911 = vadd.f32 0.0, %v2910
        %2912 = vmatmul.f32.gmra.mxu0 %v2870
        %v2913 = vpop.f32.mrf.mxu0
        %v2914 = vadd.f32 0.0, %v2913
        %2915 = vdwg.mxu0
        %v2916 = vrot.slane %v2805, 3
        %v2917 = vrot.slane %v2806, 3
        %v2918 = vsel %vm1272, %v2916, %v2917
        %v2919 = vrot.slane %v2807, 3
        %v2920 = vsel %vm1272, %v2917, %v2919
        %v2921 = vrot.slane %v2808, 3
        %v2922 = vsel %vm1272, %v2919, %v2921
        %v2923 = vrot.slane %v2809, 3
        %v2924 = vsel %vm1272, %v2921, %v2923
        %v2925 = vrot.slane %v2810, 3
        %v2926 = vsel %vm1272, %v2923, %v2925
        %v2927 = vrot.slane %v2811, 3
        %v2928 = vsel %vm1272, %v2925, %v2927
        %v2929 = vrot.slane %v2812, 3
        %v2930 = vsel %vm1272, %v2927, %v2929
        %v2931 = vrot.slane %v2813, 3
        %v2932 = vsel %vm1272, %v2929, %v2931
        %v2933 = vrot.slane %v2814, 3
        %v2934 = vsel %vm1272, %v2931, %v2933
        %v2935 = vsel %vm664, %v2918, 0
        %v2937 = vsel %vm664, %v2920, 0
        %v2939 = vsel %vm664, %v2922, 0
        %v2941 = vsel %vm664, %v2924, 0
        %v2943 = vsel %vm664, %v2926, 0
        %v2945 = vsel %vm664, %v2928, 0
        %v2947 = vsel %vm664, %v2930, 0
        %v2949 = vsel %vm664, %v2932, 0
        %v2951 = vsel %vm664, %v2934, 0
        %2953 = vmatpush.msra.mxu0 0.0
        %2954 = vmatpush.msra.mxu0 0.0
        %2955 = vmatpush.msra.mxu0 0.0
        %2956 = vmatpush.msra.mxu0 0.0
        %2957 = vmatpush.msra.mxu0 0.0
        %2958 = vmatpush.msra.mxu0 0.0
        %2959 = vmatpush.msra.mxu0 0.0
        %2960 = vmatpush.msra.mxu0 0.0
        %2961 = vmatpush.msra.mxu0 0.0
        %2962 = vmatpush.msra.mxu0 0.0
        %2963 = vmatpush.msra.mxu0 0.0
        %2964 = vmatpush.msra.mxu0 0.0
        %2965 = vmatpush.msra.mxu0 %v2819
        %2966 = vmatpush.msra.mxu0 %v2818
        %2967 = vmatpush.msra.mxu0 %v2817
        %2968 = vmatpush.msra.mxu0 %v2816
        %2969 = vmatmul.f32.gmra.mxu0 %v2935
        %v2970 = vpop.f32.mrf.mxu0
        %v2971 = vadd.f32 %v2890, %v2970
        %2972 = vmatmul.f32.gmra.mxu0 %v2937
        %v2973 = vpop.f32.mrf.mxu0
        %v2974 = vadd.f32 %v2893, %v2973
        %2975 = vmatmul.f32.gmra.mxu0 %v2939
        %v2976 = vpop.f32.mrf.mxu0
        %v2977 = vadd.f32 %v2896, %v2976
        %2978 = vmatmul.f32.gmra.mxu0 %v2941
        %v2979 = vpop.f32.mrf.mxu0
        %v2980 = vadd.f32 %v2899, %v2979
        %2981 = vmatmul.f32.gmra.mxu0 %v2943
        %v2982 = vpop.f32.mrf.mxu0
        %v2983 = vadd.f32 %v2902, %v2982
        %2984 = vmatmul.f32.gmra.mxu0 %v2945
        %v2985 = vpop.f32.mrf.mxu0
        %v2986 = vadd.f32 %v2905, %v2985
        %2987 = vmatmul.f32.gmra.mxu0 %v2947
        %v2988 = vpop.f32.mrf.mxu0
        %v2989 = vadd.f32 %v2908, %v2988
        %2990 = vmatmul.f32.gmra.mxu0 %v2949
        %v2991 = vpop.f32.mrf.mxu0
        %v2992 = vadd.f32 %v2911, %v2991
        %2993 = vmatmul.f32.gmra.mxu0 %v2951
        %v2994 = vpop.f32.mrf.mxu0
        %v2995 = vadd.f32 %v2914, %v2994
        %2996 = vdwg.mxu0
        %v2997 = vld [vmem:[%s2815 + $0x40] sm:$0xff]
        %v2998 = vld [vmem:[%s2815 + $0x48] sm:$0xff]
        %v2999 = vld [vmem:[%s2815 + $0x50] sm:$0xff]
        %v3000 = vld [vmem:[%s2815 + $0x58] sm:$0xff]
        %v3001 = vrot.slane %v2805, 5
        %v3002 = vrot.slane %v2806, 5
        %v3003 = vsel %vm1577, %v3001, %v3002
        %v3004 = vrot.slane %v2807, 5
        %v3005 = vsel %vm1577, %v3002, %v3004
        %v3006 = vrot.slane %v2808, 5
        %v3007 = vsel %vm1577, %v3004, %v3006
        %v3008 = vrot.slane %v2809, 5
        %v3009 = vsel %vm1577, %v3006, %v3008
        %v3010 = vrot.slane %v2810, 5
        %v3011 = vsel %vm1577, %v3008, %v3010
        %v3012 = vrot.slane %v2811, 5
        %v3013 = vsel %vm1577, %v3010, %v3012
        %v3014 = vrot.slane %v2812, 5
        %v3015 = vsel %vm1577, %v3012, %v3014
        %v3016 = vrot.slane %v2813, 5
        %v3017 = vsel %vm1577, %v3014, %v3016
        %v3018 = vrot.slane %v2814, 5
        %v3019 = vsel %vm1577, %v3016, %v3018
        %v3020 = vsel %vm664, %v3003, 0
        %v3022 = vsel %vm664, %v3005, 0
        %v3024 = vsel %vm664, %v3007, 0
        %v3026 = vsel %vm664, %v3009, 0
        %v3028 = vsel %vm664, %v3011, 0
        %v3030 = vsel %vm664, %v3013, 0
        %v3032 = vsel %vm664, %v3015, 0
        %v3034 = vsel %vm664, %v3017, 0
        %v3036 = vsel %vm664, %v3019, 0
        %3038 = vmatpush.msra.mxu0 0.0
        %3039 = vmatpush.msra.mxu0 0.0
        %3040 = vmatpush.msra.mxu0 0.0
        %3041 = vmatpush.msra.mxu0 0.0
        %3042 = vmatpush.msra.mxu0 0.0
        %3043 = vmatpush.msra.mxu0 0.0
        %3044 = vmatpush.msra.mxu0 0.0
        %3045 = vmatpush.msra.mxu0 0.0
        %3046 = vmatpush.msra.mxu0 0.0
        %3047 = vmatpush.msra.mxu0 0.0
        %3048 = vmatpush.msra.mxu0 0.0
        %3049 = vmatpush.msra.mxu0 0.0
        %3050 = vmatpush.msra.mxu0 %v3000
        %3051 = vmatpush.msra.mxu0 %v2999
        %3052 = vmatpush.msra.mxu0 %v2998
        %3053 = vmatpush.msra.mxu0 %v2997
        %3054 = vmatmul.f32.gmra.mxu0 %v3020
        %v3055 = vpop.f32.mrf.mxu0
        %v3056 = vadd.f32 0.0, %v3055
        %3057 = vmatmul.f32.gmra.mxu0 %v3022
        %v3058 = vpop.f32.mrf.mxu0
        %v3059 = vadd.f32 0.0, %v3058
        %3060 = vmatmul.f32.gmra.mxu0 %v3024
        %v3061 = vpop.f32.mrf.mxu0
        %v3062 = vadd.f32 0.0, %v3061
        %3063 = vmatmul.f32.gmra.mxu0 %v3026
        %v3064 = vpop.f32.mrf.mxu0
        %v3065 = vadd.f32 0.0, %v3064
        %3066 = vmatmul.f32.gmra.mxu0 %v3028
        %v3067 = vpop.f32.mrf.mxu0
        %v3068 = vadd.f32 0.0, %v3067
        %3069 = vmatmul.f32.gmra.mxu0 %v3030
        %v3070 = vpop.f32.mrf.mxu0
        %v3071 = vadd.f32 0.0, %v3070
        %3072 = vmatmul.f32.gmra.mxu0 %v3032
        %v3073 = vpop.f32.mrf.mxu0
        %v3074 = vadd.f32 0.0, %v3073
        %3075 = vmatmul.f32.gmra.mxu0 %v3034
        %v3076 = vpop.f32.mrf.mxu0
        %v3077 = vadd.f32 0.0, %v3076
        %3078 = vmatmul.f32.gmra.mxu0 %v3036
        %v3079 = vpop.f32.mrf.mxu0
        %v3080 = vadd.f32 0.0, %v3079
        %3081 = vdwg.mxu0
        %v3082 = vadd.f32 %v2971, %v3056
        %v3083 = vadd.f32 %v2974, %v3059
        %v3084 = vadd.f32 %v2977, %v3062
        %v3085 = vadd.f32 %v2980, %v3065
        %v3086 = vadd.f32 %v2983, %v3068
        %v3087 = vadd.f32 %v2986, %v3071
        %v3088 = vadd.f32 %v2989, %v3074
        %v3089 = vadd.f32 %v2992, %v3077
        %v3090 = vadd.f32 %v2995, %v3080
        %s3091 = scalar_lea.vmem %s6, 2
        %v3092 = vld [vmem:[%s3091] sm:$0x1]
        %v3094 = vperm.slane %v3092, 0
        %v3096 = vadd.f32 %v3082, %v3094
        %v3097 = vadd.f32 %v3083, %v3094
        %v3098 = vadd.f32 %v3084, %v3094
        %v3099 = vadd.f32 %v3085, %v3094
        %v3100 = vadd.f32 %v3086, %v3094
        %v3101 = vadd.f32 %v3087, %v3094
        %v3102 = vadd.f32 %v3088, %v3094
        %v3103 = vadd.f32 %v3089, %v3094
        %v3104 = vadd.f32 %v3090, %v3094
        %v3115 = vrot.slane %v2400, 4
        %v3116 = vrot.slane %v2401, 4
        %v3117 = vsel %vm2834, %v3115, %v3116
        %v3118 = vrot.slane %v2402, 4
        %v3119 = vsel %vm2834, %v3116, %v3118
        %v3120 = vrot.slane %v2403, 4
        %v3121 = vsel %vm2834, %v3118, %v3120
        %v3122 = vrot.slane %v2404, 4
        %v3123 = vsel %vm2834, %v3120, %v3122
        %v3124 = vrot.slane %v2405, 4
        %v3125 = vsel %vm2834, %v3122, %v3124
        %v3126 = vrot.slane %v2406, 4
        %v3127 = vsel %vm2834, %v3124, %v3126
        %v3128 = vrot.slane %v2407, 4
        %v3129 = vsel %vm2834, %v3126, %v3128
        %v3130 = vrot.slane %v2408, 4
        %v3131 = vsel %vm2834, %v3128, %v3130
        %v3132 = vrot.slane %v2409, 4
        %v3133 = vsel %vm2834, %v3130, %v3132
        %v3143 = vadd.f32 %v3096, %v3117
        %v3144 = vadd.f32 %v3097, %v3119
        %v3145 = vadd.f32 %v3098, %v3121
        %v3146 = vadd.f32 %v3099, %v3123
        %v3147 = vadd.f32 %v3100, %v3125
        %v3148 = vadd.f32 %v3101, %v3127
        %v3149 = vadd.f32 %v3102, %v3129
        %v3150 = vadd.f32 %v3103, %v3131
        %v3151 = vadd.f32 %v3104, %v3133
        %v3161 = vrot.slane %v3143, 4
        %v3162 = vrot.slane %v3144, 4
        %v3163 = vsel %vm2834, %v3161, %v3162
        %v3164 = vrot.slane %v3145, 4
        %v3165 = vsel %vm2834, %v3162, %v3164
        %v3166 = vrot.slane %v3146, 4
        %v3167 = vsel %vm2834, %v3164, %v3166
        %v3168 = vrot.slane %v3147, 4
        %v3169 = vsel %vm2834, %v3166, %v3168
        %v3170 = vrot.slane %v3148, 4
        %v3171 = vsel %vm2834, %v3168, %v3170
        %v3172 = vrot.slane %v3149, 4
        %v3173 = vsel %vm2834, %v3170, %v3172
        %v3174 = vrot.slane %v3150, 4
        %v3175 = vsel %vm2834, %v3172, %v3174
        %v3176 = vrot.slane %v3151, 4
        %v3177 = vsel %vm2834, %v3174, %v3176
        %v3186 = vsel %vm562, %v3163, 0.0
        %v3187 = vsel %vm563, %v3165, 0.0
        %v3188 = vsel %vm564, %v3167, 0.0
        %v3189 = vsel %vm565, %v3169, 0.0
        %v3190 = vsel %vm566, %v3171, 0.0
        %v3191 = vsel %vm567, %v3173, 0.0
        %v3192 = vsel %vm568, %v3175, 0.0
        %v3193 = vsel %vm569, %v3177, 0.0
        %3194 = vst.msk [vmem:[%s420] sm:$0xff] %vm664, %v3186
        %3195 = vst.msk [vmem:[%s420 + $0x8] sm:$0xff] %vm664, %v3187
        %3196 = vst.msk [vmem:[%s420 + $0x10] sm:$0xff] %vm664, %v3188
        %3197 = vst.msk [vmem:[%s420 + $0x18] sm:$0xff] %vm664, %v3189
        %3198 = vst.msk [vmem:[%s420 + $0x20] sm:$0xff] %vm664, %v3190
        %3199 = vst.msk [vmem:[%s420 + $0x28] sm:$0xff] %vm664, %v3191
        %3200 = vst.msk [vmem:[%s420 + $0x30] sm:$0xff] %vm664, %v3192
        %3201 = vst.msk [vmem:[%s420 + $0x38] sm:$0xff] %vm664, %v3193
        %s3202 = sand.u32 %s224, 1
        %s3203 = sand.u32 %s224, 1
        %s3204 = smul.addr %s3203, 64
        %s3205 = scalar_lea.vmem [#allocation2], %s3204
        // Predicated region
        $region49: #{tpu_custom_call.1} parent=47 // pred_check
          %p3206 = pneg %p234
        $region50: #{tpu_custom_call.1} parent=47 // pred_check_branch
          %3208 = sbr.rel (%p3206) target = $region52
        $region51: #{tpu_custom_call.1} parent=47 // pred_region
          %s3209 = smul.u32 8, %s23
          %s3210 = ssub.s32 25, %s3209
          %p3211 = scmp.lt.s32.totalorder %s3210, 8
          %s3212 = scalar_select %p3211, %s3210, 8
          %s3213 = smul.u32 8, %s3212
          %p3214 = scmp.ne.s32.totalorder 0, %s3213
          %s3215 = smul.addr %s22, 25
          %s3216 = sadd.s32 %s3209, %s3215
          %s3217 = smul.addr %s3216, 8
          %s3218 = scalar_lea.vmem %s7, %s3217
          // Predicated region
          $region53: #{tpu_custom_call.1} parent=51 // pred_check
            %p3219 = pneg %p3214
          $region54: #{tpu_custom_call.1} parent=51 // pred_check_branch
            %3221 = sbr.rel (%p3219) target = $region56
          $region55: #{tpu_custom_call.1} parent=51 // pred_region
            // Predicated region
            $region57: #{tpu_custom_call.1} parent=55 // pred_check
              _
            $region58: #{tpu_custom_call.1} parent=55 // pred_check_branch
              %3223 = sbr.rel (0) target = $region60
            $region59: #{tpu_custom_call.1} parent=55 // pred_region
              // Predicated region
              $region79: #{tpu_custom_call.1} parent=59 // pred_check
                _
              $region80: #{tpu_custom_call.1} parent=59 // pred_check_branch
                %3287 = sbr.rel (0) target = $region82
              $region81: #{tpu_custom_call.1} parent=59 // pred_region
                %s3288 = sshrl.u32 %s3212, 3
                // While loop
                $region83: #{tpu_custom_call.1} parent=81 // loop_pre_header
                  _
                $region84: #{tpu_custom_call.1} parent=81 // loop_header
                  %s3290 = sphi 0, %s3292
                  %p3291 = scmp.ge.s32.totalorder %s3290, %s3288
                  %s3295 = sphi 0, %s3316
                  %s3296 = sphi %s3205, %s3319
                  %s3297 = sphi %s3218, %s3320
                $region85: #{tpu_custom_call.1} parent=81 // loop_header_branch
                  %3294 = sbr.rel (%p3291) target = $region89
                $region86: #{tpu_custom_call.1} parent=81 // loop_body
                  %v3298 = vld [vmem:[%s3296] sm:$0xff]
                  %3299 = vst [vmem:[%s3297] sm:$0xff] %v3298
                  %v3300 = vld [vmem:[%s3296 + $0x8] sm:$0xff]
                  %3301 = vst [vmem:[%s3297 + $0x8] sm:$0xff] %v3300
                  %v3302 = vld [vmem:[%s3296 + $0x10] sm:$0xff]
                  %3303 = vst [vmem:[%s3297 + $0x10] sm:$0xff] %v3302
                  %v3304 = vld [vmem:[%s3296 + $0x18] sm:$0xff]
                  %3305 = vst [vmem:[%s3297 + $0x18] sm:$0xff] %v3304
                  %v3306 = vld [vmem:[%s3296 + $0x20] sm:$0xff]
                  %3307 = vst [vmem:[%s3297 + $0x20] sm:$0xff] %v3306
                  %v3308 = vld [vmem:[%s3296 + $0x28] sm:$0xff]
                  %3309 = vst [vmem:[%s3297 + $0x28] sm:$0xff] %v3308
                  %v3310 = vld [vmem:[%s3296 + $0x30] sm:$0xff]
                  %3311 = vst [vmem:[%s3297 + $0x30] sm:$0xff] %v3310
                  %v3312 = vld [vmem:[%s3296 + $0x38] sm:$0xff]
                  %3313 = vst [vmem:[%s3297 + $0x38] sm:$0xff] %v3312
                  %s3314 = sadd.s32 1, %s3295
                  %p3315 = scmp.ge.s32.totalorder %s3314, %s3288
                  %s3316 = scalar_select %p3315, 0, %s3314
                  %s3317 = smul.u32 %s3316, 64
                  %s3318 = smul.u32 %s3316, 64
                  %s3319 = scalar_lea.vmem %s3205, %s3317 [#allocation2]
                  %s3320 = scalar_lea.vmem %s3218, %s3318
                $region87: #{tpu_custom_call.1} parent=81 // loop_footer
                  %s3292 = sadd.s32 %s3290, 1
                $region88: #{tpu_custom_call.1} parent=81 // loop_footer_branch
                  %3289 = sbr.rel target = $region84
                $region89: #{tpu_custom_call.1} parent=81 // loop_exit
                  _
                %s3321 = sshrl.u32 %s3212, 3
                %s3322 = sand.u32 %s3212, 7
                %s3323 = smul.u32 %s3321, 8
                %s3324 = smul.u32 8, %s3323
                %s3325 = scalar_lea.vmem %s3205, %s3324 [#allocation2]
                %s3326 = smul.u32 8, %s3323
                %s3327 = scalar_lea.vmem %s3218, %s3326
                // While loop
                $region90: #{tpu_custom_call.1} parent=81 // loop_pre_header
                  _
                $region91: #{tpu_custom_call.1} parent=81 // loop_header
                  %s3329 = sphi 0, %s3331
                  %p3330 = scmp.ge.s32.totalorder %s3329, %s3322
                  %s3334 = sphi 0, %s3341
                  %s3335 = sphi %s3325, %s3344
                  %s3336 = sphi %s3327, %s3345
                $region92: #{tpu_custom_call.1} parent=81 // loop_header_branch
                  %3333 = sbr.rel (%p3330) target = $region96
                $region93: #{tpu_custom_call.1} parent=81 // loop_body
                  %v3337 = vld [vmem:[%s3335] sm:$0xff]
                  %3338 = vst [vmem:[%s3336] sm:$0xff] %v3337
                  %s3339 = sadd.s32 1, %s3334
                  %p3340 = scmp.ge.s32.totalorder %s3339, %s3322
                  %s3341 = scalar_select %p3340, 0, %s3339
                  %s3342 = smul.u32 %s3341, 8
                  %s3343 = smul.u32 %s3341, 8
                  %s3344 = scalar_lea.vmem %s3325, %s3342 [#allocation2]
                  %s3345 = scalar_lea.vmem %s3327, %s3343
                $region94: #{tpu_custom_call.1} parent=81 // loop_footer
                  %s3331 = sadd.s32 %s3329, 1
                $region95: #{tpu_custom_call.1} parent=81 // loop_footer_branch
                  %3328 = sbr.rel target = $region91
                $region96: #{tpu_custom_call.1} parent=81 // loop_exit
                  _
              $region82: #{tpu_custom_call.1} parent=59 // pred_fallthru
                _
              // Predicated region
              $region97: #{tpu_custom_call.1} parent=59 // pred_check
                _
              $region98: #{tpu_custom_call.1} parent=59 // pred_check_branch
                %3347 = sbr.rel target = $region100
              $region99: #{tpu_custom_call.1} parent=59 // pred_region
                _
              $region100: #{tpu_custom_call.1} parent=59 // pred_fallthru
                _
            $region60: #{tpu_custom_call.1} parent=55 // pred_fallthru
              _
            // Predicated region
            $region61: #{tpu_custom_call.1} parent=55 // pred_check
              _
            $region62: #{tpu_custom_call.1} parent=55 // pred_check_branch
              %3225 = sbr.rel target = $region64
            $region63: #{tpu_custom_call.1} parent=55 // pred_region
              %s3227 = ssub.s32 256, 1
              %s3228 = sshrl.u32 %s3212, 3
              // While loop
              $region65: #{tpu_custom_call.1} parent=63 // loop_pre_header
                _
              $region66: #{tpu_custom_call.1} parent=63 // loop_header
                %s3230 = sphi 0, %s3232
                %p3231 = scmp.ge.s32.totalorder %s3230, %s3228
                %s3235 = sphi 0, %s3256
                %s3236 = sphi %s3205, %s3259
                %s3237 = sphi %s3218, %s3260
              $region67: #{tpu_custom_call.1} parent=63 // loop_header_branch
                %3234 = sbr.rel (%p3231) target = $region71
              $region68: #{tpu_custom_call.1} parent=63 // loop_body
                %v3238 = vld [vmem:[%s3236] sm:%s3227]
                %3239 = vst [vmem:[%s3237] sm:%s3227] %v3238
                %v3240 = vld [vmem:[%s3236 + $0x8] sm:%s3227]
                %3241 = vst [vmem:[%s3237 + $0x8] sm:%s3227] %v3240
                %v3242 = vld [vmem:[%s3236 + $0x10] sm:%s3227]
                %3243 = vst [vmem:[%s3237 + $0x10] sm:%s3227] %v3242
                %v3244 = vld [vmem:[%s3236 + $0x18] sm:%s3227]
                %3245 = vst [vmem:[%s3237 + $0x18] sm:%s3227] %v3244
                %v3246 = vld [vmem:[%s3236 + $0x20] sm:%s3227]
                %3247 = vst [vmem:[%s3237 + $0x20] sm:%s3227] %v3246
                %v3248 = vld [vmem:[%s3236 + $0x28] sm:%s3227]
                %3249 = vst [vmem:[%s3237 + $0x28] sm:%s3227] %v3248
                %v3250 = vld [vmem:[%s3236 + $0x30] sm:%s3227]
                %3251 = vst [vmem:[%s3237 + $0x30] sm:%s3227] %v3250
                %v3252 = vld [vmem:[%s3236 + $0x38] sm:%s3227]
                %3253 = vst [vmem:[%s3237 + $0x38] sm:%s3227] %v3252
                %s3254 = sadd.s32 1, %s3235
                %p3255 = scmp.ge.s32.totalorder %s3254, %s3228
                %s3256 = scalar_select %p3255, 0, %s3254
                %s3257 = smul.u32 %s3256, 64
                %s3258 = smul.u32 %s3256, 64
                %s3259 = scalar_lea.vmem %s3205, %s3257 [#allocation2]
                %s3260 = scalar_lea.vmem %s3218, %s3258
              $region69: #{tpu_custom_call.1} parent=63 // loop_footer
                %s3232 = sadd.s32 %s3230, 1
              $region70: #{tpu_custom_call.1} parent=63 // loop_footer_branch
                %3229 = sbr.rel target = $region66
              $region71: #{tpu_custom_call.1} parent=63 // loop_exit
                _
              %s3261 = sshrl.u32 %s3212, 3
              %s3262 = sand.u32 %s3212, 7
              %s3263 = smul.u32 %s3261, 8
              %s3264 = smul.u32 8, %s3263
              %s3265 = scalar_lea.vmem %s3205, %s3264 [#allocation2]
              %s3266 = smul.u32 8, %s3263
              %s3267 = scalar_lea.vmem %s3218, %s3266
              // While loop
              $region72: #{tpu_custom_call.1} parent=63 // loop_pre_header
                _
              $region73: #{tpu_custom_call.1} parent=63 // loop_header
                %s3269 = sphi 0, %s3271
                %p3270 = scmp.ge.s32.totalorder %s3269, %s3262
                %s3274 = sphi 0, %s3281
                %s3275 = sphi %s3265, %s3284
                %s3276 = sphi %s3267, %s3285
              $region74: #{tpu_custom_call.1} parent=63 // loop_header_branch
                %3273 = sbr.rel (%p3270) target = $region78
              $region75: #{tpu_custom_call.1} parent=63 // loop_body
                %v3277 = vld [vmem:[%s3275] sm:%s3227]
                %3278 = vst [vmem:[%s3276] sm:%s3227] %v3277
                %s3279 = sadd.s32 1, %s3274
                %p3280 = scmp.ge.s32.totalorder %s3279, %s3262
                %s3281 = scalar_select %p3280, 0, %s3279
                %s3282 = smul.u32 %s3281, 8
                %s3283 = smul.u32 %s3281, 8
                %s3284 = scalar_lea.vmem %s3265, %s3282 [#allocation2]
                %s3285 = scalar_lea.vmem %s3267, %s3283
              $region76: #{tpu_custom_call.1} parent=63 // loop_footer
                %s3271 = sadd.s32 %s3269, 1
              $region77: #{tpu_custom_call.1} parent=63 // loop_footer_branch
                %3268 = sbr.rel target = $region73
              $region78: #{tpu_custom_call.1} parent=63 // loop_exit
                _
            $region64: #{tpu_custom_call.1} parent=55 // pred_fallthru
              _
          $region56: #{tpu_custom_call.1} parent=51 // pred_fallthru
            _
          %3348 = vnop
        $region52: #{tpu_custom_call.1} parent=47 // pred_fallthru
          _
      $region48: #{tpu_custom_call.1} parent=5 // pred_fallthru
        _
      %p3349 = scmp.le.s32.totalorder 2, %s13
      // Predicated region
      $region101: #{tpu_custom_call.1} parent=5 // pred_check
        %p3350 = pneg %p3349
      $region102: #{tpu_custom_call.1} parent=5 // pred_check_branch
        %3352 = sbr.rel (%p3350) target = $region104
      $region103: #{tpu_custom_call.1} parent=5 // pred_region
        %s3353 = ssub.s32 %s13, 2
        // Predicated region
        $region105: #{tpu_custom_call.1} parent=103 // pred_check
          %p3354 = pneg %p240
        $region106: #{tpu_custom_call.1} parent=103 // pred_check_branch
          %3356 = sbr.rel (%p3354) target = $region108
        $region107: #{tpu_custom_call.1} parent=103 // pred_region
          %s3357 = sand.u32 %s225, 1
          %s3358 = sand.u32 %s225, 1
          %s3359 = smul.addr %s3358, 64
          %s3360 = scalar_lea.vmem [#allocation2], %s3359
        $region108: #{tpu_custom_call.1} parent=103 // pred_fallthru
          _
      $region104: #{tpu_custom_call.1} parent=5 // pred_fallthru
        _
    $region6: #{tpu_custom_call.1} parent=1 // loop_footer
      %s17 = sadd.s32 1, %s13
    $region7: #{tpu_custom_call.1} parent=1 // loop_footer_branch
      %12 = sbr.rel target = $region3
    $region8: #{tpu_custom_call.1} parent=1 // loop_exit
      _

</llo_original>
